<compile_context>
chip_gen: v6e
topology: v6e:2x2x1
jax: 0.10.0
libtpu: 0.0.40
codegen_flags: <defaults>
</compile_context>

<pallas_src>
import functools

import jax
import jax.numpy as jnp
from jax import lax
from jax.experimental import pallas as pl
from jax.experimental.pallas import tpu as pltpu

EPS = 1e-5


# ---------------------------------------------------------------------------
# Kernels
# ---------------------------------------------------------------------------

def _linear_kernel(*refs, fuse_bn_relu, collect_stats):
    """y = (relu(x*scale+shift) if fuse_bn_relu else x) @ W + b, tiled over rows.

    Optionally accumulates per-output-channel sum / sum-of-squares into resident
    [1, Cout] outputs (batch statistics for the following BatchNorm).
    """
    x_ref, w_ref, b_ref = refs[0], refs[1], refs[2]
    idx = 3
    if fuse_bn_relu:
        s_ref, t_ref = refs[3], refs[4]
        idx = 5
    y_ref = refs[idx]

    x = x_ref[...].astype(jnp.float32)
    if fuse_bn_relu:
        # Folded BatchNorm (per-channel scale/shift precomputed) + ReLU prologue.
        x = jnp.maximum(x * s_ref[...] + t_ref[...], 0.0)

    y = jnp.dot(x, w_ref[...].astype(jnp.float32),
                preferred_element_type=jnp.float32)
    y = y + b_ref[...]
    y_ref[...] = y.astype(y_ref.dtype)

    if collect_stats:
        sum_ref, sq_ref = refs[idx + 1], refs[idx + 2]

        @pl.when(pl.program_id(0) == 0)
        def _():
            sum_ref[...] = jnp.zeros_like(sum_ref)
            sq_ref[...] = jnp.zeros_like(sq_ref)

        sum_ref[...] += jnp.sum(y, axis=0, keepdims=True)
        sq_ref[...] += jnp.sum(y * y, axis=0, keepdims=True)


def _graph_conv_kernel(y_ref, a_ref, o_ref, sum_ref, sq_ref, *,
                       k_size, c_mid, block_nt):
    """out[b, w, c] = sum_k sum_v A[k, v, w] * y[b, v, k*c_mid + c] (+ BN stats)."""

    @pl.when(pl.program_id(0) == 0)
    def _():
        sum_ref[...] = jnp.zeros_like(sum_ref)
        sq_ref[...] = jnp.zeros_like(sq_ref)

    a = a_ref[...].astype(jnp.float32)      # [K, W, V]  (A[k] transposed)
    y = y_ref[...].astype(jnp.float32)      # [B, V, K*Cmid]

    s_acc = jnp.zeros((1, c_mid), jnp.float32)
    q_acc = jnp.zeros((1, c_mid), jnp.float32)
    for b in range(block_nt):               # static, small
        acc = jnp.zeros((a.shape[1], c_mid), jnp.float32)
        for k in range(k_size):             # static, small
            acc += jnp.dot(a[k], y[b, :, k * c_mid:(k + 1) * c_mid],
                           preferred_element_type=jnp.float32)
        o_ref[b, :, :] = acc.astype(o_ref.dtype)
        s_acc += jnp.sum(acc, axis=0, keepdims=True)
        q_acc += jnp.sum(acc * acc, axis=0, keepdims=True)

    sum_ref[...] += s_acc
    sq_ref[...] += q_acc


def _bn_add_relu_kernel(*refs, res_mode):
    """out = relu(y*scale + shift + residual_term)."""
    y_ref, s_ref, t_ref = refs[0], refs[1], refs[2]
    y = y_ref[...].astype(jnp.float32) * s_ref[...] + t_ref[...]
    if res_mode == "proj":
        r_ref, rs_ref, rt_ref, o_ref = refs[3], refs[4], refs[5], refs[6]
        y = y + (r_ref[...].astype(jnp.float32) * rs_ref[...] + rt_ref[...])
    elif res_mode == "identity":
        r_ref, o_ref = refs[3], refs[4]
        y = y + r_ref[...].astype(jnp.float32)
    else:
        o_ref = refs[3]
    o_ref[...] = jnp.maximum(y, 0.0).astype(o_ref.dtype)


# ---------------------------------------------------------------------------
# Wrappers
# ---------------------------------------------------------------------------

def _pick_row_tile(m, max_tile=256):
    """Largest divisor of m that is a multiple of 8 (or m itself), <= max_tile."""
    t = min(m, max_tile)
    while t > 0:
        if m % t == 0 and (t % 8 == 0 or t == m):
            return t
        t -= 1
    return m


def _pick_batch_tile(n, max_tile=4):
    for t in range(min(n, max_tile), 0, -1):
        if n % t == 0:
            return t
    return 1


def _linear(x2d, w, b, *, scale=None, shift=None, collect_stats=False,
            max_tile=256):
    m, c_in = x2d.shape
    c_out = w.shape[1]
    tm = _pick_row_tile(m, max_tile)
    grid = (m // tm,)
    fuse = scale is not None

    in_specs = [
        pl.BlockSpec((tm, c_in), lambda i: (i, 0)),
        pl.BlockSpec((c_in, c_out), lambda i: (0, 0)),
        pl.BlockSpec((1, c_out), lambda i: (0, 0)),
    ]
    args = [x2d, w, b.reshape(1, c_out).astype(jnp.float32)]
    if fuse:
        in_specs += [pl.BlockSpec((1, c_in), lambda i: (0, 0)),
                     pl.BlockSpec((1, c_in), lambda i: (0, 0))]
        args += [scale.reshape(1, c_in).astype(jnp.float32),
                 shift.reshape(1, c_in).astype(jnp.float32)]

    out_shape = [jax.ShapeDtypeStruct((m, c_out), x2d.dtype)]
    out_specs = [pl.BlockSpec((tm, c_out), lambda i: (i, 0))]
    if collect_stats:
        out_shape += [jax.ShapeDtypeStruct((1, c_out), jnp.float32)] * 2
        out_specs += [pl.BlockSpec((1, c_out), lambda i: (0, 0)),
                      pl.BlockSpec((1, c_out), lambda i: (0, 0))]

    semantics = ("arbitrary",) if collect_stats else ("parallel",)
    fn = pl.pallas_call(
        functools.partial(_linear_kernel, fuse_bn_relu=fuse,
                          collect_stats=collect_stats),
        grid=grid,
        in_specs=in_specs,
        out_specs=out_specs,
        out_shape=out_shape,
        compiler_params=pltpu.CompilerParams(dimension_semantics=semantics),
    )
    res = fn(*args)
    if collect_stats:
        return res[0], res[1], res[2]
    return res[0]


def _graph_conv(y3d, a_t, c_mid, max_tile_nt=4):
    nt, v, kc = y3d.shape
    k = kc // c_mid
    bnt = _pick_batch_tile(nt, max_tile_nt)
    grid = (nt // bnt,)

    in_specs = [pl.BlockSpec((bnt, v, kc), lambda i: (i, 0, 0)),
                pl.BlockSpec((k, v, v), lambda i: (0, 0, 0))]
    out_specs = [pl.BlockSpec((bnt, v, c_mid), lambda i: (i, 0, 0)),
                 pl.BlockSpec((1, c_mid), lambda i: (0, 0)),
                 pl.BlockSpec((1, c_mid), lambda i: (0, 0))]
    out_shape = [jax.ShapeDtypeStruct((nt, v, c_mid), y3d.dtype),
                 jax.ShapeDtypeStruct((1, c_mid), jnp.float32),
                 jax.ShapeDtypeStruct((1, c_mid), jnp.float32)]

    fn = pl.pallas_call(
        functools.partial(_graph_conv_kernel, k_size=k, c_mid=c_mid,
                          block_nt=bnt),
        grid=grid,
        in_specs=in_specs,
        out_specs=out_specs,
        out_shape=out_shape,
        compiler_params=pltpu.CompilerParams(dimension_semantics=("arbitrary",)),
    )
    o, s, q = fn(y3d, a_t)
    return o, s, q


def _bn_add_relu(y, scale, shift, *, res=None, res_scale=None, res_shift=None,
                 max_tile=256):
    m, c = y.shape
    tm = _pick_row_tile(m, max_tile)
    grid = (m // tm,)

    if res is None:
        mode = "none"
    elif res_scale is None:
        mode = "identity"
    else:
        mode = "proj"

    in_specs = [pl.BlockSpec((tm, c), lambda i: (i, 0)),
                pl.BlockSpec((1, c), lambda i: (0, 0)),
                pl.BlockSpec((1, c), lambda i: (0, 0))]
    args = [y, scale.reshape(1, c).astype(jnp.float32),
            shift.reshape(1, c).astype(jnp.float32)]
    if mode != "none":
        in_specs.append(pl.BlockSpec((tm, c), lambda i: (i, 0)))
        args.append(res)
    if mode == "proj":
        in_specs += [pl.BlockSpec((1, c), lambda i: (0, 0)),
                     pl.BlockSpec((1, c), lambda i: (0, 0))]
        args += [res_scale.reshape(1, c).astype(jnp.float32),
                 res_shift.reshape(1, c).astype(jnp.float32)]

    fn = pl.pallas_call(
        functools.partial(_bn_add_relu_kernel, res_mode=mode),
        grid=grid,
        in_specs=in_specs,
        out_specs=pl.BlockSpec((tm, c), lambda i: (i, 0)),
        out_shape=jax.ShapeDtypeStruct((m, c), y.dtype),
        compiler_params=pltpu.CompilerParams(dimension_semantics=("parallel",)),
    )
    return fn(*args)


def _bn_scale_shift(bn_sum, bn_sq, count, gamma, beta, eps=EPS):
    """Per-channel folded BN params from batch sum / sum-of-squares."""
    mean = bn_sum[0] / count
    var = jnp.maximum(bn_sq[0] / count - mean * mean, 0.0)
    scale = gamma * lax.rsqrt(var + eps)
    shift = beta - mean * scale
    return scale, shift


def spatial_bottleneck_block(x, a, params, *, residual=False):
    """Forward pass of SpatialBottleneckBlock (training-mode BatchNorm)."""
    n, c_in, t, v = x.shape
    k = a.shape[0]
    c_mid = params["w_down"].shape[1]
    c_out = params["w_up"].shape[1]
    m = n * t * v

    # [N, C, T, V] -> [M, C]: rows indexed by (n, t, v), channels on the lane axis.
    x2d = jnp.transpose(x, (0, 2, 3, 1)).reshape(m, c_in)

    # conv_down (+ batch stats of its output for bn_down)
    y1, s1, q1 = _linear(x2d, params["w_down"], params["b_down"],
                         collect_stats=True)
    sc1, sh1 = _bn_scale_shift(s1, q1, m, params["g_down"], params["be_down"])

    # gcn 1x1 conv with bn_down + ReLU folded into its prologue
    y2 = _linear(y1, params["w_gcn"], params["b_gcn"], scale=sc1, shift=sh1)

    # spatial graph aggregation: einsum('nkctv,kvw->nctw') (+ stats for bn)
    a_t = jnp.transpose(a, (0, 2, 1))                       # [K, W, V]
    y2_3d = y2.reshape(n * t, v, k * c_mid)
    y3_3d, s3, q3 = _graph_conv(y2_3d, a_t, c_mid)
    y3 = y3_3d.reshape(m, c_mid)
    sc3, sh3 = _bn_scale_shift(s3, q3, m, params["g_mid"], params["be_mid"])

    # conv_up with bn + ReLU folded into its prologue (+ stats for bn_up)
    y4, s4, q4 = _linear(y3, params["w_up"], params["b_up"],
                         scale=sc3, shift=sh3, collect_stats=True)
    sc4, sh4 = _bn_scale_shift(s4, q4, m, params["g_up"], params["be_up"])

    # residual branch + final bn_up / add / ReLU (fused)
    if not residual:
        out2d = _bn_add_relu(y4, sc4, sh4)
    elif c_in == c_out:
        out2d = _bn_add_relu(y4, sc4, sh4, res=x2d)
    else:
        r, sr, qr = _linear(x2d, params["w_res"], params["b_res"],
                            collect_stats=True)
        rsc, rsh = _bn_scale_shift(sr, qr, m, params["g_res"], params["be_res"])
        out2d = _bn_add_relu(y4, sc4, sh4, res=r, res_scale=rsc, res_shift=rsh)

    return jnp.transpose(out2d.reshape(n, t, v, c_out), (0, 3, 1, 2))


# ---------------------------------------------------------------------------
# Pure-JAX reference (mirrors the PyTorch forward, training-mode BN)
# ---------------------------------------------------------------------------

def _conv1x1_ref(x, w, b):
    return jnp.einsum("nctv,cd->ndtv", x, w) + b[None, :, None, None]


def _bn2d_ref(x, gamma, beta, eps=EPS):
    mean = jnp.mean(x, axis=(0, 2, 3), keepdims=True)
    var = jnp.var(x, axis=(0, 2, 3), keepdims=True)   # biased (normalize path)
    return ((x - mean) * lax.rsqrt(var + eps) * gamma[None, :, None, None]
            + beta[None, :, None, None])


def _reference(x, a, params, *, residual=False):
    n, c_in, t, v = x.shape
    k = a.shape[0]
    c_mid = params["w_down"].shape[1]
    c_out = params["w_up"].shape[1]

    if not residual:
        res = 0.0
    elif c_in == c_out:
        res = x
    else:
        res = _bn2d_ref(_conv1x1_ref(x, params["w_res"], params["b_res"]),
                        params["g_res"], params["be_res"])

    y = jax.nn.relu(_bn2d_ref(_conv1x1_ref(x, params["w_down"], params["b_down"]),
                              params["g_down"], params["be_down"]))
    y = _conv1x1_ref(y, params["w_gcn"], params["b_gcn"])          # [N, K*Cmid, T, V]
    y = y.reshape(n, k, c_mid, t, v)
    y = jnp.einsum("nkctv,kvw->nctw", y, a)
    y = jax.nn.relu(_bn2d_ref(y, params["g_mid"], params["be_mid"]))
    y = _conv1x1_ref(y, params["w_up"], params["b_up"])
    y = _bn2d_ref(y, params["g_up"], params["be_up"])
    return jax.nn.relu(y + res)


# ---------------------------------------------------------------------------
# Demo
# ---------------------------------------------------------------------------

if __name__ == "__main__":
    n, t, v = 2, 8, 25                       # batch, frames, graph nodes (joints)
    in_channels, out_channels = 32, 64
    max_graph_distance = 2
    reduction = 4
    residual = True                           # exercises the projection residual

    k = max_graph_distance + 1
    c_mid = out_channels // reduction

    key = jax.random.PRNGKey(0)
    keys = jax.random.split(key, 18)

    def q(arr):
        # Keep leaf inputs bf16-representable so MXU precision differences between
        # the kernel and the XLA reference stay tiny.
        return arr.astype(jnp.bfloat16).astype(jnp.float32)

    def nrm(kk, shape, s=1.0):
        return q(s * jax.random.normal(kk, shape, dtype=jnp.float32))

    x = nrm(keys[0], (n, in_channels, t, v))
    a = nrm(keys[1], (k, v, v), 0.3)

    params = dict(
        w_down=nrm(keys[2], (in_channels, c_mid), 0.15),
        b_down=nrm(keys[3], (c_mid,), 0.1),
        g_down=q(1.0 + 0.1 * jax.random.normal(keys[4], (c_mid,), jnp.float32)),
        be_down=nrm(keys[5], (c_mid,), 0.1),
        w_gcn=nrm(keys[6], (c_mid, k * c_mid), 0.15),
        b_gcn=nrm(keys[7], (k * c_mid,), 0.1),
        g_mid=q(1.0 + 0.1 * jax.random.normal(keys[8], (c_mid,), jnp.float32)),
        be_mid=nrm(keys[9], (c_mid,), 0.1),
        w_up=nrm(keys[10], (c_mid, out_channels), 0.15),
        b_up=nrm(keys[11], (out_channels,), 0.1),
        g_up=q(1.0 + 0.1 * jax.random.normal(keys[12], (out_channels,), jnp.float32)),
        be_up=nrm(keys[13], (out_channels,), 0.1),
        w_res=nrm(keys[14], (in_channels, out_channels), 0.15),
        b_res=nrm(keys[15], (out_channels,), 0.1),
        g_res=q(1.0 + 0.1 * jax.random.normal(keys[16], (out_channels,), jnp.float32)),
        be_res=nrm(keys[17], (out_channels,), 0.1),
    )

    fwd = jax.jit(functools.partial(spatial_bottleneck_block, residual=residual))
    out = fwd(x, a, params)
    out = jax.block_until_ready(out)

    ref = _reference(x, a, params, residual=residual)
    ref = jax.block_until_ready(ref)

    assert out.shape == (n, out_channels, t, v)
    max_err = float(jnp.max(jnp.abs(out - ref)))
    assert jnp.allclose(out, ref, atol=1e-2, rtol=1e-2), f"max abs err {max_err}"

    print("KERNEL_OK")
</pallas_src>

<mosaic_0001>
module attributes {stable_mosaic.version = 11 : i64} {
  func.func @_linear_kernel(%arg0: i32, %arg1: memref<200x32xf32, #tpu.memory_space<vmem>>, %arg2: memref<32x16xf32, #tpu.memory_space<vmem>>, %arg3: memref<1x16xf32, #tpu.memory_space<vmem>>, %arg4: memref<200x16xf32, #tpu.memory_space<vmem>>, %arg5: memref<1x16xf32, #tpu.memory_space<vmem>>, %arg6: memref<1x16xf32, #tpu.memory_space<vmem>>) attributes {dimension_semantics = [#tpu.dimension_semantics<arbitrary>], iteration_bounds = array<i64: 2>, scalar_prefetch = 0 : i64, scratch_operands = 0 : i64, tpu.core_type = #tpu.core_type<tc>, window_params = [{transform_indices = @transform_0, window_bounds = array<i64: 200, 32>}, {pipeline_mode = #tpu.pipeline_mode<synchronous>, transform_indices = @transform_1, window_bounds = array<i64: 32, 16>}, {pipeline_mode = #tpu.pipeline_mode<synchronous>, transform_indices = @transform_2, window_bounds = array<i64: 1, 16>}, {transform_indices = @transform_3, window_bounds = array<i64: 200, 16>}, {pipeline_mode = #tpu.pipeline_mode<synchronous>, transform_indices = @transform_4, window_bounds = array<i64: 1, 16>}, {pipeline_mode = #tpu.pipeline_mode<synchronous>, transform_indices = @transform_5, window_bounds = array<i64: 1, 16>}]} {
    %c0 = arith.constant 0 : index
    %c0_0 = arith.constant 0 : index
    %0 = vector.load %arg1[%c0, %c0_0] : memref<200x32xf32, #tpu.memory_space<vmem>>, vector<200x32xf32>
    %c0_1 = arith.constant 0 : index
    %c0_2 = arith.constant 0 : index
    %1 = vector.load %arg2[%c0_1, %c0_2] : memref<32x16xf32, #tpu.memory_space<vmem>>, vector<32x16xf32>
    %cst = arith.constant dense<0.000000e+00> : vector<200x16xf32>
    %2 = tpu.matmul %0, %1, %cst {dimension_numbers = #tpu.dot_dimension_numbers<[1], [0], [0], [1], [0, 0, 1, 1], [], []>} : vector<200x32xf32>, vector<32x16xf32>, vector<200x16xf32> -> vector<200x16xf32>
    %c0_3 = arith.constant 0 : index
    %c0_4 = arith.constant 0 : index
    %3 = vector.load %arg3[%c0_3, %c0_4] : memref<1x16xf32, #tpu.memory_space<vmem>>, vector<1x16xf32>
    %4 = vector.broadcast %3 : vector<1x16xf32> to vector<200x16xf32>
    %5 = arith.addf %2, %4 : vector<200x16xf32>
    %c0_5 = arith.constant 0 : index
    %c0_6 = arith.constant 0 : index
    %6 = vector.load %arg4[%c0_5, %c0_6] : memref<200x16xf32, #tpu.memory_space<vmem>>, vector<200x16xf32>
    tpu.vector_store %arg4[%c0_5, %c0_6], %5 {strides = array<i32>} : memref<200x16xf32, #tpu.memory_space<vmem>>, vector<200x16xf32>,
    %c0_i32 = arith.constant 0 : i32
    %7 = arith.cmpi eq, %arg0, %c0_i32 : i32
    %8 = arith.extui %7 : i1 to i32
    %c0_i32_7 = arith.constant 0 : i32
    %9 = arith.cmpi ne, %8, %c0_i32_7 : i32
    scf.if %9 {
      %cst_18 = arith.constant 0.000000e+00 : f32
      %21 = vector.broadcast %cst_18 : f32 to vector<1x16xf32>
      %c0_19 = arith.constant 0 : index
      %c0_20 = arith.constant 0 : index
      %22 = vector.load %arg5[%c0_19, %c0_20] : memref<1x16xf32, #tpu.memory_space<vmem>>, vector<1x16xf32>
      tpu.vector_store %arg5[%c0_19, %c0_20], %21 {strides = array<i32>} : memref<1x16xf32, #tpu.memory_space<vmem>>, vector<1x16xf32>,
      %cst_21 = arith.constant 0.000000e+00 : f32
      %23 = vector.broadcast %cst_21 : f32 to vector<1x16xf32>
      %c0_22 = arith.constant 0 : index
      %c0_23 = arith.constant 0 : index
      %24 = vector.load %arg6[%c0_22, %c0_23] : memref<1x16xf32, #tpu.memory_space<vmem>>, vector<1x16xf32>
      tpu.vector_store %arg6[%c0_22, %c0_23], %23 {strides = array<i32>} : memref<1x16xf32, #tpu.memory_space<vmem>>, vector<1x16xf32>,
    } else {
    }
    %c0_8 = arith.constant 0 : index
    %c0_9 = arith.constant 0 : index
    %10 = vector.load %arg5[%c0_8, %c0_9] : memref<1x16xf32, #tpu.memory_space<vmem>>, vector<1x16xf32>
    %cst_10 = arith.constant dense<0.000000e+00> : vector<16xf32>
    %11 = vector.multi_reduction <add>, %5, %cst_10 [0] : vector<200x16xf32> to vector<16xf32>
    %12 = vector.shape_cast %11 : vector<16xf32> to vector<1x16xf32>
    %13 = arith.addf %10, %12 : vector<1x16xf32>
    %c0_11 = arith.constant 0 : index
    %c0_12 = arith.constant 0 : index
    %14 = vector.load %arg5[%c0_11, %c0_12] : memref<1x16xf32, #tpu.memory_space<vmem>>, vector<1x16xf32>
    tpu.vector_store %arg5[%c0_11, %c0_12], %13 {strides = array<i32>} : memref<1x16xf32, #tpu.memory_space<vmem>>, vector<1x16xf32>,
    %c0_13 = arith.constant 0 : index
    %c0_14 = arith.constant 0 : index
    %15 = vector.load %arg6[%c0_13, %c0_14] : memref<1x16xf32, #tpu.memory_space<vmem>>, vector<1x16xf32>
    %16 = arith.mulf %5, %5 : vector<200x16xf32>
    %cst_15 = arith.constant dense<0.000000e+00> : vector<16xf32>
    %17 = vector.multi_reduction <add>, %16, %cst_15 [0] : vector<200x16xf32> to vector<16xf32>
    %18 = vector.shape_cast %17 : vector<16xf32> to vector<1x16xf32>
    %19 = arith.addf %15, %18 : vector<1x16xf32>
    %c0_16 = arith.constant 0 : index
    %c0_17 = arith.constant 0 : index
    %20 = vector.load %arg6[%c0_16, %c0_17] : memref<1x16xf32, #tpu.memory_space<vmem>>, vector<1x16xf32>
    tpu.vector_store %arg6[%c0_16, %c0_17], %19 {strides = array<i32>} : memref<1x16xf32, #tpu.memory_space<vmem>>, vector<1x16xf32>,
    return
  }
  func.func @transform_0(%arg0: i32) -> (i32, i32) {
    %c0_i32 = arith.constant 0 : i32
    %c0_i32_0 = arith.constant 0 : i32
    return %arg0, %c0_i32 : i32, i32
  }
  func.func @transform_1(%arg0: i32) -> (i32, i32) {
    %c0_i32 = arith.constant 0 : i32
    %c0_i32_0 = arith.constant 0 : i32
    %c0_i32_1 = arith.constant 0 : i32
    return %c0_i32, %c0_i32_0 : i32, i32
  }
  func.func @transform_2(%arg0: i32) -> (i32, i32) {
    %c0_i32 = arith.constant 0 : i32
    %c0_i32_0 = arith.constant 0 : i32
    %c0_i32_1 = arith.constant 0 : i32
    return %c0_i32, %c0_i32_0 : i32, i32
  }
  func.func @transform_3(%arg0: i32) -> (i32, i32) {
    %c0_i32 = arith.constant 0 : i32
    %c0_i32_0 = arith.constant 0 : i32
    return %arg0, %c0_i32 : i32, i32
  }
  func.func @transform_4(%arg0: i32) -> (i32, i32) {
    %c0_i32 = arith.constant 0 : i32
    %c0_i32_0 = arith.constant 0 : i32
    %c0_i32_1 = arith.constant 0 : i32
    return %c0_i32, %c0_i32_0 : i32, i32
  }
  func.func @transform_5(%arg0: i32) -> (i32, i32) {
    %c0_i32 = arith.constant 0 : i32
    %c0_i32_0 = arith.constant 0 : i32
    %c0_i32_1 = arith.constant 0 : i32
    return %c0_i32, %c0_i32_0 : i32, i32
  }
}

module attributes {stable_mosaic.version = 11 : i64} {
  func.func @_linear_kernel(%arg0: i32, %arg1: memref<200x16xf32, #tpu.memory_space<vmem>>, %arg2: memref<16x48xf32, #tpu.memory_space<vmem>>, %arg3: memref<1x48xf32, #tpu.memory_space<vmem>>, %arg4: memref<1x16xf32, #tpu.memory_space<vmem>>, %arg5: memref<1x16xf32, #tpu.memory_space<vmem>>, %arg6: memref<200x48xf32, #tpu.memory_space<vmem>>) attributes {dimension_semantics = [#tpu.dimension_semantics<parallel>], iteration_bounds = array<i64: 2>, scalar_prefetch = 0 : i64, scratch_operands = 0 : i64, tpu.core_type = #tpu.core_type<tc>, window_params = [{transform_indices = @transform_0, window_bounds = array<i64: 200, 16>}, {pipeline_mode = #tpu.pipeline_mode<synchronous>, transform_indices = @transform_1, window_bounds = array<i64: 16, 48>}, {pipeline_mode = #tpu.pipeline_mode<synchronous>, transform_indices = @transform_2, window_bounds = array<i64: 1, 48>}, {pipeline_mode = #tpu.pipeline_mode<synchronous>, transform_indices = @transform_3, window_bounds = array<i64: 1, 16>}, {pipeline_mode = #tpu.pipeline_mode<synchronous>, transform_indices = @transform_4, window_bounds = array<i64: 1, 16>}, {transform_indices = @transform_5, window_bounds = array<i64: 200, 48>}]} {
    %c0 = arith.constant 0 : index
    %c0_0 = arith.constant 0 : index
    %0 = vector.load %arg1[%c0, %c0_0] : memref<200x16xf32, #tpu.memory_space<vmem>>, vector<200x16xf32>
    %c0_1 = arith.constant 0 : index
    %c0_2 = arith.constant 0 : index
    %1 = vector.load %arg4[%c0_1, %c0_2] : memref<1x16xf32, #tpu.memory_space<vmem>>, vector<1x16xf32>
    %2 = vector.broadcast %1 : vector<1x16xf32> to vector<200x16xf32>
    %3 = arith.mulf %0, %2 : vector<200x16xf32>
    %c0_3 = arith.constant 0 : index
    %c0_4 = arith.constant 0 : index
    %4 = vector.load %arg5[%c0_3, %c0_4] : memref<1x16xf32, #tpu.memory_space<vmem>>, vector<1x16xf32>
    %5 = vector.broadcast %4 : vector<1x16xf32> to vector<200x16xf32>
    %6 = arith.addf %3, %5 : vector<200x16xf32>
    %cst = arith.constant 0.000000e+00 : f32
    %7 = vector.broadcast %cst : f32 to vector<200x16xf32>
    %8 = arith.maximumf %6, %7 : vector<200x16xf32>
    %c0_5 = arith.constant 0 : index
    %c0_6 = arith.constant 0 : index
    %9 = vector.load %arg2[%c0_5, %c0_6] : memref<16x48xf32, #tpu.memory_space<vmem>>, vector<16x48xf32>
    %cst_7 = arith.constant dense<0.000000e+00> : vector<200x48xf32>
    %10 = tpu.matmul %8, %9, %cst_7 {dimension_numbers = #tpu.dot_dimension_numbers<[1], [0], [0], [1], [0, 0, 1, 1], [], []>} : vector<200x16xf32>, vector<16x48xf32>, vector<200x48xf32> -> vector<200x48xf32>
    %c0_8 = arith.constant 0 : index
    %c0_9 = arith.constant 0 : index
    %11 = vector.load %arg3[%c0_8, %c0_9] : memref<1x48xf32, #tpu.memory_space<vmem>>, vector<1x48xf32>
    %12 = vector.broadcast %11 : vector<1x48xf32> to vector<200x48xf32>
    %13 = arith.addf %10, %12 : vector<200x48xf32>
    %c0_10 = arith.constant 0 : index
    %c0_11 = arith.constant 0 : index
    %14 = vector.load %arg6[%c0_10, %c0_11] : memref<200x48xf32, #tpu.memory_space<vmem>>, vector<200x48xf32>
    tpu.vector_store %arg6[%c0_10, %c0_11], %13 {strides = array<i32>} : memref<200x48xf32, #tpu.memory_space<vmem>>, vector<200x48xf32>,
    return
  }
  func.func @transform_0(%arg0: i32) -> (i32, i32) {
    %c0_i32 = arith.constant 0 : i32
    %c0_i32_0 = arith.constant 0 : i32
    return %arg0, %c0_i32 : i32, i32
  }
  func.func @transform_1(%arg0: i32) -> (i32, i32) {
    %c0_i32 = arith.constant 0 : i32
    %c0_i32_0 = arith.constant 0 : i32
    %c0_i32_1 = arith.constant 0 : i32
    return %c0_i32, %c0_i32_0 : i32, i32
  }
  func.func @transform_2(%arg0: i32) -> (i32, i32) {
    %c0_i32 = arith.constant 0 : i32
    %c0_i32_0 = arith.constant 0 : i32
    %c0_i32_1 = arith.constant 0 : i32
    return %c0_i32, %c0_i32_0 : i32, i32
  }
  func.func @transform_3(%arg0: i32) -> (i32, i32) {
    %c0_i32 = arith.constant 0 : i32
    %c0_i32_0 = arith.constant 0 : i32
    %c0_i32_1 = arith.constant 0 : i32
    return %c0_i32, %c0_i32_0 : i32, i32
  }
  func.func @transform_4(%arg0: i32) -> (i32, i32) {
    %c0_i32 = arith.constant 0 : i32
    %c0_i32_0 = arith.constant 0 : i32
    %c0_i32_1 = arith.constant 0 : i32
    return %c0_i32, %c0_i32_0 : i32, i32
  }
  func.func @transform_5(%arg0: i32) -> (i32, i32) {
    %c0_i32 = arith.constant 0 : i32
    %c0_i32_0 = arith.constant 0 : i32
    return %arg0, %c0_i32 : i32, i32
  }
}

module attributes {stable_mosaic.version = 11 : i64} {
  func.func @_graph_conv_kernel(%arg0: i32, %arg1: memref<4x25x48xf32, #tpu.memory_space<vmem>>, %arg2: memref<3x25x25xf32, #tpu.memory_space<vmem>>, %arg3: memref<4x25x16xf32, #tpu.memory_space<vmem>>, %arg4: memref<1x16xf32, #tpu.memory_space<vmem>>, %arg5: memref<1x16xf32, #tpu.memory_space<vmem>>) attributes {dimension_semantics = [#tpu.dimension_semantics<arbitrary>], iteration_bounds = array<i64: 4>, scalar_prefetch = 0 : i64, scratch_operands = 0 : i64, tpu.core_type = #tpu.core_type<tc>, window_params = [{transform_indices = @transform_0, window_bounds = array<i64: 4, 25, 48>}, {pipeline_mode = #tpu.pipeline_mode<synchronous>, transform_indices = @transform_1, window_bounds = array<i64: 3, 25, 25>}, {transform_indices = @transform_2, window_bounds = array<i64: 4, 25, 16>}, {pipeline_mode = #tpu.pipeline_mode<synchronous>, transform_indices = @transform_3, window_bounds = array<i64: 1, 16>}, {pipeline_mode = #tpu.pipeline_mode<synchronous>, transform_indices = @transform_4, window_bounds = array<i64: 1, 16>}]} {
    %c0_i32 = arith.constant 0 : i32
    %0 = arith.cmpi eq, %arg0, %c0_i32 : i32
    %1 = arith.extui %0 : i1 to i32
    %c0_i32_0 = arith.constant 0 : i32
    %2 = arith.cmpi ne, %1, %c0_i32_0 : i32
    scf.if %2 {
      %cst_48 = arith.constant 0.000000e+00 : f32
      %129 = vector.broadcast %cst_48 : f32 to vector<1x16xf32>
      %c0_49 = arith.constant 0 : index
      %c0_50 = arith.constant 0 : index
      %130 = vector.load %arg4[%c0_49, %c0_50] : memref<1x16xf32, #tpu.memory_space<vmem>>, vector<1x16xf32>
      tpu.vector_store %arg4[%c0_49, %c0_50], %129 {strides = array<i32>} : memref<1x16xf32, #tpu.memory_space<vmem>>, vector<1x16xf32>,
      %cst_51 = arith.constant 0.000000e+00 : f32
      %131 = vector.broadcast %cst_51 : f32 to vector<1x16xf32>
      %c0_52 = arith.constant 0 : index
      %c0_53 = arith.constant 0 : index
      %132 = vector.load %arg5[%c0_52, %c0_53] : memref<1x16xf32, #tpu.memory_space<vmem>>, vector<1x16xf32>
      tpu.vector_store %arg5[%c0_52, %c0_53], %131 {strides = array<i32>} : memref<1x16xf32, #tpu.memory_space<vmem>>, vector<1x16xf32>,
    } else {
    }
    %c0 = arith.constant 0 : index
    %c0_1 = arith.constant 0 : index
    %c0_2 = arith.constant 0 : index
    %3 = vector.load %arg2[%c0, %c0_1, %c0_2] : memref<3x25x25xf32, #tpu.memory_space<vmem>>, vector<3x25x25xf32>
    %c0_3 = arith.constant 0 : index
    %c0_4 = arith.constant 0 : index
    %c0_5 = arith.constant 0 : index
    %4 = vector.load %arg1[%c0_3, %c0_4, %c0_5] : memref<4x25x48xf32, #tpu.memory_space<vmem>>, vector<4x25x48xf32>
    %cst = arith.constant 0.000000e+00 : f32
    %5 = vector.broadcast %cst : f32 to vector<1x16xf32>
    %cst_6 = arith.constant 0.000000e+00 : f32
    %6 = vector.broadcast %cst_6 : f32 to vector<1x16xf32>
    %cst_7 = arith.constant 0.000000e+00 : f32
    %7 = vector.broadcast %cst_7 : f32 to vector<25x16xf32>
    %8 = vector.extract_strided_slice %3 {offsets = [0, 0, 0], sizes = [1, 25, 25], strides = [1, 1, 1]} : vector<3x25x25xf32> to vector<1x25x25xf32>
    %9 = vector.shape_cast %8 : vector<1x25x25xf32> to vector<25x25xf32>
    %10 = vector.extract_strided_slice %4 {offsets = [0, 0, 0], sizes = [1, 25, 16], strides = [1, 1, 1]} : vector<4x25x48xf32> to vector<1x25x16xf32>
    %11 = vector.shape_cast %10 : vector<1x25x16xf32> to vector<25x16xf32>
    %cst_8 = arith.constant dense<0.000000e+00> : vector<25x16xf32>
    %12 = tpu.matmul %9, %11, %cst_8 {dimension_numbers = #tpu.dot_dimension_numbers<[1], [0], [0], [1], [0, 0, 1, 1], [], []>} : vector<25x25xf32>, vector<25x16xf32>, vector<25x16xf32> -> vector<25x16xf32>
    %13 = arith.addf %7, %12 : vector<25x16xf32>
    %14 = vector.extract_strided_slice %3 {offsets = [1, 0, 0], sizes = [1, 25, 25], strides = [1, 1, 1]} : vector<3x25x25xf32> to vector<1x25x25xf32>
    %15 = vector.shape_cast %14 : vector<1x25x25xf32> to vector<25x25xf32>
    %16 = vector.extract_strided_slice %4 {offsets = [0, 0, 16], sizes = [1, 25, 16], strides = [1, 1, 1]} : vector<4x25x48xf32> to vector<1x25x16xf32>
    %17 = vector.shape_cast %16 : vector<1x25x16xf32> to vector<25x16xf32>
    %cst_9 = arith.constant dense<0.000000e+00> : vector<25x16xf32>
    %18 = tpu.matmul %15, %17, %cst_9 {dimension_numbers = #tpu.dot_dimension_numbers<[1], [0], [0], [1], [0, 0, 1, 1], [], []>} : vector<25x25xf32>, vector<25x16xf32>, vector<25x16xf32> -> vector<25x16xf32>
    %19 = arith.addf %13, %18 : vector<25x16xf32>
    %20 = vector.extract_strided_slice %3 {offsets = [2, 0, 0], sizes = [1, 25, 25], strides = [1, 1, 1]} : vector<3x25x25xf32> to vector<1x25x25xf32>
    %21 = vector.shape_cast %20 : vector<1x25x25xf32> to vector<25x25xf32>
    %22 = vector.extract_strided_slice %4 {offsets = [0, 0, 32], sizes = [1, 25, 16], strides = [1, 1, 1]} : vector<4x25x48xf32> to vector<1x25x16xf32>
    %23 = vector.shape_cast %22 : vector<1x25x16xf32> to vector<25x16xf32>
    %cst_10 = arith.constant dense<0.000000e+00> : vector<25x16xf32>
    %24 = tpu.matmul %21, %23, %cst_10 {dimension_numbers = #tpu.dot_dimension_numbers<[1], [0], [0], [1], [0, 0, 1, 1], [], []>} : vector<25x25xf32>, vector<25x16xf32>, vector<25x16xf32> -> vector<25x16xf32>
    %25 = arith.addf %19, %24 : vector<25x16xf32>
    %c0_11 = arith.constant 0 : index
    %c0_12 = arith.constant 0 : index
    %c0_13 = arith.constant 0 : index
    %26 = vector.load %arg3[%c0_11, %c0_12, %c0_13] : memref<4x25x16xf32, #tpu.memory_space<vmem>>, vector<1x25x16xf32>
    %27 = vector.shape_cast %26 : vector<1x25x16xf32> to vector<25x16xf32>
    %28 = vector.shape_cast %25 : vector<25x16xf32> to vector<1x25x16xf32>
    tpu.vector_store %arg3[%c0_11, %c0_12, %c0_13], %28 {strides = array<i32>} : memref<4x25x16xf32, #tpu.memory_space<vmem>>, vector<1x25x16xf32>,
    %cst_14 = arith.constant dense<0.000000e+00> : vector<16xf32>
    %29 = vector.multi_reduction <add>, %25, %cst_14 [0] : vector<25x16xf32> to vector<16xf32>
    %30 = vector.shape_cast %29 : vector<16xf32> to vector<1x16xf32>
    %31 = arith.addf %5, %30 : vector<1x16xf32>
    %32 = arith.mulf %25, %25 : vector<25x16xf32>
    %cst_15 = arith.constant dense<0.000000e+00> : vector<16xf32>
    %33 = vector.multi_reduction <add>, %32, %cst_15 [0] : vector<25x16xf32> to vector<16xf32>
    %34 = vector.shape_cast %33 : vector<16xf32> to vector<1x16xf32>
    %35 = arith.addf %6, %34 : vector<1x16xf32>
    %cst_16 = arith.constant 0.000000e+00 : f32
    %36 = vector.broadcast %cst_16 : f32 to vector<25x16xf32>
    %37 = vector.extract_strided_slice %3 {offsets = [0, 0, 0], sizes = [1, 25, 25], strides = [1, 1, 1]} : vector<3x25x25xf32> to vector<1x25x25xf32>
    %38 = vector.shape_cast %37 : vector<1x25x25xf32> to vector<25x25xf32>
    %39 = vector.extract_strided_slice %4 {offsets = [1, 0, 0], sizes = [1, 25, 16], strides = [1, 1, 1]} : vector<4x25x48xf32> to vector<1x25x16xf32>
    %40 = vector.shape_cast %39 : vector<1x25x16xf32> to vector<25x16xf32>
    %cst_17 = arith.constant dense<0.000000e+00> : vector<25x16xf32>
    %41 = tpu.matmul %38, %40, %cst_17 {dimension_numbers = #tpu.dot_dimension_numbers<[1], [0], [0], [1], [0, 0, 1, 1], [], []>} : vector<25x25xf32>, vector<25x16xf32>, vector<25x16xf32> -> vector<25x16xf32>
    %42 = arith.addf %36, %41 : vector<25x16xf32>
    %43 = vector.extract_strided_slice %3 {offsets = [1, 0, 0], sizes = [1, 25, 25], strides = [1, 1, 1]} : vector<3x25x25xf32> to vector<1x25x25xf32>
    %44 = vector.shape_cast %43 : vector<1x25x25xf32> to vector<25x25xf32>
    %45 = vector.extract_strided_slice %4 {offsets = [1, 0, 16], sizes = [1, 25, 16], strides = [1, 1, 1]} : vector<4x25x48xf32> to vector<1x25x16xf32>
    %46 = vector.shape_cast %45 : vector<1x25x16xf32> to vector<25x16xf32>
    %cst_18 = arith.constant dense<0.000000e+00> : vector<25x16xf32>
    %47 = tpu.matmul %44, %46, %cst_18 {dimension_numbers = #tpu.dot_dimension_numbers<[1], [0], [0], [1], [0, 0, 1, 1], [], []>} : vector<25x25xf32>, vector<25x16xf32>, vector<25x16xf32> -> vector<25x16xf32>
    %48 = arith.addf %42, %47 : vector<25x16xf32>
    %49 = vector.extract_strided_slice %3 {offsets = [2, 0, 0], sizes = [1, 25, 25], strides = [1, 1, 1]} : vector<3x25x25xf32> to vector<1x25x25xf32>
    %50 = vector.shape_cast %49 : vector<1x25x25xf32> to vector<25x25xf32>
    %51 = vector.extract_strided_slice %4 {offsets = [1, 0, 32], sizes = [1, 25, 16], strides = [1, 1, 1]} : vector<4x25x48xf32> to vector<1x25x16xf32>
    %52 = vector.shape_cast %51 : vector<1x25x16xf32> to vector<25x16xf32>
    %cst_19 = arith.constant dense<0.000000e+00> : vector<25x16xf32>
    %53 = tpu.matmul %50, %52, %cst_19 {dimension_numbers = #tpu.dot_dimension_numbers<[1], [0], [0], [1], [0, 0, 1, 1], [], []>} : vector<25x25xf32>, vector<25x16xf32>, vector<25x16xf32> -> vector<25x16xf32>
    %54 = arith.addf %48, %53 : vector<25x16xf32>
    %c1 = arith.constant 1 : index
    %c0_20 = arith.constant 0 : index
    %c0_21 = arith.constant 0 : index
    %55 = vector.load %arg3[%c1, %c0_20, %c0_21] : memref<4x25x16xf32, #tpu.memory_space<vmem>>, vector<1x25x16xf32>
    %56 = vector.shape_cast %55 : vector<1x25x16xf32> to vector<25x16xf32>
    %57 = vector.shape_cast %54 : vector<25x16xf32> to vector<1x25x16xf32>
    tpu.vector_store %arg3[%c1, %c0_20, %c0_21], %57 {strides = array<i32>} : memref<4x25x16xf32, #tpu.memory_space<vmem>>, vector<1x25x16xf32>,
    %cst_22 = arith.constant dense<0.000000e+00> : vector<16xf32>
    %58 = vector.multi_reduction <add>, %54, %cst_22 [0] : vector<25x16xf32> to vector<16xf32>
    %59 = vector.shape_cast %58 : vector<16xf32> to vector<1x16xf32>
    %60 = arith.addf %31, %59 : vector<1x16xf32>
    %61 = arith.mulf %54, %54 : vector<25x16xf32>
    %cst_23 = arith.constant dense<0.000000e+00> : vector<16xf32>
    %62 = vector.multi_reduction <add>, %61, %cst_23 [0] : vector<25x16xf32> to vector<16xf32>
    %63 = vector.shape_cast %62 : vector<16xf32> to vector<1x16xf32>
    %64 = arith.addf %35, %63 : vector<1x16xf32>
    %cst_24 = arith.constant 0.000000e+00 : f32
    %65 = vector.broadcast %cst_24 : f32 to vector<25x16xf32>
    %66 = vector.extract_strided_slice %3 {offsets = [0, 0, 0], sizes = [1, 25, 25], strides = [1, 1, 1]} : vector<3x25x25xf32> to vector<1x25x25xf32>
    %67 = vector.shape_cast %66 : vector<1x25x25xf32> to vector<25x25xf32>
    %68 = vector.extract_strided_slice %4 {offsets = [2, 0, 0], sizes = [1, 25, 16], strides = [1, 1, 1]} : vector<4x25x48xf32> to vector<1x25x16xf32>
    %69 = vector.shape_cast %68 : vector<1x25x16xf32> to vector<25x16xf32>
    %cst_25 = arith.constant dense<0.000000e+00> : vector<25x16xf32>
    %70 = tpu.matmul %67, %69, %cst_25 {dimension_numbers = #tpu.dot_dimension_numbers<[1], [0], [0], [1], [0, 0, 1, 1], [], []>} : vector<25x25xf32>, vector<25x16xf32>, vector<25x16xf32> -> vector<25x16xf32>
    %71 = arith.addf %65, %70 : vector<25x16xf32>
    %72 = vector.extract_strided_slice %3 {offsets = [1, 0, 0], sizes = [1, 25, 25], strides = [1, 1, 1]} : vector<3x25x25xf32> to vector<1x25x25xf32>
    %73 = vector.shape_cast %72 : vector<1x25x25xf32> to vector<25x25xf32>
    %74 = vector.extract_strided_slice %4 {offsets = [2, 0, 16], sizes = [1, 25, 16], strides = [1, 1, 1]} : vector<4x25x48xf32> to vector<1x25x16xf32>
    %75 = vector.shape_cast %74 : vector<1x25x16xf32> to vector<25x16xf32>
    %cst_26 = arith.constant dense<0.000000e+00> : vector<25x16xf32>
    %76 = tpu.matmul %73, %75, %cst_26 {dimension_numbers = #tpu.dot_dimension_numbers<[1], [0], [0], [1], [0, 0, 1, 1], [], []>} : vector<25x25xf32>, vector<25x16xf32>, vector<25x16xf32> -> vector<25x16xf32>
    %77 = arith.addf %71, %76 : vector<25x16xf32>
    %78 = vector.extract_strided_slice %3 {offsets = [2, 0, 0], sizes = [1, 25, 25], strides = [1, 1, 1]} : vector<3x25x25xf32> to vector<1x25x25xf32>
    %79 = vector.shape_cast %78 : vector<1x25x25xf32> to vector<25x25xf32>
    %80 = vector.extract_strided_slice %4 {offsets = [2, 0, 32], sizes = [1, 25, 16], strides = [1, 1, 1]} : vector<4x25x48xf32> to vector<1x25x16xf32>
    %81 = vector.shape_cast %80 : vector<1x25x16xf32> to vector<25x16xf32>
    %cst_27 = arith.constant dense<0.000000e+00> : vector<25x16xf32>
    %82 = tpu.matmul %79, %81, %cst_27 {dimension_numbers = #tpu.dot_dimension_numbers<[1], [0], [0], [1], [0, 0, 1, 1], [], []>} : vector<25x25xf32>, vector<25x16xf32>, vector<25x16xf32> -> vector<25x16xf32>
    %83 = arith.addf %77, %82 : vector<25x16xf32>
    %c2 = arith.constant 2 : index
    %c0_28 = arith.constant 0 : index
    %c0_29 = arith.constant 0 : index
    %84 = vector.load %arg3[%c2, %c0_28, %c0_29] : memref<4x25x16xf32, #tpu.memory_space<vmem>>, vector<1x25x16xf32>
    %85 = vector.shape_cast %84 : vector<1x25x16xf32> to vector<25x16xf32>
    %86 = vector.shape_cast %83 : vector<25x16xf32> to vector<1x25x16xf32>
    tpu.vector_store %arg3[%c2, %c0_28, %c0_29], %86 {strides = array<i32>} : memref<4x25x16xf32, #tpu.memory_space<vmem>>, vector<1x25x16xf32>,
    %cst_30 = arith.constant dense<0.000000e+00> : vector<16xf32>
    %87 = vector.multi_reduction <add>, %83, %cst_30 [0] : vector<25x16xf32> to vector<16xf32>
    %88 = vector.shape_cast %87 : vector<16xf32> to vector<1x16xf32>
    %89 = arith.addf %60, %88 : vector<1x16xf32>
    %90 = arith.mulf %83, %83 : vector<25x16xf32>
    %cst_31 = arith.constant dense<0.000000e+00> : vector<16xf32>
    %91 = vector.multi_reduction <add>, %90, %cst_31 [0] : vector<25x16xf32> to vector<16xf32>
    %92 = vector.shape_cast %91 : vector<16xf32> to vector<1x16xf32>
    %93 = arith.addf %64, %92 : vector<1x16xf32>
    %cst_32 = arith.constant 0.000000e+00 : f32
    %94 = vector.broadcast %cst_32 : f32 to vector<25x16xf32>
    %95 = vector.extract_strided_slice %3 {offsets = [0, 0, 0], sizes = [1, 25, 25], strides = [1, 1, 1]} : vector<3x25x25xf32> to vector<1x25x25xf32>
    %96 = vector.shape_cast %95 : vector<1x25x25xf32> to vector<25x25xf32>
    %97 = vector.extract_strided_slice %4 {offsets = [3, 0, 0], sizes = [1, 25, 16], strides = [1, 1, 1]} : vector<4x25x48xf32> to vector<1x25x16xf32>
    %98 = vector.shape_cast %97 : vector<1x25x16xf32> to vector<25x16xf32>
    %cst_33 = arith.constant dense<0.000000e+00> : vector<25x16xf32>
    %99 = tpu.matmul %96, %98, %cst_33 {dimension_numbers = #tpu.dot_dimension_numbers<[1], [0], [0], [1], [0, 0, 1, 1], [], []>} : vector<25x25xf32>, vector<25x16xf32>, vector<25x16xf32> -> vector<25x16xf32>
    %100 = arith.addf %94, %99 : vector<25x16xf32>
    %101 = vector.extract_strided_slice %3 {offsets = [1, 0, 0], sizes = [1, 25, 25], strides = [1, 1, 1]} : vector<3x25x25xf32> to vector<1x25x25xf32>
    %102 = vector.shape_cast %101 : vector<1x25x25xf32> to vector<25x25xf32>
    %103 = vector.extract_strided_slice %4 {offsets = [3, 0, 16], sizes = [1, 25, 16], strides = [1, 1, 1]} : vector<4x25x48xf32> to vector<1x25x16xf32>
    %104 = vector.shape_cast %103 : vector<1x25x16xf32> to vector<25x16xf32>
    %cst_34 = arith.constant dense<0.000000e+00> : vector<25x16xf32>
    %105 = tpu.matmul %102, %104, %cst_34 {dimension_numbers = #tpu.dot_dimension_numbers<[1], [0], [0], [1], [0, 0, 1, 1], [], []>} : vector<25x25xf32>, vector<25x16xf32>, vector<25x16xf32> -> vector<25x16xf32>
    %106 = arith.addf %100, %105 : vector<25x16xf32>
    %107 = vector.extract_strided_slice %3 {offsets = [2, 0, 0], sizes = [1, 25, 25], strides = [1, 1, 1]} : vector<3x25x25xf32> to vector<1x25x25xf32>
    %108 = vector.shape_cast %107 : vector<1x25x25xf32> to vector<25x25xf32>
    %109 = vector.extract_strided_slice %4 {offsets = [3, 0, 32], sizes = [1, 25, 16], strides = [1, 1, 1]} : vector<4x25x48xf32> to vector<1x25x16xf32>
    %110 = vector.shape_cast %109 : vector<1x25x16xf32> to vector<25x16xf32>
    %cst_35 = arith.constant dense<0.000000e+00> : vector<25x16xf32>
    %111 = tpu.matmul %108, %110, %cst_35 {dimension_numbers = #tpu.dot_dimension_numbers<[1], [0], [0], [1], [0, 0, 1, 1], [], []>} : vector<25x25xf32>, vector<25x16xf32>, vector<25x16xf32> -> vector<25x16xf32>
    %112 = arith.addf %106, %111 : vector<25x16xf32>
    %c3 = arith.constant 3 : index
    %c0_36 = arith.constant 0 : index
    %c0_37 = arith.constant 0 : index
    %113 = vector.load %arg3[%c3, %c0_36, %c0_37] : memref<4x25x16xf32, #tpu.memory_space<vmem>>, vector<1x25x16xf32>
    %114 = vector.shape_cast %113 : vector<1x25x16xf32> to vector<25x16xf32>
    %115 = vector.shape_cast %112 : vector<25x16xf32> to vector<1x25x16xf32>
    tpu.vector_store %arg3[%c3, %c0_36, %c0_37], %115 {strides = array<i32>} : memref<4x25x16xf32, #tpu.memory_space<vmem>>, vector<1x25x16xf32>,
    %cst_38 = arith.constant dense<0.000000e+00> : vector<16xf32>
    %116 = vector.multi_reduction <add>, %112, %cst_38 [0] : vector<25x16xf32> to vector<16xf32>
    %117 = vector.shape_cast %116 : vector<16xf32> to vector<1x16xf32>
    %118 = arith.addf %89, %117 : vector<1x16xf32>
    %119 = arith.mulf %112, %112 : vector<25x16xf32>
    %cst_39 = arith.constant dense<0.000000e+00> : vector<16xf32>
    %120 = vector.multi_reduction <add>, %119, %cst_39 [0] : vector<25x16xf32> to vector<16xf32>
    %121 = vector.shape_cast %120 : vector<16xf32> to vector<1x16xf32>
    %122 = arith.addf %93, %121 : vector<1x16xf32>
    %c0_40 = arith.constant 0 : index
    %c0_41 = arith.constant 0 : index
    %123 = vector.load %arg4[%c0_40, %c0_41] : memref<1x16xf32, #tpu.memory_space<vmem>>, vector<1x16xf32>
    %124 = arith.addf %123, %118 : vector<1x16xf32>
    %c0_42 = arith.constant 0 : index
    %c0_43 = arith.constant 0 : index
    %125 = vector.load %arg4[%c0_42, %c0_43] : memref<1x16xf32, #tpu.memory_space<vmem>>, vector<1x16xf32>
    tpu.vector_store %arg4[%c0_42, %c0_43], %124 {strides = array<i32>} : memref<1x16xf32, #tpu.memory_space<vmem>>, vector<1x16xf32>,
    %c0_44 = arith.constant 0 : index
    %c0_45 = arith.constant 0 : index
    %126 = vector.load %arg5[%c0_44, %c0_45] : memref<1x16xf32, #tpu.memory_space<vmem>>, vector<1x16xf32>
    %127 = arith.addf %126, %122 : vector<1x16xf32>
    %c0_46 = arith.constant 0 : index
    %c0_47 = arith.constant 0 : index
    %128 = vector.load %arg5[%c0_46, %c0_47] : memref<1x16xf32, #tpu.memory_space<vmem>>, vector<1x16xf32>
    tpu.vector_store %arg5[%c0_46, %c0_47], %127 {strides = array<i32>} : memref<1x16xf32, #tpu.memory_space<vmem>>, vector<1x16xf32>,
    return
  }
  func.func @transform_0(%arg0: i32) -> (i32, i32, i32) {
    %c0_i32 = arith.constant 0 : i32
    %c0_i32_0 = arith.constant 0 : i32
    %c0_i32_1 = arith.constant 0 : i32
    return %arg0, %c0_i32, %c0_i32_0 : i32, i32, i32
  }
  func.func @transform_1(%arg0: i32) -> (i32, i32, i32) {
    %c0_i32 = arith.constant 0 : i32
    %c0_i32_0 = arith.constant 0 : i32
    %c0_i32_1 = arith.constant 0 : i32
    %c0_i32_2 = arith.constant 0 : i32
    return %c0_i32, %c0_i32_0, %c0_i32_1 : i32, i32, i32
  }
  func.func @transform_2(%arg0: i32) -> (i32, i32, i32) {
    %c0_i32 = arith.constant 0 : i32
    %c0_i32_0 = arith.constant 0 : i32
    %c0_i32_1 = arith.constant 0 : i32
    return %arg0, %c0_i32, %c0_i32_0 : i32, i32, i32
  }
  func.func @transform_3(%arg0: i32) -> (i32, i32) {
    %c0_i32 = arith.constant 0 : i32
    %c0_i32_0 = arith.constant 0 : i32
    %c0_i32_1 = arith.constant 0 : i32
    return %c0_i32, %c0_i32_0 : i32, i32
  }
  func.func @transform_4(%arg0: i32) -> (i32, i32) {
    %c0_i32 = arith.constant 0 : i32
    %c0_i32_0 = arith.constant 0 : i32
    %c0_i32_1 = arith.constant 0 : i32
    return %c0_i32, %c0_i32_0 : i32, i32
  }
}

module attributes {stable_mosaic.version = 11 : i64} {
  func.func @_linear_kernel(%arg0: i32, %arg1: memref<200x16xf32, #tpu.memory_space<vmem>>, %arg2: memref<16x64xf32, #tpu.memory_space<vmem>>, %arg3: memref<1x64xf32, #tpu.memory_space<vmem>>, %arg4: memref<1x16xf32, #tpu.memory_space<vmem>>, %arg5: memref<1x16xf32, #tpu.memory_space<vmem>>, %arg6: memref<200x64xf32, #tpu.memory_space<vmem>>, %arg7: memref<1x64xf32, #tpu.memory_space<vmem>>, %arg8: memref<1x64xf32, #tpu.memory_space<vmem>>) attributes {dimension_semantics = [#tpu.dimension_semantics<arbitrary>], iteration_bounds = array<i64: 2>, scalar_prefetch = 0 : i64, scratch_operands = 0 : i64, tpu.core_type = #tpu.core_type<tc>, window_params = [{transform_indices = @transform_0, window_bounds = array<i64: 200, 16>}, {pipeline_mode = #tpu.pipeline_mode<synchronous>, transform_indices = @transform_1, window_bounds = array<i64: 16, 64>}, {pipeline_mode = #tpu.pipeline_mode<synchronous>, transform_indices = @transform_2, window_bounds = array<i64: 1, 64>}, {pipeline_mode = #tpu.pipeline_mode<synchronous>, transform_indices = @transform_3, window_bounds = array<i64: 1, 16>}, {pipeline_mode = #tpu.pipeline_mode<synchronous>, transform_indices = @transform_4, window_bounds = array<i64: 1, 16>}, {transform_indices = @transform_5, window_bounds = array<i64: 200, 64>}, {pipeline_mode = #tpu.pipeline_mode<synchronous>, transform_indices = @transform_6, window_bounds = array<i64: 1, 64>}, {pipeline_mode = #tpu.pipeline_mode<synchronous>, transform_indices = @transform_7, window_bounds = array<i64: 1, 64>}]} {
    %c0 = arith.constant 0 : index
    %c0_0 = arith.constant 0 : index
    %0 = vector.load %arg1[%c0, %c0_0] : memref<200x16xf32, #tpu.memory_space<vmem>>, vector<200x16xf32>
    %c0_1 = arith.constant 0 : index
    %c0_2 = arith.constant 0 : index
    %1 = vector.load %arg4[%c0_1, %c0_2] : memref<1x16xf32, #tpu.memory_space<vmem>>, vector<1x16xf32>
    %2 = vector.broadcast %1 : vector<1x16xf32> to vector<200x16xf32>
    %3 = arith.mulf %0, %2 : vector<200x16xf32>
    %c0_3 = arith.constant 0 : index
    %c0_4 = arith.constant 0 : index
    %4 = vector.load %arg5[%c0_3, %c0_4] : memref<1x16xf32, #tpu.memory_space<vmem>>, vector<1x16xf32>
    %5 = vector.broadcast %4 : vector<1x16xf32> to vector<200x16xf32>
    %6 = arith.addf %3, %5 : vector<200x16xf32>
    %cst = arith.constant 0.000000e+00 : f32
    %7 = vector.broadcast %cst : f32 to vector<200x16xf32>
    %8 = arith.maximumf %6, %7 : vector<200x16xf32>
    %c0_5 = arith.constant 0 : index
    %c0_6 = arith.constant 0 : index
    %9 = vector.load %arg2[%c0_5, %c0_6] : memref<16x64xf32, #tpu.memory_space<vmem>>, vector<16x64xf32>
    %cst_7 = arith.constant dense<0.000000e+00> : vector<200x64xf32>
    %10 = tpu.matmul %8, %9, %cst_7 {dimension_numbers = #tpu.dot_dimension_numbers<[1], [0], [0], [1], [0, 0, 1, 1], [], []>} : vector<200x16xf32>, vector<16x64xf32>, vector<200x64xf32> -> vector<200x64xf32>
    %c0_8 = arith.constant 0 : index
    %c0_9 = arith.constant 0 : index
    %11 = vector.load %arg3[%c0_8, %c0_9] : memref<1x64xf32, #tpu.memory_space<vmem>>, vector<1x64xf32>
    %12 = vector.broadcast %11 : vector<1x64xf32> to vector<200x64xf32>
    %13 = arith.addf %10, %12 : vector<200x64xf32>
    %c0_10 = arith.constant 0 : index
    %c0_11 = arith.constant 0 : index
    %14 = vector.load %arg6[%c0_10, %c0_11] : memref<200x64xf32, #tpu.memory_space<vmem>>, vector<200x64xf32>
    tpu.vector_store %arg6[%c0_10, %c0_11], %13 {strides = array<i32>} : memref<200x64xf32, #tpu.memory_space<vmem>>, vector<200x64xf32>,
    %c0_i32 = arith.constant 0 : i32
    %15 = arith.cmpi eq, %arg0, %c0_i32 : i32
    %16 = arith.extui %15 : i1 to i32
    %c0_i32_12 = arith.constant 0 : i32
    %17 = arith.cmpi ne, %16, %c0_i32_12 : i32
    scf.if %17 {
      %cst_23 = arith.constant 0.000000e+00 : f32
      %29 = vector.broadcast %cst_23 : f32 to vector<1x64xf32>
      %c0_24 = arith.constant 0 : index
      %c0_25 = arith.constant 0 : index
      %30 = vector.load %arg7[%c0_24, %c0_25] : memref<1x64xf32, #tpu.memory_space<vmem>>, vector<1x64xf32>
      tpu.vector_store %arg7[%c0_24, %c0_25], %29 {strides = array<i32>} : memref<1x64xf32, #tpu.memory_space<vmem>>, vector<1x64xf32>,
      %cst_26 = arith.constant 0.000000e+00 : f32
      %31 = vector.broadcast %cst_26 : f32 to vector<1x64xf32>
      %c0_27 = arith.constant 0 : index
      %c0_28 = arith.constant 0 : index
      %32 = vector.load %arg8[%c0_27, %c0_28] : memref<1x64xf32, #tpu.memory_space<vmem>>, vector<1x64xf32>
      tpu.vector_store %arg8[%c0_27, %c0_28], %31 {strides = array<i32>} : memref<1x64xf32, #tpu.memory_space<vmem>>, vector<1x64xf32>,
    } else {
    }
    %c0_13 = arith.constant 0 : index
    %c0_14 = arith.constant 0 : index
    %18 = vector.load %arg7[%c0_13, %c0_14] : memref<1x64xf32, #tpu.memory_space<vmem>>, vector<1x64xf32>
    %cst_15 = arith.constant dense<0.000000e+00> : vector<64xf32>
    %19 = vector.multi_reduction <add>, %13, %cst_15 [0] : vector<200x64xf32> to vector<64xf32>
    %20 = vector.shape_cast %19 : vector<64xf32> to vector<1x64xf32>
    %21 = arith.addf %18, %20 : vector<1x64xf32>
    %c0_16 = arith.constant 0 : index
    %c0_17 = arith.constant 0 : index
    %22 = vector.load %arg7[%c0_16, %c0_17] : memref<1x64xf32, #tpu.memory_space<vmem>>, vector<1x64xf32>
    tpu.vector_store %arg7[%c0_16, %c0_17], %21 {strides = array<i32>} : memref<1x64xf32, #tpu.memory_space<vmem>>, vector<1x64xf32>,
    %c0_18 = arith.constant 0 : index
    %c0_19 = arith.constant 0 : index
    %23 = vector.load %arg8[%c0_18, %c0_19] : memref<1x64xf32, #tpu.memory_space<vmem>>, vector<1x64xf32>
    %24 = arith.mulf %13, %13 : vector<200x64xf32>
    %cst_20 = arith.constant dense<0.000000e+00> : vector<64xf32>
    %25 = vector.multi_reduction <add>, %24, %cst_20 [0] : vector<200x64xf32> to vector<64xf32>
    %26 = vector.shape_cast %25 : vector<64xf32> to vector<1x64xf32>
    %27 = arith.addf %23, %26 : vector<1x64xf32>
    %c0_21 = arith.constant 0 : index
    %c0_22 = arith.constant 0 : index
    %28 = vector.load %arg8[%c0_21, %c0_22] : memref<1x64xf32, #tpu.memory_space<vmem>>, vector<1x64xf32>
    tpu.vector_store %arg8[%c0_21, %c0_22], %27 {strides = array<i32>} : memref<1x64xf32, #tpu.memory_space<vmem>>, vector<1x64xf32>,
    return
  }
  func.func @transform_0(%arg0: i32) -> (i32, i32) {
    %c0_i32 = arith.constant 0 : i32
    %c0_i32_0 = arith.constant 0 : i32
    return %arg0, %c0_i32 : i32, i32
  }
  func.func @transform_1(%arg0: i32) -> (i32, i32) {
    %c0_i32 = arith.constant 0 : i32
    %c0_i32_0 = arith.constant 0 : i32
    %c0_i32_1 = arith.constant 0 : i32
    return %c0_i32, %c0_i32_0 : i32, i32
  }
  func.func @transform_2(%arg0: i32) -> (i32, i32) {
    %c0_i32 = arith.constant 0 : i32
    %c0_i32_0 = arith.constant 0 : i32
    %c0_i32_1 = arith.constant 0 : i32
    return %c0_i32, %c0_i32_0 : i32, i32
  }
  func.func @transform_3(%arg0: i32) -> (i32, i32) {
    %c0_i32 = arith.constant 0 : i32
    %c0_i32_0 = arith.constant 0 : i32
    %c0_i32_1 = arith.constant 0 : i32
    return %c0_i32, %c0_i32_0 : i32, i32
  }
  func.func @transform_4(%arg0: i32) -> (i32, i32) {
    %c0_i32 = arith.constant 0 : i32
    %c0_i32_0 = arith.constant 0 : i32
    %c0_i32_1 = arith.constant 0 : i32
    return %c0_i32, %c0_i32_0 : i32, i32
  }
  func.func @transform_5(%arg0: i32) -> (i32, i32) {
    %c0_i32 = arith.constant 0 : i32
    %c0_i32_0 = arith.constant 0 : i32
    return %arg0, %c0_i32 : i32, i32
  }
  func.func @transform_6(%arg0: i32) -> (i32, i32) {
    %c0_i32 = arith.constant 0 : i32
    %c0_i32_0 = arith.constant 0 : i32
    %c0_i32_1 = arith.constant 0 : i32
    return %c0_i32, %c0_i32_0 : i32, i32
  }
  func.func @transform_7(%arg0: i32) -> (i32, i32) {
    %c0_i32 = arith.constant 0 : i32
    %c0_i32_0 = arith.constant 0 : i32
    %c0_i32_1 = arith.constant 0 : i32
    return %c0_i32, %c0_i32_0 : i32, i32
  }
}

module attributes {stable_mosaic.version = 11 : i64} {
  func.func @_linear_kernel(%arg0: i32, %arg1: memref<200x32xf32, #tpu.memory_space<vmem>>, %arg2: memref<32x64xf32, #tpu.memory_space<vmem>>, %arg3: memref<1x64xf32, #tpu.memory_space<vmem>>, %arg4: memref<200x64xf32, #tpu.memory_space<vmem>>, %arg5: memref<1x64xf32, #tpu.memory_space<vmem>>, %arg6: memref<1x64xf32, #tpu.memory_space<vmem>>) attributes {dimension_semantics = [#tpu.dimension_semantics<arbitrary>], iteration_bounds = array<i64: 2>, scalar_prefetch = 0 : i64, scratch_operands = 0 : i64, tpu.core_type = #tpu.core_type<tc>, window_params = [{transform_indices = @transform_0, window_bounds = array<i64: 200, 32>}, {pipeline_mode = #tpu.pipeline_mode<synchronous>, transform_indices = @transform_1, window_bounds = array<i64: 32, 64>}, {pipeline_mode = #tpu.pipeline_mode<synchronous>, transform_indices = @transform_2, window_bounds = array<i64: 1, 64>}, {transform_indices = @transform_3, window_bounds = array<i64: 200, 64>}, {pipeline_mode = #tpu.pipeline_mode<synchronous>, transform_indices = @transform_4, window_bounds = array<i64: 1, 64>}, {pipeline_mode = #tpu.pipeline_mode<synchronous>, transform_indices = @transform_5, window_bounds = array<i64: 1, 64>}]} {
    %c0 = arith.constant 0 : index
    %c0_0 = arith.constant 0 : index
    %0 = vector.load %arg1[%c0, %c0_0] : memref<200x32xf32, #tpu.memory_space<vmem>>, vector<200x32xf32>
    %c0_1 = arith.constant 0 : index
    %c0_2 = arith.constant 0 : index
    %1 = vector.load %arg2[%c0_1, %c0_2] : memref<32x64xf32, #tpu.memory_space<vmem>>, vector<32x64xf32>
    %cst = arith.constant dense<0.000000e+00> : vector<200x64xf32>
    %2 = tpu.matmul %0, %1, %cst {dimension_numbers = #tpu.dot_dimension_numbers<[1], [0], [0], [1], [0, 0, 1, 1], [], []>} : vector<200x32xf32>, vector<32x64xf32>, vector<200x64xf32> -> vector<200x64xf32>
    %c0_3 = arith.constant 0 : index
    %c0_4 = arith.constant 0 : index
    %3 = vector.load %arg3[%c0_3, %c0_4] : memref<1x64xf32, #tpu.memory_space<vmem>>, vector<1x64xf32>
    %4 = vector.broadcast %3 : vector<1x64xf32> to vector<200x64xf32>
    %5 = arith.addf %2, %4 : vector<200x64xf32>
    %c0_5 = arith.constant 0 : index
    %c0_6 = arith.constant 0 : index
    %6 = vector.load %arg4[%c0_5, %c0_6] : memref<200x64xf32, #tpu.memory_space<vmem>>, vector<200x64xf32>
    tpu.vector_store %arg4[%c0_5, %c0_6], %5 {strides = array<i32>} : memref<200x64xf32, #tpu.memory_space<vmem>>, vector<200x64xf32>,
    %c0_i32 = arith.constant 0 : i32
    %7 = arith.cmpi eq, %arg0, %c0_i32 : i32
    %8 = arith.extui %7 : i1 to i32
    %c0_i32_7 = arith.constant 0 : i32
    %9 = arith.cmpi ne, %8, %c0_i32_7 : i32
    scf.if %9 {
      %cst_18 = arith.constant 0.000000e+00 : f32
      %21 = vector.broadcast %cst_18 : f32 to vector<1x64xf32>
      %c0_19 = arith.constant 0 : index
      %c0_20 = arith.constant 0 : index
      %22 = vector.load %arg5[%c0_19, %c0_20] : memref<1x64xf32, #tpu.memory_space<vmem>>, vector<1x64xf32>
      tpu.vector_store %arg5[%c0_19, %c0_20], %21 {strides = array<i32>} : memref<1x64xf32, #tpu.memory_space<vmem>>, vector<1x64xf32>,
      %cst_21 = arith.constant 0.000000e+00 : f32
      %23 = vector.broadcast %cst_21 : f32 to vector<1x64xf32>
      %c0_22 = arith.constant 0 : index
      %c0_23 = arith.constant 0 : index
      %24 = vector.load %arg6[%c0_22, %c0_23] : memref<1x64xf32, #tpu.memory_space<vmem>>, vector<1x64xf32>
      tpu.vector_store %arg6[%c0_22, %c0_23], %23 {strides = array<i32>} : memref<1x64xf32, #tpu.memory_space<vmem>>, vector<1x64xf32>,
    } else {
    }
    %c0_8 = arith.constant 0 : index
    %c0_9 = arith.constant 0 : index
    %10 = vector.load %arg5[%c0_8, %c0_9] : memref<1x64xf32, #tpu.memory_space<vmem>>, vector<1x64xf32>
    %cst_10 = arith.constant dense<0.000000e+00> : vector<64xf32>
    %11 = vector.multi_reduction <add>, %5, %cst_10 [0] : vector<200x64xf32> to vector<64xf32>
    %12 = vector.shape_cast %11 : vector<64xf32> to vector<1x64xf32>
    %13 = arith.addf %10, %12 : vector<1x64xf32>
    %c0_11 = arith.constant 0 : index
    %c0_12 = arith.constant 0 : index
    %14 = vector.load %arg5[%c0_11, %c0_12] : memref<1x64xf32, #tpu.memory_space<vmem>>, vector<1x64xf32>
    tpu.vector_store %arg5[%c0_11, %c0_12], %13 {strides = array<i32>} : memref<1x64xf32, #tpu.memory_space<vmem>>, vector<1x64xf32>,
    %c0_13 = arith.constant 0 : index
    %c0_14 = arith.constant 0 : index
    %15 = vector.load %arg6[%c0_13, %c0_14] : memref<1x64xf32, #tpu.memory_space<vmem>>, vector<1x64xf32>
    %16 = arith.mulf %5, %5 : vector<200x64xf32>
    %cst_15 = arith.constant dense<0.000000e+00> : vector<64xf32>
    %17 = vector.multi_reduction <add>, %16, %cst_15 [0] : vector<200x64xf32> to vector<64xf32>
    %18 = vector.shape_cast %17 : vector<64xf32> to vector<1x64xf32>
    %19 = arith.addf %15, %18 : vector<1x64xf32>
    %c0_16 = arith.constant 0 : index
    %c0_17 = arith.constant 0 : index
    %20 = vector.load %arg6[%c0_16, %c0_17] : memref<1x64xf32, #tpu.memory_space<vmem>>, vector<1x64xf32>
    tpu.vector_store %arg6[%c0_16, %c0_17], %19 {strides = array<i32>} : memref<1x64xf32, #tpu.memory_space<vmem>>, vector<1x64xf32>,
    return
  }
  func.func @transform_0(%arg0: i32) -> (i32, i32) {
    %c0_i32 = arith.constant 0 : i32
    %c0_i32_0 = arith.constant 0 : i32
    return %arg0, %c0_i32 : i32, i32
  }
  func.func @transform_1(%arg0: i32) -> (i32, i32) {
    %c0_i32 = arith.constant 0 : i32
    %c0_i32_0 = arith.constant 0 : i32
    %c0_i32_1 = arith.constant 0 : i32
    return %c0_i32, %c0_i32_0 : i32, i32
  }
  func.func @transform_2(%arg0: i32) -> (i32, i32) {
    %c0_i32 = arith.constant 0 : i32
    %c0_i32_0 = arith.constant 0 : i32
    %c0_i32_1 = arith.constant 0 : i32
    return %c0_i32, %c0_i32_0 : i32, i32
  }
  func.func @transform_3(%arg0: i32) -> (i32, i32) {
    %c0_i32 = arith.constant 0 : i32
    %c0_i32_0 = arith.constant 0 : i32
    return %arg0, %c0_i32 : i32, i32
  }
  func.func @transform_4(%arg0: i32) -> (i32, i32) {
    %c0_i32 = arith.constant 0 : i32
    %c0_i32_0 = arith.constant 0 : i32
    %c0_i32_1 = arith.constant 0 : i32
    return %c0_i32, %c0_i32_0 : i32, i32
  }
  func.func @transform_5(%arg0: i32) -> (i32, i32) {
    %c0_i32 = arith.constant 0 : i32
    %c0_i32_0 = arith.constant 0 : i32
    %c0_i32_1 = arith.constant 0 : i32
    return %c0_i32, %c0_i32_0 : i32, i32
  }
}

module attributes {stable_mosaic.version = 11 : i64} {
  func.func @_bn_add_relu_kernel(%arg0: i32, %arg1: memref<200x64xf32, #tpu.memory_space<vmem>>, %arg2: memref<1x64xf32, #tpu.memory_space<vmem>>, %arg3: memref<1x64xf32, #tpu.memory_space<vmem>>, %arg4: memref<200x64xf32, #tpu.memory_space<vmem>>, %arg5: memref<1x64xf32, #tpu.memory_space<vmem>>, %arg6: memref<1x64xf32, #tpu.memory_space<vmem>>, %arg7: memref<200x64xf32, #tpu.memory_space<vmem>>) attributes {dimension_semantics = [#tpu.dimension_semantics<parallel>], iteration_bounds = array<i64: 2>, scalar_prefetch = 0 : i64, scratch_operands = 0 : i64, tpu.core_type = #tpu.core_type<tc>, window_params = [{transform_indices = @transform_0, window_bounds = array<i64: 200, 64>}, {pipeline_mode = #tpu.pipeline_mode<synchronous>, transform_indices = @transform_1, window_bounds = array<i64: 1, 64>}, {pipeline_mode = #tpu.pipeline_mode<synchronous>, transform_indices = @transform_2, window_bounds = array<i64: 1, 64>}, {transform_indices = @transform_3, window_bounds = array<i64: 200, 64>}, {pipeline_mode = #tpu.pipeline_mode<synchronous>, transform_indices = @transform_4, window_bounds = array<i64: 1, 64>}, {pipeline_mode = #tpu.pipeline_mode<synchronous>, transform_indices = @transform_5, window_bounds = array<i64: 1, 64>}, {transform_indices = @transform_6, window_bounds = array<i64: 200, 64>}]} {
    %c0 = arith.constant 0 : index
    %c0_0 = arith.constant 0 : index
    %0 = vector.load %arg1[%c0, %c0_0] : memref<200x64xf32, #tpu.memory_space<vmem>>, vector<200x64xf32>
    %c0_1 = arith.constant 0 : index
    %c0_2 = arith.constant 0 : index
    %1 = vector.load %arg2[%c0_1, %c0_2] : memref<1x64xf32, #tpu.memory_space<vmem>>, vector<1x64xf32>
    %2 = vector.broadcast %1 : vector<1x64xf32> to vector<200x64xf32>
    %3 = arith.mulf %0, %2 : vector<200x64xf32>
    %c0_3 = arith.constant 0 : index
    %c0_4 = arith.constant 0 : index
    %4 = vector.load %arg3[%c0_3, %c0_4] : memref<1x64xf32, #tpu.memory_space<vmem>>, vector<1x64xf32>
    %5 = vector.broadcast %4 : vector<1x64xf32> to vector<200x64xf32>
    %6 = arith.addf %3, %5 : vector<200x64xf32>
    %c0_5 = arith.constant 0 : index
    %c0_6 = arith.constant 0 : index
    %7 = vector.load %arg4[%c0_5, %c0_6] : memref<200x64xf32, #tpu.memory_space<vmem>>, vector<200x64xf32>
    %c0_7 = arith.constant 0 : index
    %c0_8 = arith.constant 0 : index
    %8 = vector.load %arg5[%c0_7, %c0_8] : memref<1x64xf32, #tpu.memory_space<vmem>>, vector<1x64xf32>
    %9 = vector.broadcast %8 : vector<1x64xf32> to vector<200x64xf32>
    %10 = arith.mulf %7, %9 : vector<200x64xf32>
    %c0_9 = arith.constant 0 : index
    %c0_10 = arith.constant 0 : index
    %11 = vector.load %arg6[%c0_9, %c0_10] : memref<1x64xf32, #tpu.memory_space<vmem>>, vector<1x64xf32>
    %12 = vector.broadcast %11 : vector<1x64xf32> to vector<200x64xf32>
    %13 = arith.addf %10, %12 : vector<200x64xf32>
    %14 = arith.addf %6, %13 : vector<200x64xf32>
    %cst = arith.constant 0.000000e+00 : f32
    %15 = vector.broadcast %cst : f32 to vector<200x64xf32>
    %16 = arith.maximumf %14, %15 : vector<200x64xf32>
    %c0_11 = arith.constant 0 : index
    %c0_12 = arith.constant 0 : index
    %17 = vector.load %arg7[%c0_11, %c0_12] : memref<200x64xf32, #tpu.memory_space<vmem>>, vector<200x64xf32>
    tpu.vector_store %arg7[%c0_11, %c0_12], %16 {strides = array<i32>} : memref<200x64xf32, #tpu.memory_space<vmem>>, vector<200x64xf32>,
    return
  }
  func.func @transform_0(%arg0: i32) -> (i32, i32) {
    %c0_i32 = arith.constant 0 : i32
    %c0_i32_0 = arith.constant 0 : i32
    return %arg0, %c0_i32 : i32, i32
  }
  func.func @transform_1(%arg0: i32) -> (i32, i32) {
    %c0_i32 = arith.constant 0 : i32
    %c0_i32_0 = arith.constant 0 : i32
    %c0_i32_1 = arith.constant 0 : i32
    return %c0_i32, %c0_i32_0 : i32, i32
  }
  func.func @transform_2(%arg0: i32) -> (i32, i32) {
    %c0_i32 = arith.constant 0 : i32
    %c0_i32_0 = arith.constant 0 : i32
    %c0_i32_1 = arith.constant 0 : i32
    return %c0_i32, %c0_i32_0 : i32, i32
  }
  func.func @transform_3(%arg0: i32) -> (i32, i32) {
    %c0_i32 = arith.constant 0 : i32
    %c0_i32_0 = arith.constant 0 : i32
    return %arg0, %c0_i32 : i32, i32
  }
  func.func @transform_4(%arg0: i32) -> (i32, i32) {
    %c0_i32 = arith.constant 0 : i32
    %c0_i32_0 = arith.constant 0 : i32
    %c0_i32_1 = arith.constant 0 : i32
    return %c0_i32, %c0_i32_0 : i32, i32
  }
  func.func @transform_5(%arg0: i32) -> (i32, i32) {
    %c0_i32 = arith.constant 0 : i32
    %c0_i32_0 = arith.constant 0 : i32
    %c0_i32_1 = arith.constant 0 : i32
    return %c0_i32, %c0_i32_0 : i32, i32
  }
  func.func @transform_6(%arg0: i32) -> (i32, i32) {
    %c0_i32 = arith.constant 0 : i32
    %c0_i32_0 = arith.constant 0 : i32
    return %arg0, %c0_i32 : i32, i32
  }
}

</mosaic_0001>

<llo_original>
// kernel: spatial_bottleneck_block.7
$region0: #{spatial_bottleneck_block.7}
  #allocation0 [shape = 'u32[]', space=smem, size = 0x4, offset = 0x4, fixed_abs, tag = 'smem constant byte address 0x4 - core index']
  #allocation1 [shape = 'u32[144,128]{1,0:T(1,128)}', space=vmem, size = 0x12000, scoped, tag = 'internal scratch']
  %s0 = inlined_call_operand.vmem [shape: f32[400,16], index: 0, kind: input, shape index: {}]
  %s1 = inlined_call_operand.vmem [shape: f32[16,48], index: 1, kind: input, shape index: {}]
  %s2 = inlined_call_operand.vmem [shape: f32[1,48], index: 2, kind: input, shape index: {}]
  %s3 = inlined_call_operand.vmem [shape: f32[1,16], index: 3, kind: input, shape index: {}]
  %s4 = inlined_call_operand.vmem [shape: f32[1,16], index: 4, kind: input, shape index: {}]
  %s5 = inlined_call_operand.vmem [shape: f32[400,48], index: 5, kind: output, shape index: {}]
  %s6 = sld [smem:[#allocation0]]
  $region53: #{spatial_bottleneck_block.7} parent=0
    _
  %s8 = ssub.s32 1, %s6
  %s9 = scalar_select 0, %s8, %s6
  loop: start=0, step=1, limit=4
  $region2: #{spatial_bottleneck_block.7} parent=0 // loop_pre_header
    _
  $region3: #{spatial_bottleneck_block.7} parent=0 // loop_header
    %s11 = sphi 0, %s15
    %p12 = scmp.ge.s32.totalorder %s11, 4
    %s21 = sphi 0, %s23
    %s24 = sphi 0, %s21
    %s25 = sphi 0, %s24
    %s41 = sphi 0, %s25
    %s45 = sphi 0, %s45
    %s47 = sphi 0, %s45
    %s48 = sphi 0, %s47
    %s62 = sphi 0, %s48
    %s66 = sphi 0, %s66
    %s68 = sphi 0, %s66
    %s69 = sphi 0, %s68
    %s83 = sphi 0, %s69
    %s87 = sphi 0, %s87
    %s89 = sphi 0, %s87
    %s90 = sphi 0, %s89
    %s104 = sphi 0, %s90
    %s108 = sphi 0, %s108
    %s110 = sphi 0, %s108
    %s111 = sphi 0, %s110
    %s125 = sphi 0, %s111
    %s131 = sphi 0, %s133
    %s134 = sphi 0, %s131
    %s135 = sphi 0, %s134
    %s151 = sphi 0, %s135
  $region4: #{spatial_bottleneck_block.7} parent=0 // loop_header_branch
    %14 = sbr.rel (%p12) target = $region8
  $region5: #{spatial_bottleneck_block.7} parent=0 // loop_body
    %s16 = ssub.s32 %s11, 1
    %s17 = ssub.s32 %s11, 2
    %s18 = sadd.s32 %s11, 1
    %s19 = ssub.s32 %s11, %s18
    %p20 = scmp.eq.s32.totalorder %s19, 0
    %s22 = sadd.s32 %s21, 1
    %s23 = scalar_select %p20, %s21, %s22
    %p26 = pneg %p20
    %p27 = scmp.eq.s32.totalorder %s11, 1
    %p28 = por %p26, %p27
    %p29 = scmp.ne.s32.totalorder %s21, %s24
    %p30 = scmp.eq.s32.totalorder %s11, 0
    %p31 = por %p29, %p30
    %p32 = scmp.ne.s32.totalorder %s21, %s24
    %p33 = scmp.eq.s32.totalorder %s16, 1
    %p34 = por %p32, %p33
    %p35 = scmp.ne.s32.totalorder %s24, %s25
    %p36 = scmp.eq.s32.totalorder %s16, 0
    %p37 = por %p35, %p36
    %p38 = scmp.ne.s32.totalorder %s24, %s25
    %p39 = scmp.eq.s32.totalorder %s17, 1
    %p40 = por %p38, %p39
    %p42 = scmp.ne.s32.totalorder %s25, %s41
    %p43 = scmp.eq.s32.totalorder %s17, 0
    %p44 = por %p42, %p43
    %s46 = sadd.s32 %s45, 1
    %p49 = scmp.eq.s32.totalorder %s11, 1
    %p50 = scmp.ne.s32.totalorder %s45, %s47
    %p51 = scmp.eq.s32.totalorder %s11, 0
    %p52 = por %p50, %p51
    %p53 = scmp.ne.s32.totalorder %s45, %s47
    %p54 = scmp.eq.s32.totalorder %s16, 1
    %p55 = por %p53, %p54
    %p56 = scmp.ne.s32.totalorder %s47, %s48
    %p57 = scmp.eq.s32.totalorder %s16, 0
    %p58 = por %p56, %p57
    %p59 = scmp.ne.s32.totalorder %s47, %s48
    %p60 = scmp.eq.s32.totalorder %s17, 1
    %p61 = por %p59, %p60
    %p63 = scmp.ne.s32.totalorder %s48, %s62
    %p64 = scmp.eq.s32.totalorder %s17, 0
    %p65 = por %p63, %p64
    %s67 = sadd.s32 %s66, 1
    %p70 = scmp.eq.s32.totalorder %s11, 1
    %p71 = scmp.ne.s32.totalorder %s66, %s68
    %p72 = scmp.eq.s32.totalorder %s11, 0
    %p73 = por %p71, %p72
    %p74 = scmp.ne.s32.totalorder %s66, %s68
    %p75 = scmp.eq.s32.totalorder %s16, 1
    %p76 = por %p74, %p75
    %p77 = scmp.ne.s32.totalorder %s68, %s69
    %p78 = scmp.eq.s32.totalorder %s16, 0
    %p79 = por %p77, %p78
    %p80 = scmp.ne.s32.totalorder %s68, %s69
    %p81 = scmp.eq.s32.totalorder %s17, 1
    %p82 = por %p80, %p81
    %p84 = scmp.ne.s32.totalorder %s69, %s83
    %p85 = scmp.eq.s32.totalorder %s17, 0
    %p86 = por %p84, %p85
    %s88 = sadd.s32 %s87, 1
    %p91 = scmp.eq.s32.totalorder %s11, 1
    %p92 = scmp.ne.s32.totalorder %s87, %s89
    %p93 = scmp.eq.s32.totalorder %s11, 0
    %p94 = por %p92, %p93
    %p95 = scmp.ne.s32.totalorder %s87, %s89
    %p96 = scmp.eq.s32.totalorder %s16, 1
    %p97 = por %p95, %p96
    %p98 = scmp.ne.s32.totalorder %s89, %s90
    %p99 = scmp.eq.s32.totalorder %s16, 0
    %p100 = por %p98, %p99
    %p101 = scmp.ne.s32.totalorder %s89, %s90
    %p102 = scmp.eq.s32.totalorder %s17, 1
    %p103 = por %p101, %p102
    %p105 = scmp.ne.s32.totalorder %s90, %s104
    %p106 = scmp.eq.s32.totalorder %s17, 0
    %p107 = por %p105, %p106
    %s109 = sadd.s32 %s108, 1
    %p112 = scmp.eq.s32.totalorder %s11, 1
    %p113 = scmp.ne.s32.totalorder %s108, %s110
    %p114 = scmp.eq.s32.totalorder %s11, 0
    %p115 = por %p113, %p114
    %p116 = scmp.ne.s32.totalorder %s108, %s110
    %p117 = scmp.eq.s32.totalorder %s16, 1
    %p118 = por %p116, %p117
    %p119 = scmp.ne.s32.totalorder %s110, %s111
    %p120 = scmp.eq.s32.totalorder %s16, 0
    %p121 = por %p119, %p120
    %p122 = scmp.ne.s32.totalorder %s110, %s111
    %p123 = scmp.eq.s32.totalorder %s17, 1
    %p124 = por %p122, %p123
    %p126 = scmp.ne.s32.totalorder %s111, %s125
    %p127 = scmp.eq.s32.totalorder %s17, 0
    %p128 = por %p126, %p127
    %s129 = ssub.s32 %s11, %s18
    %p130 = scmp.eq.s32.totalorder %s129, 0
    %s132 = sadd.s32 %s131, 1
    %s133 = scalar_select %p130, %s131, %s132
    %p136 = pneg %p130
    %p137 = scmp.eq.s32.totalorder %s11, 1
    %p138 = por %p136, %p137
    %p139 = scmp.ne.s32.totalorder %s131, %s134
    %p140 = scmp.eq.s32.totalorder %s11, 0
    %p141 = por %p139, %p140
    %p142 = scmp.ne.s32.totalorder %s131, %s134
    %p143 = scmp.eq.s32.totalorder %s16, 1
    %p144 = por %p142, %p143
    %p145 = scmp.ne.s32.totalorder %s134, %s135
    %p146 = scmp.eq.s32.totalorder %s16, 0
    %p147 = por %p145, %p146
    %p148 = scmp.ne.s32.totalorder %s134, %s135
    %p149 = scmp.eq.s32.totalorder %s17, 1
    %p150 = por %p148, %p149
    %p152 = scmp.ne.s32.totalorder %s135, %s151
    %p153 = scmp.eq.s32.totalorder %s17, 0
    %p154 = por %p152, %p153
    %p155 = scmp.le.s32.totalorder 1, %s11
    %p156 = scmp.lt.s32.totalorder %s11, 3
    %p157 = pnand %p155, %p156
    %p158 = pneg %p157
    // Predicated region
    $region9: #{spatial_bottleneck_block.7} parent=5 // pred_check
      _
    $region10: #{spatial_bottleneck_block.7} parent=5 // pred_check_branch
      %160 = sbr.rel (%p157) target = $region12
    $region11: #{spatial_bottleneck_block.7} parent=5 // pred_region
      %s161 = ssub.s32 %s11, 1
      // Predicated region
      $region13: #{spatial_bottleneck_block.7} parent=11 // pred_check
        %p162 = pneg %p58
      $region14: #{spatial_bottleneck_block.7} parent=11 // pred_check_branch
        %164 = sbr.rel (%p162) target = $region16
      $region15: #{spatial_bottleneck_block.7} parent=11 // pred_region
        _
      $region16: #{spatial_bottleneck_block.7} parent=11 // pred_fallthru
        _
      // Predicated region
      $region17: #{spatial_bottleneck_block.7} parent=11 // pred_check
        %p165 = pneg %p79
      $region18: #{spatial_bottleneck_block.7} parent=11 // pred_check_branch
        %167 = sbr.rel (%p165) target = $region20
      $region19: #{spatial_bottleneck_block.7} parent=11 // pred_region
        _
      $region20: #{spatial_bottleneck_block.7} parent=11 // pred_fallthru
        _
      // Predicated region
      $region21: #{spatial_bottleneck_block.7} parent=11 // pred_check
        %p168 = pneg %p100
      $region22: #{spatial_bottleneck_block.7} parent=11 // pred_check_branch
        %170 = sbr.rel (%p168) target = $region24
      $region23: #{spatial_bottleneck_block.7} parent=11 // pred_region
        _
      $region24: #{spatial_bottleneck_block.7} parent=11 // pred_fallthru
        _
      // Predicated region
      $region25: #{spatial_bottleneck_block.7} parent=11 // pred_check
        %p171 = pneg %p121
      $region26: #{spatial_bottleneck_block.7} parent=11 // pred_check_branch
        %173 = sbr.rel (%p171) target = $region28
      $region27: #{spatial_bottleneck_block.7} parent=11 // pred_region
        _
      $region28: #{spatial_bottleneck_block.7} parent=11 // pred_fallthru
        _
    $region12: #{spatial_bottleneck_block.7} parent=5 // pred_fallthru
      _
    %p174 = scmp.lt.s32.totalorder %s11, 2
    // Predicated region
    $region29: #{spatial_bottleneck_block.7} parent=5 // pred_check
      %p175 = pneg %p174
    $region30: #{spatial_bottleneck_block.7} parent=5 // pred_check_branch
      %177 = sbr.rel (%p175) target = $region32
    $region31: #{spatial_bottleneck_block.7} parent=5 // pred_region
      // Predicated region
      $region33: #{spatial_bottleneck_block.7} parent=31 // pred_check
        %p178 = pneg %p31
      $region34: #{spatial_bottleneck_block.7} parent=31 // pred_check_branch
        %180 = sbr.rel (%p178) target = $region36
      $region35: #{spatial_bottleneck_block.7} parent=31 // pred_region
        %s181 = smul.u32 25, %s11
        %p182 = scmp.lt.s32.totalorder %s181, 49
        %s183 = scalar_select %p182, %s181, 49
        %s184 = smul.addr %s183, 8
        %s185 = scalar_lea.vmem %s0, %s184
        %s186 = smul.u32 25, %s11
      $region36: #{spatial_bottleneck_block.7} parent=31 // pred_fallthru
        _
    $region32: #{spatial_bottleneck_block.7} parent=5 // pred_fallthru
      _
    %p187 = scmp.le.s32.totalorder 1, %s11
    %p188 = scmp.lt.s32.totalorder %s11, 3
    %p189 = pnand %p187, %p188
    %p190 = pneg %p189
    // Predicated region
    $region37: #{spatial_bottleneck_block.7} parent=5 // pred_check
      _
    $region38: #{spatial_bottleneck_block.7} parent=5 // pred_check_branch
      %192 = sbr.rel (%p189) target = $region40
    $region39: #{spatial_bottleneck_block.7} parent=5 // pred_region
      %s193 = ssub.s32 %s11, 1
      %s194 = smul.u32 25, %s16
      %p195 = scmp.lt.s32.totalorder %s194, 49
      %s196 = scalar_select %p195, %s194, 49
      %s197 = smul.addr %s196, 8
      %s198 = scalar_lea.vmem %s0, %s197
      %p199 = pneg %p37
      %p200 = pneg %p34
      %p201 = pneg %p58
      %p202 = pneg %p55
      %p203 = pneg %p79
      %p204 = pneg %p76
      %p205 = pneg %p100
      %p206 = pneg %p97
      %p207 = pneg %p121
      %p208 = pneg %p118
      %p209 = pneg %p147
      %p210 = pneg %p144
      %s211 = smul.u32 25, %s16
      %p212 = scmp.lt.s32.totalorder %s211, 49
      %s213 = scalar_select %p212, %s211, 49
      %s214 = smul.addr %s213, 8
      %s215 = scalar_lea.vmem %s5, %s214
      %s216 = smul.u32 25, %s16
      %p217 = scmp.lt.s32.totalorder %s216, 49
      %s218 = scalar_select %p217, %s216, 49
      %s219 = smul.addr %s218, 8
      %s220 = scalar_lea.vmem %s0, %s219
      %s221 = smul.u32 25, %s16
      %s222 = smul.u32 25, %s16
      %p223 = scmp.lt.s32.totalorder %s222, 49
      %s224 = scalar_select %p223, %s222, 49
      %s225 = smul.addr %s224, 8
      %s226 = scalar_lea.vmem %s5, %s225
      %s227 = smul.u32 25, %s16
      %v228 = vld [vmem:[%s220] sm:$0xff]
      %v229 = vld [vmem:[%s220 + $0x8] sm:$0xff]
      %v230 = vld [vmem:[%s220 + $0x10] sm:$0xff]
      %v231 = vld [vmem:[%s220 + $0x18] sm:$0xff]
      %v232 = vld [vmem:[%s220 + $0x20] sm:$0xff]
      %v233 = vld [vmem:[%s220 + $0x28] sm:$0xff]
      %v234 = vld [vmem:[%s220 + $0x30] sm:$0xff]
      %v235 = vld [vmem:[%s220 + $0x38] sm:$0xff]
      %v236 = vld [vmem:[%s220 + $0x40] sm:$0xff]
      %v237 = vld [vmem:[%s220 + $0x48] sm:$0xff]
      %v238 = vld [vmem:[%s220 + $0x50] sm:$0xff]
      %v239 = vld [vmem:[%s220 + $0x58] sm:$0xff]
      %v240 = vld [vmem:[%s220 + $0x60] sm:$0xff]
      %v241 = vld [vmem:[%s220 + $0x68] sm:$0xff]
      %v242 = vld [vmem:[%s220 + $0x70] sm:$0xff]
      %v243 = vld [vmem:[%s220 + $0x78] sm:$0xff]
      %v244 = vld [vmem:[%s220 + $0x80] sm:$0xff]
      %v245 = vld [vmem:[%s220 + $0x88] sm:$0xff]
      %v246 = vld [vmem:[%s220 + $0x90] sm:$0xff]
      %v247 = vld [vmem:[%s220 + $0x98] sm:$0xff]
      %v248 = vld [vmem:[%s220 + $0xa0] sm:$0xff]
      %v249 = vld [vmem:[%s220 + $0xa8] sm:$0xff]
      %v250 = vld [vmem:[%s220 + $0xb0] sm:$0xff]
      %v251 = vld [vmem:[%s220 + $0xb8] sm:$0xff]
      %v252 = vld [vmem:[%s220 + $0xc0] sm:$0xff]
      %v253 = vld [vmem:[%s3] sm:$0x1]
      %v255 = vlaneseq
      %v256 = vshrl.u32 %v255, 7
      %v257 = vsub.s32 0, %v256
      %v258 = vrot.slane %v253, %v257
      %v260 = vmul.f32 %v228, %v258
      %v261 = vmul.f32 %v229, %v258
      %v262 = vmul.f32 %v230, %v258
      %v263 = vmul.f32 %v231, %v258
      %v264 = vmul.f32 %v232, %v258
      %v265 = vmul.f32 %v233, %v258
      %v266 = vmul.f32 %v234, %v258
      %v267 = vmul.f32 %v235, %v258
      %v268 = vmul.f32 %v236, %v258
      %v269 = vmul.f32 %v237, %v258
      %v270 = vmul.f32 %v238, %v258
      %v271 = vmul.f32 %v239, %v258
      %v272 = vmul.f32 %v240, %v258
      %v273 = vmul.f32 %v241, %v258
      %v274 = vmul.f32 %v242, %v258
      %v275 = vmul.f32 %v243, %v258
      %v276 = vmul.f32 %v244, %v258
      %v277 = vmul.f32 %v245, %v258
      %v278 = vmul.f32 %v246, %v258
      %v279 = vmul.f32 %v247, %v258
      %v280 = vmul.f32 %v248, %v258
      %v281 = vmul.f32 %v249, %v258
      %v282 = vmul.f32 %v250, %v258
      %v283 = vmul.f32 %v251, %v258
      %v284 = vmul.f32 %v252, %v258
      %v285 = vld [vmem:[%s4] sm:$0x1]
      %v287 = vlaneseq
      %v288 = vshrl.u32 %v287, 7
      %v289 = vsub.s32 0, %v288
      %v290 = vrot.slane %v285, %v289
      %v292 = vadd.f32 %v260, %v290
      %v293 = vadd.f32 %v261, %v290
      %v294 = vadd.f32 %v262, %v290
      %v295 = vadd.f32 %v263, %v290
      %v296 = vadd.f32 %v264, %v290
      %v297 = vadd.f32 %v265, %v290
      %v298 = vadd.f32 %v266, %v290
      %v299 = vadd.f32 %v267, %v290
      %v300 = vadd.f32 %v268, %v290
      %v301 = vadd.f32 %v269, %v290
      %v302 = vadd.f32 %v270, %v290
      %v303 = vadd.f32 %v271, %v290
      %v304 = vadd.f32 %v272, %v290
      %v305 = vadd.f32 %v273, %v290
      %v306 = vadd.f32 %v274, %v290
      %v307 = vadd.f32 %v275, %v290
      %v308 = vadd.f32 %v276, %v290
      %v309 = vadd.f32 %v277, %v290
      %v310 = vadd.f32 %v278, %v290
      %v311 = vadd.f32 %v279, %v290
      %v312 = vadd.f32 %v280, %v290
      %v313 = vadd.f32 %v281, %v290
      %v314 = vadd.f32 %v282, %v290
      %v315 = vadd.f32 %v283, %v290
      %v316 = vadd.f32 %v284, %v290
      %v317 = vmax.f32 %v292, 0.0
      %v318 = vmax.f32 %v293, 0.0
      %v319 = vmax.f32 %v294, 0.0
      %v320 = vmax.f32 %v295, 0.0
      %v321 = vmax.f32 %v296, 0.0
      %v322 = vmax.f32 %v297, 0.0
      %v323 = vmax.f32 %v298, 0.0
      %v324 = vmax.f32 %v299, 0.0
      %v325 = vmax.f32 %v300, 0.0
      %v326 = vmax.f32 %v301, 0.0
      %v327 = vmax.f32 %v302, 0.0
      %v328 = vmax.f32 %v303, 0.0
      %v329 = vmax.f32 %v304, 0.0
      %v330 = vmax.f32 %v305, 0.0
      %v331 = vmax.f32 %v306, 0.0
      %v332 = vmax.f32 %v307, 0.0
      %v333 = vmax.f32 %v308, 0.0
      %v334 = vmax.f32 %v309, 0.0
      %v335 = vmax.f32 %v310, 0.0
      %v336 = vmax.f32 %v311, 0.0
      %v337 = vmax.f32 %v312, 0.0
      %v338 = vmax.f32 %v313, 0.0
      %v339 = vmax.f32 %v314, 0.0
      %v340 = vmax.f32 %v315, 0.0
      %v341 = vmax.f32 %v316, 0.0
      %v342 = vld [vmem:[%s1] sm:$0xff]
      %v343 = vld [vmem:[%s1 + $0x8] sm:$0xff]
      %v344 = vld [vmem:[%s2] sm:$0x1]
      %v346 = vlaneseq
      %v347 = vshrl.u32 %v346, 7
      %v348 = vsub.s32 0, %v347
      %v349 = vrot.slane %v344, %v348
      %vm351 = vcmask 130048
      %v353 = vsel %vm351, %v317, 0
      %v356 = vsel %vm351, %v318, 0
      %v359 = vsel %vm351, %v319, 0
      %v362 = vsel %vm351, %v320, 0
      %v365 = vsel %vm351, %v321, 0
      %v368 = vsel %vm351, %v322, 0
      %v371 = vsel %vm351, %v323, 0
      %v374 = vsel %vm351, %v324, 0
      %v377 = vsel %vm351, %v325, 0
      %v380 = vsel %vm351, %v326, 0
      %v383 = vsel %vm351, %v327, 0
      %v386 = vsel %vm351, %v328, 0
      %v389 = vsel %vm351, %v329, 0
      %v392 = vsel %vm351, %v330, 0
      %v395 = vsel %vm351, %v331, 0
      %v398 = vsel %vm351, %v332, 0
      %v401 = vsel %vm351, %v333, 0
      %v404 = vsel %vm351, %v334, 0
      %v407 = vsel %vm351, %v335, 0
      %v410 = vsel %vm351, %v336, 0
      %v413 = vsel %vm351, %v337, 0
      %v416 = vsel %vm351, %v338, 0
      %v419 = vsel %vm351, %v339, 0
      %v422 = vsel %vm351, %v340, 0
      %v425 = vsel %vm351, %v341, 0
      %427 = vmatprep.subr.mxu0 0.0
      %428 = vmatpush1.msra.mxu0 0.0
      %429 = vmatprep.subr.mxu0 0.0
      %430 = vmatpush1.msra.mxu0 0.0
      %431 = vmatprep.subr.mxu0 0.0
      %432 = vmatpush1.msra.mxu0 0.0
      %433 = vmatprep.subr.mxu0 0.0
      %434 = vmatpush1.msra.mxu0 0.0
      %435 = vmatprep.subr.mxu0 0.0
      %436 = vmatpush1.msra.mxu0 0.0
      %437 = vmatprep.subr.mxu0 0.0
      %438 = vmatpush1.msra.mxu0 0.0
      %439 = vmatprep.subr.mxu0 0.0
      %440 = vmatpush1.msra.mxu0 0.0
      %441 = vmatprep.subr.mxu0 0.0
      %442 = vmatpush1.msra.mxu0 0.0
      %443 = vmatprep.subr.mxu0 0.0
      %444 = vmatpush1.msra.mxu0 0.0
      %445 = vmatprep.subr.mxu0 0.0
      %446 = vmatpush1.msra.mxu0 0.0
      %447 = vmatprep.subr.mxu0 0.0
      %448 = vmatpush1.msra.mxu0 0.0
      %449 = vmatprep.subr.mxu0 0.0
      %450 = vmatpush1.msra.mxu0 0.0
      %451 = vmatprep.subr.mxu0 0.0
      %452 = vmatpush1.msra.mxu0 0.0
      %453 = vmatprep.subr.mxu0 0.0
      %454 = vmatpush1.msra.mxu0 0.0
      %455 = vmatprep.subr.mxu0 0.0
      %456 = vmatpush1.msra.mxu0 %v343
      %457 = vmatprep.subr.mxu0 0.0
      %458 = vmatpush1.msra.mxu0 %v342
      %459 = vmatprep.subr.mxu0 0.0
      %460 = vmatpush2.msra.mxu0 0.0
      %461 = vmatprep.subr.mxu0 0.0
      %462 = vmatpush2.msra.mxu0 0.0
      %463 = vmatprep.subr.mxu0 0.0
      %464 = vmatpush2.msra.mxu0 0.0
      %465 = vmatprep.subr.mxu0 0.0
      %466 = vmatpush2.msra.mxu0 0.0
      %467 = vmatprep.subr.mxu0 0.0
      %468 = vmatpush2.msra.mxu0 0.0
      %469 = vmatprep.subr.mxu0 0.0
      %470 = vmatpush2.msra.mxu0 0.0
      %471 = vmatprep.subr.mxu0 0.0
      %472 = vmatpush2.msra.mxu0 0.0
      %473 = vmatprep.subr.mxu0 0.0
      %474 = vmatpush2.msra.mxu0 0.0
      %475 = vmatprep.subr.mxu0 0.0
      %476 = vmatpush2.msra.mxu0 0.0
      %477 = vmatprep.subr.mxu0 0.0
      %478 = vmatpush2.msra.mxu0 0.0
      %479 = vmatprep.subr.mxu0 0.0
      %480 = vmatpush2.msra.mxu0 0.0
      %481 = vmatprep.subr.mxu0 0.0
      %482 = vmatpush2.msra.mxu0 0.0
      %483 = vmatprep.subr.mxu0 0.0
      %484 = vmatpush2.msra.mxu0 0.0
      %485 = vmatprep.subr.mxu0 0.0
      %486 = vmatpush2.msra.mxu0 0.0
      %487 = vmatprep.subr.mxu0 0.0
      %488 = vmatpush2.msra.mxu0 0.0
      %489 = vmatprep.subr.mxu0 0.0
      %490 = vmatpush2.msra.mxu0 0.0
      %491 = vmatprep.mubr.f32.mxu0 0.0
      %492 = vmatmul.mubr.f32.gmra.mxu0 %v353
      %v493 = vpop.f32.mrf.mxu0
      %v494 = vadd.f32 %v349, %v493
      %v495 = vpop.f32.mrf.mxu0
      %496 = vmatprep.mubr.f32.mxu0 0.0
      %497 = vmatmul.mubr.f32.gmra.mxu0 %v356
      %v498 = vpop.f32.mrf.mxu0
      %v499 = vadd.f32 %v349, %v498
      %v500 = vpop.f32.mrf.mxu0
      %501 = vmatprep.mubr.f32.mxu0 0.0
      %502 = vmatmul.mubr.f32.gmra.mxu0 %v359
      %v503 = vpop.f32.mrf.mxu0
      %v504 = vadd.f32 %v349, %v503
      %v505 = vpop.f32.mrf.mxu0
      %506 = vmatprep.mubr.f32.mxu0 0.0
      %507 = vmatmul.mubr.f32.gmra.mxu0 %v362
      %v508 = vpop.f32.mrf.mxu0
      %v509 = vadd.f32 %v349, %v508
      %v510 = vpop.f32.mrf.mxu0
      %511 = vmatprep.mubr.f32.mxu0 0.0
      %512 = vmatmul.mubr.f32.gmra.mxu0 %v365
      %v513 = vpop.f32.mrf.mxu0
      %v514 = vadd.f32 %v349, %v513
      %v515 = vpop.f32.mrf.mxu0
      %516 = vmatprep.mubr.f32.mxu0 0.0
      %517 = vmatmul.mubr.f32.gmra.mxu0 %v368
      %v518 = vpop.f32.mrf.mxu0
      %v519 = vadd.f32 %v349, %v518
      %v520 = vpop.f32.mrf.mxu0
      %521 = vmatprep.mubr.f32.mxu0 0.0
      %522 = vmatmul.mubr.f32.gmra.mxu0 %v371
      %v523 = vpop.f32.mrf.mxu0
      %v524 = vadd.f32 %v349, %v523
      %v525 = vpop.f32.mrf.mxu0
      %526 = vmatprep.mubr.f32.mxu0 0.0
      %527 = vmatmul.mubr.f32.gmra.mxu0 %v374
      %v528 = vpop.f32.mrf.mxu0
      %v529 = vadd.f32 %v349, %v528
      %v530 = vpop.f32.mrf.mxu0
      %531 = vmatprep.mubr.f32.mxu0 0.0
      %532 = vmatmul.mubr.f32.gmra.mxu0 %v377
      %v533 = vpop.f32.mrf.mxu0
      %v534 = vadd.f32 %v349, %v533
      %v535 = vpop.f32.mrf.mxu0
      %536 = vmatprep.mubr.f32.mxu0 0.0
      %537 = vmatmul.mubr.f32.gmra.mxu0 %v380
      %v538 = vpop.f32.mrf.mxu0
      %v539 = vadd.f32 %v349, %v538
      %v540 = vpop.f32.mrf.mxu0
      %541 = vmatprep.mubr.f32.mxu0 0.0
      %542 = vmatmul.mubr.f32.gmra.mxu0 %v383
      %v543 = vpop.f32.mrf.mxu0
      %v544 = vadd.f32 %v349, %v543
      %v545 = vpop.f32.mrf.mxu0
      %546 = vmatprep.mubr.f32.mxu0 0.0
      %547 = vmatmul.mubr.f32.gmra.mxu0 %v386
      %v548 = vpop.f32.mrf.mxu0
      %v549 = vadd.f32 %v349, %v548
      %v550 = vpop.f32.mrf.mxu0
      %551 = vmatprep.mubr.f32.mxu0 0.0
      %552 = vmatmul.mubr.f32.gmra.mxu0 %v389
      %v553 = vpop.f32.mrf.mxu0
      %v554 = vadd.f32 %v349, %v553
      %v555 = vpop.f32.mrf.mxu0
      %556 = vmatprep.mubr.f32.mxu0 0.0
      %557 = vmatmul.mubr.f32.gmra.mxu0 %v392
      %v558 = vpop.f32.mrf.mxu0
      %v559 = vadd.f32 %v349, %v558
      %v560 = vpop.f32.mrf.mxu0
      %561 = vmatprep.mubr.f32.mxu0 0.0
      %562 = vmatmul.mubr.f32.gmra.mxu0 %v395
      %v563 = vpop.f32.mrf.mxu0
      %v564 = vadd.f32 %v349, %v563
      %v565 = vpop.f32.mrf.mxu0
      %566 = vmatprep.mubr.f32.mxu0 0.0
      %567 = vmatmul.mubr.f32.gmra.mxu0 %v398
      %v568 = vpop.f32.mrf.mxu0
      %v569 = vadd.f32 %v349, %v568
      %v570 = vpop.f32.mrf.mxu0
      %571 = vmatprep.mubr.f32.mxu0 0.0
      %572 = vmatmul.mubr.f32.gmra.mxu0 %v401
      %v573 = vpop.f32.mrf.mxu0
      %v574 = vadd.f32 %v349, %v573
      %v575 = vpop.f32.mrf.mxu0
      %576 = vmatprep.mubr.f32.mxu0 0.0
      %577 = vmatmul.mubr.f32.gmra.mxu0 %v404
      %v578 = vpop.f32.mrf.mxu0
      %v579 = vadd.f32 %v349, %v578
      %v580 = vpop.f32.mrf.mxu0
      %581 = vmatprep.mubr.f32.mxu0 0.0
      %582 = vmatmul.mubr.f32.gmra.mxu0 %v407
      %v583 = vpop.f32.mrf.mxu0
      %v584 = vadd.f32 %v349, %v583
      %v585 = vpop.f32.mrf.mxu0
      %586 = vmatprep.mubr.f32.mxu0 0.0
      %587 = vmatmul.mubr.f32.gmra.mxu0 %v410
      %v588 = vpop.f32.mrf.mxu0
      %v589 = vadd.f32 %v349, %v588
      %v590 = vpop.f32.mrf.mxu0
      %591 = vmatprep.mubr.f32.mxu0 0.0
      %592 = vmatmul.mubr.f32.gmra.mxu0 %v413
      %v593 = vpop.f32.mrf.mxu0
      %v594 = vadd.f32 %v349, %v593
      %v595 = vpop.f32.mrf.mxu0
      %596 = vmatprep.mubr.f32.mxu0 0.0
      %597 = vmatmul.mubr.f32.gmra.mxu0 %v416
      %v598 = vpop.f32.mrf.mxu0
      %v599 = vadd.f32 %v349, %v598
      %v600 = vpop.f32.mrf.mxu0
      %601 = vmatprep.mubr.f32.mxu0 0.0
      %602 = vmatmul.mubr.f32.gmra.mxu0 %v419
      %v603 = vpop.f32.mrf.mxu0
      %v604 = vadd.f32 %v349, %v603
      %v605 = vpop.f32.mrf.mxu0
      %606 = vmatprep.mubr.f32.mxu0 0.0
      %607 = vmatmul.mubr.f32.gmra.mxu0 %v422
      %v608 = vpop.f32.mrf.mxu0
      %v609 = vadd.f32 %v349, %v608
      %v610 = vpop.f32.mrf.mxu0
      %611 = vmatprep.mubr.f32.mxu0 0.0
      %612 = vmatmul.mubr.f32.gmra.mxu0 %v425
      %v613 = vpop.f32.mrf.mxu0
      %v614 = vadd.f32 %v349, %v613
      %v615 = vpop.f32.mrf.mxu0
      %616 = vdwg.mxu0
      %vm617 = vcmask 392192
      %618 = vst.msk [vmem:[%s226] sm:$0xff] %vm617, %v494
      %619 = vst.msk [vmem:[%s226 + $0x8] sm:$0xff] %vm617, %v499
      %620 = vst.msk [vmem:[%s226 + $0x10] sm:$0xff] %vm617, %v504
      %621 = vst.msk [vmem:[%s226 + $0x18] sm:$0xff] %vm617, %v509
      %622 = vst.msk [vmem:[%s226 + $0x20] sm:$0xff] %vm617, %v514
      %623 = vst.msk [vmem:[%s226 + $0x28] sm:$0xff] %vm617, %v519
      %624 = vst.msk [vmem:[%s226 + $0x30] sm:$0xff] %vm617, %v524
      %625 = vst.msk [vmem:[%s226 + $0x38] sm:$0xff] %vm617, %v529
      %626 = vst.msk [vmem:[%s226 + $0x40] sm:$0xff] %vm617, %v534
      %627 = vst.msk [vmem:[%s226 + $0x48] sm:$0xff] %vm617, %v539
      %628 = vst.msk [vmem:[%s226 + $0x50] sm:$0xff] %vm617, %v544
      %629 = vst.msk [vmem:[%s226 + $0x58] sm:$0xff] %vm617, %v549
      %630 = vst.msk [vmem:[%s226 + $0x60] sm:$0xff] %vm617, %v554
      %631 = vst.msk [vmem:[%s226 + $0x68] sm:$0xff] %vm617, %v559
      %632 = vst.msk [vmem:[%s226 + $0x70] sm:$0xff] %vm617, %v564
      %633 = vst.msk [vmem:[%s226 + $0x78] sm:$0xff] %vm617, %v569
      %634 = vst.msk [vmem:[%s226 + $0x80] sm:$0xff] %vm617, %v574
      %635 = vst.msk [vmem:[%s226 + $0x88] sm:$0xff] %vm617, %v579
      %636 = vst.msk [vmem:[%s226 + $0x90] sm:$0xff] %vm617, %v584
      %637 = vst.msk [vmem:[%s226 + $0x98] sm:$0xff] %vm617, %v589
      %638 = vst.msk [vmem:[%s226 + $0xa0] sm:$0xff] %vm617, %v594
      %639 = vst.msk [vmem:[%s226 + $0xa8] sm:$0xff] %vm617, %v599
      %640 = vst.msk [vmem:[%s226 + $0xb0] sm:$0xff] %vm617, %v604
      %641 = vst.msk [vmem:[%s226 + $0xb8] sm:$0xff] %vm617, %v609
      %642 = vst.msk [vmem:[%s226 + $0xc0] sm:$0xff] %vm617, %v614
      %s643 = smul.u32 25, %s16
      %p644 = scmp.lt.s32.totalorder %s643, 49
      %s645 = scalar_select %p644, %s643, 49
      %s646 = smul.addr %s645, 8
      %s647 = scalar_lea.vmem %s5, %s646
      // Predicated region
      $region41: #{spatial_bottleneck_block.7} parent=39 // pred_check
        %p648 = pneg %p144
      $region42: #{spatial_bottleneck_block.7} parent=39 // pred_check_branch
        %650 = sbr.rel (%p648) target = $region44
      $region43: #{spatial_bottleneck_block.7} parent=39 // pred_region
        %s651 = smul.u32 25, %s16
      $region44: #{spatial_bottleneck_block.7} parent=39 // pred_fallthru
        _
    $region40: #{spatial_bottleneck_block.7} parent=5 // pred_fallthru
      _
    %p652 = scmp.le.s32.totalorder 2, %s11
    // Predicated region
    $region45: #{spatial_bottleneck_block.7} parent=5 // pred_check
      %p653 = pneg %p652
    $region46: #{spatial_bottleneck_block.7} parent=5 // pred_check_branch
      %655 = sbr.rel (%p653) target = $region48
    $region47: #{spatial_bottleneck_block.7} parent=5 // pred_region
      %s656 = ssub.s32 %s11, 2
      // Predicated region
      $region49: #{spatial_bottleneck_block.7} parent=47 // pred_check
        %p657 = pneg %p150
      $region50: #{spatial_bottleneck_block.7} parent=47 // pred_check_branch
        %659 = sbr.rel (%p657) target = $region52
      $region51: #{spatial_bottleneck_block.7} parent=47 // pred_region
        %s660 = smul.u32 25, %s17
        %p661 = scmp.lt.s32.totalorder %s660, 49
        %s662 = scalar_select %p661, %s660, 49
        %s663 = smul.addr %s662, 8
        %s664 = scalar_lea.vmem %s5, %s663
      $region52: #{spatial_bottleneck_block.7} parent=47 // pred_fallthru
        _
    $region48: #{spatial_bottleneck_block.7} parent=5 // pred_fallthru
      _
  $region6: #{spatial_bottleneck_block.7} parent=0 // loop_footer
    %s15 = sadd.s32 1, %s11
  $region7: #{spatial_bottleneck_block.7} parent=0 // loop_footer_branch
    %10 = sbr.rel target = $region3
  $region8: #{spatial_bottleneck_block.7} parent=0 // loop_exit
    _

// kernel: spatial_bottleneck_block.6
$region0: #{spatial_bottleneck_block.6}
  #allocation0 [shape = 'u32[]', space=smem, size = 0x4, offset = 0x4, fixed_abs, tag = 'smem constant byte address 0x4 - core index']
  #allocation1 [shape = 'u32[144,128]{1,0:T(1,128)}', space=vmem, size = 0x12000, scoped, tag = 'internal scratch']
  %s0 = inlined_call_operand.vmem [shape: f32[400,32], index: 0, kind: input, shape index: {}]
  %s1 = inlined_call_operand.vmem [shape: f32[32,16], index: 1, kind: input, shape index: {}]
  %s2 = inlined_call_operand.vmem [shape: f32[1,16], index: 2, kind: input, shape index: {}]
  %s3 = inlined_call_operand.vmem [shape: f32[400,16], index: 3, kind: output, shape index: {0}]
  %s4 = inlined_call_operand.vmem [shape: f32[1,16], index: 4, kind: output, shape index: {1}]
  %s5 = inlined_call_operand.vmem [shape: f32[1,16], index: 5, kind: output, shape index: {2}]
  %6 = xla_tuple %s3, %s4, %s5
  %s7 = sld [smem:[#allocation0]]
  $region65: #{spatial_bottleneck_block.6} parent=0
    _
  %s9 = ssub.s32 1, %s7
  %s10 = scalar_select 0, %s9, %s7
  loop: start=0, step=1, limit=4
  $region2: #{spatial_bottleneck_block.6} parent=0 // loop_pre_header
    _
  $region3: #{spatial_bottleneck_block.6} parent=0 // loop_header
    %s12 = sphi 0, %s16
    %p13 = scmp.ge.s32.totalorder %s12, 4
    %s22 = sphi 0, %s24
    %s25 = sphi 0, %s22
    %s26 = sphi 0, %s25
    %s42 = sphi 0, %s26
    %s46 = sphi 0, %s46
    %s48 = sphi 0, %s46
    %s49 = sphi 0, %s48
    %s63 = sphi 0, %s49
    %s67 = sphi 0, %s67
    %s69 = sphi 0, %s67
    %s70 = sphi 0, %s69
    %s84 = sphi 0, %s70
    %s90 = sphi 0, %s92
    %s93 = sphi 0, %s90
    %s94 = sphi 0, %s93
    %s110 = sphi 0, %s94
    %s114 = sphi 0, %s114
    %s116 = sphi 0, %s114
    %s117 = sphi 0, %s116
    %s131 = sphi 0, %s117
    %s135 = sphi 0, %s135
    %s137 = sphi 0, %s135
    %s138 = sphi 0, %s137
    %s152 = sphi 0, %s138
  $region4: #{spatial_bottleneck_block.6} parent=0 // loop_header_branch
    %15 = sbr.rel (%p13) target = $region8
  $region5: #{spatial_bottleneck_block.6} parent=0 // loop_body
    %s17 = ssub.s32 %s12, 1
    %s18 = ssub.s32 %s12, 2
    %s19 = sadd.s32 %s12, 1
    %s20 = ssub.s32 %s12, %s19
    %p21 = scmp.eq.s32.totalorder %s20, 0
    %s23 = sadd.s32 %s22, 1
    %s24 = scalar_select %p21, %s22, %s23
    %p27 = pneg %p21
    %p28 = scmp.eq.s32.totalorder %s12, 1
    %p29 = por %p27, %p28
    %p30 = scmp.ne.s32.totalorder %s22, %s25
    %p31 = scmp.eq.s32.totalorder %s12, 0
    %p32 = por %p30, %p31
    %p33 = scmp.ne.s32.totalorder %s22, %s25
    %p34 = scmp.eq.s32.totalorder %s17, 1
    %p35 = por %p33, %p34
    %p36 = scmp.ne.s32.totalorder %s25, %s26
    %p37 = scmp.eq.s32.totalorder %s17, 0
    %p38 = por %p36, %p37
    %p39 = scmp.ne.s32.totalorder %s25, %s26
    %p40 = scmp.eq.s32.totalorder %s18, 1
    %p41 = por %p39, %p40
    %p43 = scmp.ne.s32.totalorder %s26, %s42
    %p44 = scmp.eq.s32.totalorder %s18, 0
    %p45 = por %p43, %p44
    %s47 = sadd.s32 %s46, 1
    %p50 = scmp.eq.s32.totalorder %s12, 1
    %p51 = scmp.ne.s32.totalorder %s46, %s48
    %p52 = scmp.eq.s32.totalorder %s12, 0
    %p53 = por %p51, %p52
    %p54 = scmp.ne.s32.totalorder %s46, %s48
    %p55 = scmp.eq.s32.totalorder %s17, 1
    %p56 = por %p54, %p55
    %p57 = scmp.ne.s32.totalorder %s48, %s49
    %p58 = scmp.eq.s32.totalorder %s17, 0
    %p59 = por %p57, %p58
    %p60 = scmp.ne.s32.totalorder %s48, %s49
    %p61 = scmp.eq.s32.totalorder %s18, 1
    %p62 = por %p60, %p61
    %p64 = scmp.ne.s32.totalorder %s49, %s63
    %p65 = scmp.eq.s32.totalorder %s18, 0
    %p66 = por %p64, %p65
    %s68 = sadd.s32 %s67, 1
    %p71 = scmp.eq.s32.totalorder %s12, 1
    %p72 = scmp.ne.s32.totalorder %s67, %s69
    %p73 = scmp.eq.s32.totalorder %s12, 0
    %p74 = por %p72, %p73
    %p75 = scmp.ne.s32.totalorder %s67, %s69
    %p76 = scmp.eq.s32.totalorder %s17, 1
    %p77 = por %p75, %p76
    %p78 = scmp.ne.s32.totalorder %s69, %s70
    %p79 = scmp.eq.s32.totalorder %s17, 0
    %p80 = por %p78, %p79
    %p81 = scmp.ne.s32.totalorder %s69, %s70
    %p82 = scmp.eq.s32.totalorder %s18, 1
    %p83 = por %p81, %p82
    %p85 = scmp.ne.s32.totalorder %s70, %s84
    %p86 = scmp.eq.s32.totalorder %s18, 0
    %p87 = por %p85, %p86
    %s88 = ssub.s32 %s12, %s19
    %p89 = scmp.eq.s32.totalorder %s88, 0
    %s91 = sadd.s32 %s90, 1
    %s92 = scalar_select %p89, %s90, %s91
    %p95 = pneg %p89
    %p96 = scmp.eq.s32.totalorder %s12, 1
    %p97 = por %p95, %p96
    %p98 = scmp.ne.s32.totalorder %s90, %s93
    %p99 = scmp.eq.s32.totalorder %s12, 0
    %p100 = por %p98, %p99
    %p101 = scmp.ne.s32.totalorder %s90, %s93
    %p102 = scmp.eq.s32.totalorder %s17, 1
    %p103 = por %p101, %p102
    %p104 = scmp.ne.s32.totalorder %s93, %s94
    %p105 = scmp.eq.s32.totalorder %s17, 0
    %p106 = por %p104, %p105
    %p107 = scmp.ne.s32.totalorder %s93, %s94
    %p108 = scmp.eq.s32.totalorder %s18, 1
    %p109 = por %p107, %p108
    %p111 = scmp.ne.s32.totalorder %s94, %s110
    %p112 = scmp.eq.s32.totalorder %s18, 0
    %p113 = por %p111, %p112
    %s115 = sadd.s32 %s114, 1
    %p118 = scmp.eq.s32.totalorder %s12, 1
    %p119 = scmp.ne.s32.totalorder %s114, %s116
    %p120 = scmp.eq.s32.totalorder %s12, 0
    %p121 = por %p119, %p120
    %p122 = scmp.ne.s32.totalorder %s114, %s116
    %p123 = scmp.eq.s32.totalorder %s17, 1
    %p124 = por %p122, %p123
    %p125 = scmp.ne.s32.totalorder %s116, %s117
    %p126 = scmp.eq.s32.totalorder %s17, 0
    %p127 = por %p125, %p126
    %p128 = scmp.ne.s32.totalorder %s116, %s117
    %p129 = scmp.eq.s32.totalorder %s18, 1
    %p130 = por %p128, %p129
    %p132 = scmp.ne.s32.totalorder %s117, %s131
    %p133 = scmp.eq.s32.totalorder %s18, 0
    %p134 = por %p132, %p133
    %s136 = sadd.s32 %s135, 1
    %p139 = scmp.eq.s32.totalorder %s12, 1
    %p140 = scmp.ne.s32.totalorder %s135, %s137
    %p141 = scmp.eq.s32.totalorder %s12, 0
    %p142 = por %p140, %p141
    %p143 = scmp.ne.s32.totalorder %s135, %s137
    %p144 = scmp.eq.s32.totalorder %s17, 1
    %p145 = por %p143, %p144
    %p146 = scmp.ne.s32.totalorder %s137, %s138
    %p147 = scmp.eq.s32.totalorder %s17, 0
    %p148 = por %p146, %p147
    %p149 = scmp.ne.s32.totalorder %s137, %s138
    %p150 = scmp.eq.s32.totalorder %s18, 1
    %p151 = por %p149, %p150
    %p153 = scmp.ne.s32.totalorder %s138, %s152
    %p154 = scmp.eq.s32.totalorder %s18, 0
    %p155 = por %p153, %p154
    %p156 = scmp.le.s32.totalorder 1, %s12
    %p157 = scmp.lt.s32.totalorder %s12, 3
    %p158 = pnand %p156, %p157
    %p159 = pneg %p158
    // Predicated region
    $region9: #{spatial_bottleneck_block.6} parent=5 // pred_check
      _
    $region10: #{spatial_bottleneck_block.6} parent=5 // pred_check_branch
      %161 = sbr.rel (%p158) target = $region12
    $region11: #{spatial_bottleneck_block.6} parent=5 // pred_region
      %s162 = ssub.s32 %s12, 1
      // Predicated region
      $region13: #{spatial_bottleneck_block.6} parent=11 // pred_check
        %p163 = pneg %p59
      $region14: #{spatial_bottleneck_block.6} parent=11 // pred_check_branch
        %165 = sbr.rel (%p163) target = $region16
      $region15: #{spatial_bottleneck_block.6} parent=11 // pred_region
        _
      $region16: #{spatial_bottleneck_block.6} parent=11 // pred_fallthru
        _
      // Predicated region
      $region17: #{spatial_bottleneck_block.6} parent=11 // pred_check
        %p166 = pneg %p80
      $region18: #{spatial_bottleneck_block.6} parent=11 // pred_check_branch
        %168 = sbr.rel (%p166) target = $region20
      $region19: #{spatial_bottleneck_block.6} parent=11 // pred_region
        _
      $region20: #{spatial_bottleneck_block.6} parent=11 // pred_fallthru
        _
    $region12: #{spatial_bottleneck_block.6} parent=5 // pred_fallthru
      _
    %p169 = scmp.lt.s32.totalorder %s12, 2
    // Predicated region
    $region21: #{spatial_bottleneck_block.6} parent=5 // pred_check
      %p170 = pneg %p169
    $region22: #{spatial_bottleneck_block.6} parent=5 // pred_check_branch
      %172 = sbr.rel (%p170) target = $region24
    $region23: #{spatial_bottleneck_block.6} parent=5 // pred_region
      // Predicated region
      $region25: #{spatial_bottleneck_block.6} parent=23 // pred_check
        %p173 = pneg %p32
      $region26: #{spatial_bottleneck_block.6} parent=23 // pred_check_branch
        %175 = sbr.rel (%p173) target = $region28
      $region27: #{spatial_bottleneck_block.6} parent=23 // pred_region
        %s176 = smul.u32 25, %s12
        %p177 = scmp.lt.s32.totalorder %s176, 49
        %s178 = scalar_select %p177, %s176, 49
        %s179 = smul.addr %s178, 8
        %s180 = scalar_lea.vmem %s0, %s179
        %s181 = smul.u32 25, %s12
      $region28: #{spatial_bottleneck_block.6} parent=23 // pred_fallthru
        _
    $region24: #{spatial_bottleneck_block.6} parent=5 // pred_fallthru
      _
    %p182 = scmp.le.s32.totalorder 1, %s12
    %p183 = scmp.lt.s32.totalorder %s12, 3
    %p184 = pnand %p182, %p183
    %p185 = pneg %p184
    // Predicated region
    $region29: #{spatial_bottleneck_block.6} parent=5 // pred_check
      _
    $region30: #{spatial_bottleneck_block.6} parent=5 // pred_check_branch
      %187 = sbr.rel (%p184) target = $region32
    $region31: #{spatial_bottleneck_block.6} parent=5 // pred_region
      %s188 = ssub.s32 %s12, 1
      %s189 = smul.u32 25, %s17
      %p190 = scmp.lt.s32.totalorder %s189, 49
      %s191 = scalar_select %p190, %s189, 49
      %s192 = smul.addr %s191, 8
      %s193 = scalar_lea.vmem %s0, %s192
      %p194 = pneg %p38
      %p195 = pneg %p35
      %p196 = pneg %p59
      %p197 = pneg %p56
      %p198 = pneg %p80
      %p199 = pneg %p77
      %p200 = pneg %p106
      %p201 = pneg %p103
      %s202 = smul.u32 25, %s17
      %p203 = scmp.lt.s32.totalorder %s202, 49
      %s204 = scalar_select %p203, %s202, 49
      %s205 = smul.addr %s204, 8
      %s206 = scalar_lea.vmem %s3, %s205
      %p207 = pneg %p127
      %p208 = pneg %p124
      %p209 = pneg %p148
      %p210 = pneg %p145
      %s211 = smul.u32 25, %s17
      %p212 = scmp.lt.s32.totalorder %s211, 49
      %s213 = scalar_select %p212, %s211, 49
      %s214 = smul.addr %s213, 8
      %s215 = scalar_lea.vmem %s0, %s214
      %s216 = smul.u32 25, %s17
      %s217 = smul.u32 25, %s17
      %p218 = scmp.lt.s32.totalorder %s217, 49
      %s219 = scalar_select %p218, %s217, 49
      %s220 = smul.addr %s219, 8
      %s221 = scalar_lea.vmem %s3, %s220
      %s222 = smul.u32 25, %s17
      %v223 = vld [vmem:[%s215] sm:$0xff]
      %v224 = vld [vmem:[%s215 + $0x8] sm:$0xff]
      %v225 = vld [vmem:[%s215 + $0x10] sm:$0xff]
      %v226 = vld [vmem:[%s215 + $0x18] sm:$0xff]
      %v227 = vld [vmem:[%s215 + $0x20] sm:$0xff]
      %v228 = vld [vmem:[%s215 + $0x28] sm:$0xff]
      %v229 = vld [vmem:[%s215 + $0x30] sm:$0xff]
      %v230 = vld [vmem:[%s215 + $0x38] sm:$0xff]
      %v231 = vld [vmem:[%s215 + $0x40] sm:$0xff]
      %v232 = vld [vmem:[%s215 + $0x48] sm:$0xff]
      %v233 = vld [vmem:[%s215 + $0x50] sm:$0xff]
      %v234 = vld [vmem:[%s215 + $0x58] sm:$0xff]
      %v235 = vld [vmem:[%s215 + $0x60] sm:$0xff]
      %v236 = vld [vmem:[%s215 + $0x68] sm:$0xff]
      %v237 = vld [vmem:[%s215 + $0x70] sm:$0xff]
      %v238 = vld [vmem:[%s215 + $0x78] sm:$0xff]
      %v239 = vld [vmem:[%s215 + $0x80] sm:$0xff]
      %v240 = vld [vmem:[%s215 + $0x88] sm:$0xff]
      %v241 = vld [vmem:[%s215 + $0x90] sm:$0xff]
      %v242 = vld [vmem:[%s215 + $0x98] sm:$0xff]
      %v243 = vld [vmem:[%s215 + $0xa0] sm:$0xff]
      %v244 = vld [vmem:[%s215 + $0xa8] sm:$0xff]
      %v245 = vld [vmem:[%s215 + $0xb0] sm:$0xff]
      %v246 = vld [vmem:[%s215 + $0xb8] sm:$0xff]
      %v247 = vld [vmem:[%s215 + $0xc0] sm:$0xff]
      %v248 = vld [vmem:[%s1] sm:$0xff]
      %v249 = vld [vmem:[%s1 + $0x8] sm:$0xff]
      %v250 = vld [vmem:[%s1 + $0x10] sm:$0xff]
      %v251 = vld [vmem:[%s1 + $0x18] sm:$0xff]
      %v252 = vld [vmem:[%s2] sm:$0x1]
      %v254 = vlaneseq
      %v255 = vshrl.u32 %v254, 7
      %v256 = vsub.s32 0, %v255
      %v257 = vrot.slane %v252, %v256
      %vm259 = vcmask 261120
      %v261 = vsel %vm259, %v223, 0
      %v264 = vsel %vm259, %v224, 0
      %v267 = vsel %vm259, %v225, 0
      %v270 = vsel %vm259, %v226, 0
      %v273 = vsel %vm259, %v227, 0
      %v276 = vsel %vm259, %v228, 0
      %v279 = vsel %vm259, %v229, 0
      %v282 = vsel %vm259, %v230, 0
      %v285 = vsel %vm259, %v231, 0
      %v288 = vsel %vm259, %v232, 0
      %v291 = vsel %vm259, %v233, 0
      %v294 = vsel %vm259, %v234, 0
      %v297 = vsel %vm259, %v235, 0
      %v300 = vsel %vm259, %v236, 0
      %v303 = vsel %vm259, %v237, 0
      %v306 = vsel %vm259, %v238, 0
      %v309 = vsel %vm259, %v239, 0
      %v312 = vsel %vm259, %v240, 0
      %v315 = vsel %vm259, %v241, 0
      %v318 = vsel %vm259, %v242, 0
      %v321 = vsel %vm259, %v243, 0
      %v324 = vsel %vm259, %v244, 0
      %v327 = vsel %vm259, %v245, 0
      %v330 = vsel %vm259, %v246, 0
      %v333 = vsel %vm259, %v247, 0
      %335 = vmatprep.subr.mxu0 0.0
      %336 = vmatpush1.msra.mxu0 0.0
      %337 = vmatprep.subr.mxu0 0.0
      %338 = vmatpush1.msra.mxu0 0.0
      %339 = vmatprep.subr.mxu0 0.0
      %340 = vmatpush1.msra.mxu0 0.0
      %341 = vmatprep.subr.mxu0 0.0
      %342 = vmatpush1.msra.mxu0 0.0
      %343 = vmatprep.subr.mxu0 0.0
      %344 = vmatpush1.msra.mxu0 0.0
      %345 = vmatprep.subr.mxu0 0.0
      %346 = vmatpush1.msra.mxu0 0.0
      %347 = vmatprep.subr.mxu0 0.0
      %348 = vmatpush1.msra.mxu0 0.0
      %349 = vmatprep.subr.mxu0 0.0
      %350 = vmatpush1.msra.mxu0 0.0
      %351 = vmatprep.subr.mxu0 0.0
      %352 = vmatpush1.msra.mxu0 0.0
      %353 = vmatprep.subr.mxu0 0.0
      %354 = vmatpush1.msra.mxu0 0.0
      %355 = vmatprep.subr.mxu0 0.0
      %356 = vmatpush1.msra.mxu0 0.0
      %357 = vmatprep.subr.mxu0 0.0
      %358 = vmatpush1.msra.mxu0 0.0
      %359 = vmatprep.subr.mxu0 0.0
      %360 = vmatpush1.msra.mxu0 %v251
      %361 = vmatprep.subr.mxu0 0.0
      %362 = vmatpush1.msra.mxu0 %v250
      %363 = vmatprep.subr.mxu0 0.0
      %364 = vmatpush1.msra.mxu0 %v249
      %365 = vmatprep.subr.mxu0 0.0
      %366 = vmatpush1.msra.mxu0 %v248
      %367 = vmatprep.subr.mxu0 0.0
      %368 = vmatpush2.msra.mxu0 0.0
      %369 = vmatprep.subr.mxu0 0.0
      %370 = vmatpush2.msra.mxu0 0.0
      %371 = vmatprep.subr.mxu0 0.0
      %372 = vmatpush2.msra.mxu0 0.0
      %373 = vmatprep.subr.mxu0 0.0
      %374 = vmatpush2.msra.mxu0 0.0
      %375 = vmatprep.subr.mxu0 0.0
      %376 = vmatpush2.msra.mxu0 0.0
      %377 = vmatprep.subr.mxu0 0.0
      %378 = vmatpush2.msra.mxu0 0.0
      %379 = vmatprep.subr.mxu0 0.0
      %380 = vmatpush2.msra.mxu0 0.0
      %381 = vmatprep.subr.mxu0 0.0
      %382 = vmatpush2.msra.mxu0 0.0
      %383 = vmatprep.subr.mxu0 0.0
      %384 = vmatpush2.msra.mxu0 0.0
      %385 = vmatprep.subr.mxu0 0.0
      %386 = vmatpush2.msra.mxu0 0.0
      %387 = vmatprep.subr.mxu0 0.0
      %388 = vmatpush2.msra.mxu0 0.0
      %389 = vmatprep.subr.mxu0 0.0
      %390 = vmatpush2.msra.mxu0 0.0
      %391 = vmatprep.subr.mxu0 0.0
      %392 = vmatpush2.msra.mxu0 0.0
      %393 = vmatprep.subr.mxu0 0.0
      %394 = vmatpush2.msra.mxu0 0.0
      %395 = vmatprep.subr.mxu0 0.0
      %396 = vmatpush2.msra.mxu0 0.0
      %397 = vmatprep.subr.mxu0 0.0
      %398 = vmatpush2.msra.mxu0 0.0
      %399 = vmatprep.mubr.f32.mxu0 0.0
      %400 = vmatmul.mubr.f32.gmra.mxu0 %v261
      %v401 = vpop.f32.mrf.mxu0
      %v402 = vadd.f32 %v257, %v401
      %v403 = vpop.f32.mrf.mxu0
      %404 = vmatprep.mubr.f32.mxu0 0.0
      %405 = vmatmul.mubr.f32.gmra.mxu0 %v264
      %v406 = vpop.f32.mrf.mxu0
      %v407 = vadd.f32 %v257, %v406
      %v408 = vpop.f32.mrf.mxu0
      %409 = vmatprep.mubr.f32.mxu0 0.0
      %410 = vmatmul.mubr.f32.gmra.mxu0 %v267
      %v411 = vpop.f32.mrf.mxu0
      %v412 = vadd.f32 %v257, %v411
      %v413 = vpop.f32.mrf.mxu0
      %414 = vmatprep.mubr.f32.mxu0 0.0
      %415 = vmatmul.mubr.f32.gmra.mxu0 %v270
      %v416 = vpop.f32.mrf.mxu0
      %v417 = vadd.f32 %v257, %v416
      %v418 = vpop.f32.mrf.mxu0
      %419 = vmatprep.mubr.f32.mxu0 0.0
      %420 = vmatmul.mubr.f32.gmra.mxu0 %v273
      %v421 = vpop.f32.mrf.mxu0
      %v422 = vadd.f32 %v257, %v421
      %v423 = vpop.f32.mrf.mxu0
      %424 = vmatprep.mubr.f32.mxu0 0.0
      %425 = vmatmul.mubr.f32.gmra.mxu0 %v276
      %v426 = vpop.f32.mrf.mxu0
      %v427 = vadd.f32 %v257, %v426
      %v428 = vpop.f32.mrf.mxu0
      %429 = vmatprep.mubr.f32.mxu0 0.0
      %430 = vmatmul.mubr.f32.gmra.mxu0 %v279
      %v431 = vpop.f32.mrf.mxu0
      %v432 = vadd.f32 %v257, %v431
      %v433 = vpop.f32.mrf.mxu0
      %434 = vmatprep.mubr.f32.mxu0 0.0
      %435 = vmatmul.mubr.f32.gmra.mxu0 %v282
      %v436 = vpop.f32.mrf.mxu0
      %v437 = vadd.f32 %v257, %v436
      %v438 = vpop.f32.mrf.mxu0
      %439 = vmatprep.mubr.f32.mxu0 0.0
      %440 = vmatmul.mubr.f32.gmra.mxu0 %v285
      %v441 = vpop.f32.mrf.mxu0
      %v442 = vadd.f32 %v257, %v441
      %v443 = vpop.f32.mrf.mxu0
      %444 = vmatprep.mubr.f32.mxu0 0.0
      %445 = vmatmul.mubr.f32.gmra.mxu0 %v288
      %v446 = vpop.f32.mrf.mxu0
      %v447 = vadd.f32 %v257, %v446
      %v448 = vpop.f32.mrf.mxu0
      %449 = vmatprep.mubr.f32.mxu0 0.0
      %450 = vmatmul.mubr.f32.gmra.mxu0 %v291
      %v451 = vpop.f32.mrf.mxu0
      %v452 = vadd.f32 %v257, %v451
      %v453 = vpop.f32.mrf.mxu0
      %454 = vmatprep.mubr.f32.mxu0 0.0
      %455 = vmatmul.mubr.f32.gmra.mxu0 %v294
      %v456 = vpop.f32.mrf.mxu0
      %v457 = vadd.f32 %v257, %v456
      %v458 = vpop.f32.mrf.mxu0
      %459 = vmatprep.mubr.f32.mxu0 0.0
      %460 = vmatmul.mubr.f32.gmra.mxu0 %v297
      %v461 = vpop.f32.mrf.mxu0
      %v462 = vadd.f32 %v257, %v461
      %v463 = vpop.f32.mrf.mxu0
      %464 = vmatprep.mubr.f32.mxu0 0.0
      %465 = vmatmul.mubr.f32.gmra.mxu0 %v300
      %v466 = vpop.f32.mrf.mxu0
      %v467 = vadd.f32 %v257, %v466
      %v468 = vpop.f32.mrf.mxu0
      %469 = vmatprep.mubr.f32.mxu0 0.0
      %470 = vmatmul.mubr.f32.gmra.mxu0 %v303
      %v471 = vpop.f32.mrf.mxu0
      %v472 = vadd.f32 %v257, %v471
      %v473 = vpop.f32.mrf.mxu0
      %474 = vmatprep.mubr.f32.mxu0 0.0
      %475 = vmatmul.mubr.f32.gmra.mxu0 %v306
      %v476 = vpop.f32.mrf.mxu0
      %v477 = vadd.f32 %v257, %v476
      %v478 = vpop.f32.mrf.mxu0
      %479 = vmatprep.mubr.f32.mxu0 0.0
      %480 = vmatmul.mubr.f32.gmra.mxu0 %v309
      %v481 = vpop.f32.mrf.mxu0
      %v482 = vadd.f32 %v257, %v481
      %v483 = vpop.f32.mrf.mxu0
      %484 = vmatprep.mubr.f32.mxu0 0.0
      %485 = vmatmul.mubr.f32.gmra.mxu0 %v312
      %v486 = vpop.f32.mrf.mxu0
      %v487 = vadd.f32 %v257, %v486
      %v488 = vpop.f32.mrf.mxu0
      %489 = vmatprep.mubr.f32.mxu0 0.0
      %490 = vmatmul.mubr.f32.gmra.mxu0 %v315
      %v491 = vpop.f32.mrf.mxu0
      %v492 = vadd.f32 %v257, %v491
      %v493 = vpop.f32.mrf.mxu0
      %494 = vmatprep.mubr.f32.mxu0 0.0
      %495 = vmatmul.mubr.f32.gmra.mxu0 %v318
      %v496 = vpop.f32.mrf.mxu0
      %v497 = vadd.f32 %v257, %v496
      %v498 = vpop.f32.mrf.mxu0
      %499 = vmatprep.mubr.f32.mxu0 0.0
      %500 = vmatmul.mubr.f32.gmra.mxu0 %v321
      %v501 = vpop.f32.mrf.mxu0
      %v502 = vadd.f32 %v257, %v501
      %v503 = vpop.f32.mrf.mxu0
      %504 = vmatprep.mubr.f32.mxu0 0.0
      %505 = vmatmul.mubr.f32.gmra.mxu0 %v324
      %v506 = vpop.f32.mrf.mxu0
      %v507 = vadd.f32 %v257, %v506
      %v508 = vpop.f32.mrf.mxu0
      %509 = vmatprep.mubr.f32.mxu0 0.0
      %510 = vmatmul.mubr.f32.gmra.mxu0 %v327
      %v511 = vpop.f32.mrf.mxu0
      %v512 = vadd.f32 %v257, %v511
      %v513 = vpop.f32.mrf.mxu0
      %514 = vmatprep.mubr.f32.mxu0 0.0
      %515 = vmatmul.mubr.f32.gmra.mxu0 %v330
      %v516 = vpop.f32.mrf.mxu0
      %v517 = vadd.f32 %v257, %v516
      %v518 = vpop.f32.mrf.mxu0
      %519 = vmatprep.mubr.f32.mxu0 0.0
      %520 = vmatmul.mubr.f32.gmra.mxu0 %v333
      %v521 = vpop.f32.mrf.mxu0
      %v522 = vadd.f32 %v257, %v521
      %v523 = vpop.f32.mrf.mxu0
      %524 = vdwg.mxu0
      %vm525 = vcmask 130048
      %526 = vst.msk [vmem:[%s221] sm:$0xff] %vm525, %v402
      %527 = vst.msk [vmem:[%s221 + $0x8] sm:$0xff] %vm525, %v407
      %528 = vst.msk [vmem:[%s221 + $0x10] sm:$0xff] %vm525, %v412
      %529 = vst.msk [vmem:[%s221 + $0x18] sm:$0xff] %vm525, %v417
      %530 = vst.msk [vmem:[%s221 + $0x20] sm:$0xff] %vm525, %v422
      %531 = vst.msk [vmem:[%s221 + $0x28] sm:$0xff] %vm525, %v427
      %532 = vst.msk [vmem:[%s221 + $0x30] sm:$0xff] %vm525, %v432
      %533 = vst.msk [vmem:[%s221 + $0x38] sm:$0xff] %vm525, %v437
      %534 = vst.msk [vmem:[%s221 + $0x40] sm:$0xff] %vm525, %v442
      %535 = vst.msk [vmem:[%s221 + $0x48] sm:$0xff] %vm525, %v447
      %536 = vst.msk [vmem:[%s221 + $0x50] sm:$0xff] %vm525, %v452
      %537 = vst.msk [vmem:[%s221 + $0x58] sm:$0xff] %vm525, %v457
      %538 = vst.msk [vmem:[%s221 + $0x60] sm:$0xff] %vm525, %v462
      %539 = vst.msk [vmem:[%s221 + $0x68] sm:$0xff] %vm525, %v467
      %540 = vst.msk [vmem:[%s221 + $0x70] sm:$0xff] %vm525, %v472
      %541 = vst.msk [vmem:[%s221 + $0x78] sm:$0xff] %vm525, %v477
      %542 = vst.msk [vmem:[%s221 + $0x80] sm:$0xff] %vm525, %v482
      %543 = vst.msk [vmem:[%s221 + $0x88] sm:$0xff] %vm525, %v487
      %544 = vst.msk [vmem:[%s221 + $0x90] sm:$0xff] %vm525, %v492
      %545 = vst.msk [vmem:[%s221 + $0x98] sm:$0xff] %vm525, %v497
      %546 = vst.msk [vmem:[%s221 + $0xa0] sm:$0xff] %vm525, %v502
      %547 = vst.msk [vmem:[%s221 + $0xa8] sm:$0xff] %vm525, %v507
      %548 = vst.msk [vmem:[%s221 + $0xb0] sm:$0xff] %vm525, %v512
      %549 = vst.msk [vmem:[%s221 + $0xb8] sm:$0xff] %vm525, %v517
      %550 = vst.msk [vmem:[%s221 + $0xc0] sm:$0xff] %vm525, %v522
      %p551 = scmp.eq.s32.totalorder %s17, 0
      // Predicated region
      $region33: #{spatial_bottleneck_block.6} parent=31 // pred_check
        %p552 = pneg %p551
      $region34: #{spatial_bottleneck_block.6} parent=31 // pred_check_branch
        %554 = sbr.rel (%p552) target = $region36
      $region35: #{spatial_bottleneck_block.6} parent=31 // pred_region
        %vm555 = vcmask 122880
        %556 = vst.msk [vmem:[%s4] sm:$0x1] %vm555, 0.0
        %557 = vst.msk [vmem:[%s5] sm:$0x1] %vm555, 0.0
      $region36: #{spatial_bottleneck_block.6} parent=31 // pred_fallthru
        _
      %v558 = vld [vmem:[%s4] sm:$0x1]
      %v559 = vsel %vm525, %v402, 0.0
      %v560 = vsel %vm525, %v407, 0.0
      %v561 = vadd.f32 %v559, %v560
      %v562 = vsel %vm525, %v412, 0.0
      %v563 = vadd.f32 %v561, %v562
      %v564 = vsel %vm525, %v417, 0.0
      %v565 = vadd.f32 %v563, %v564
      %v566 = vsel %vm525, %v422, 0.0
      %v567 = vadd.f32 %v565, %v566
      %v568 = vsel %vm525, %v427, 0.0
      %v569 = vadd.f32 %v567, %v568
      %v570 = vsel %vm525, %v432, 0.0
      %v571 = vadd.f32 %v569, %v570
      %v572 = vsel %vm525, %v437, 0.0
      %v573 = vadd.f32 %v571, %v572
      %v574 = vsel %vm525, %v442, 0.0
      %v575 = vadd.f32 %v573, %v574
      %v576 = vsel %vm525, %v447, 0.0
      %v577 = vadd.f32 %v575, %v576
      %v578 = vsel %vm525, %v452, 0.0
      %v579 = vadd.f32 %v577, %v578
      %v580 = vsel %vm525, %v457, 0.0
      %v581 = vadd.f32 %v579, %v580
      %v582 = vsel %vm525, %v462, 0.0
      %v583 = vadd.f32 %v581, %v582
      %v584 = vsel %vm525, %v467, 0.0
      %v585 = vadd.f32 %v583, %v584
      %v586 = vsel %vm525, %v472, 0.0
      %v587 = vadd.f32 %v585, %v586
      %v588 = vsel %vm525, %v477, 0.0
      %v589 = vadd.f32 %v587, %v588
      %v590 = vsel %vm525, %v482, 0.0
      %v591 = vadd.f32 %v589, %v590
      %v592 = vsel %vm525, %v487, 0.0
      %v593 = vadd.f32 %v591, %v592
      %v594 = vsel %vm525, %v492, 0.0
      %v595 = vadd.f32 %v593, %v594
      %v596 = vsel %vm525, %v497, 0.0
      %v597 = vadd.f32 %v595, %v596
      %v598 = vsel %vm525, %v502, 0.0
      %v599 = vadd.f32 %v597, %v598
      %v600 = vsel %vm525, %v507, 0.0
      %v601 = vadd.f32 %v599, %v600
      %v602 = vsel %vm525, %v512, 0.0
      %v603 = vadd.f32 %v601, %v602
      %v604 = vsel %vm525, %v517, 0.0
      %v605 = vadd.f32 %v603, %v604
      %v606 = vsel %vm525, %v522, 0.0
      %v607 = vadd.f32 %v605, %v606
      %v608 = vrot.slane %v607, 4
      %v609 = vadd.f32 %v607, %v608
      %v610 = vrot.slane %v609, 2
      %v611 = vadd.f32 %v609, %v610
      %v612 = vrot.slane %v611, 1
      %v613 = vadd.f32 %v611, %v612
      %v614 = vadd.f32 %v558, %v613
      %vm615 = vcmask 122880
      %616 = vst.msk [vmem:[%s4] sm:$0x1] %vm615, %v614
      %v617 = vld [vmem:[%s5] sm:$0x1]
      %v618 = vmul.f32 %v402, %v402
      %v619 = vmul.f32 %v407, %v407
      %v620 = vmul.f32 %v412, %v412
      %v621 = vmul.f32 %v417, %v417
      %v622 = vmul.f32 %v422, %v422
      %v623 = vmul.f32 %v427, %v427
      %v624 = vmul.f32 %v432, %v432
      %v625 = vmul.f32 %v437, %v437
      %v626 = vmul.f32 %v442, %v442
      %v627 = vmul.f32 %v447, %v447
      %v628 = vmul.f32 %v452, %v452
      %v629 = vmul.f32 %v457, %v457
      %v630 = vmul.f32 %v462, %v462
      %v631 = vmul.f32 %v467, %v467
      %v632 = vmul.f32 %v472, %v472
      %v633 = vmul.f32 %v477, %v477
      %v634 = vmul.f32 %v482, %v482
      %v635 = vmul.f32 %v487, %v487
      %v636 = vmul.f32 %v492, %v492
      %v637 = vmul.f32 %v497, %v497
      %v638 = vmul.f32 %v502, %v502
      %v639 = vmul.f32 %v507, %v507
      %v640 = vmul.f32 %v512, %v512
      %v641 = vmul.f32 %v517, %v517
      %v642 = vmul.f32 %v522, %v522
      %v643 = vsel %vm525, %v618, 0.0
      %v644 = vsel %vm525, %v619, 0.0
      %v645 = vadd.f32 %v643, %v644
      %v646 = vsel %vm525, %v620, 0.0
      %v647 = vadd.f32 %v645, %v646
      %v648 = vsel %vm525, %v621, 0.0
      %v649 = vadd.f32 %v647, %v648
      %v650 = vsel %vm525, %v622, 0.0
      %v651 = vadd.f32 %v649, %v650
      %v652 = vsel %vm525, %v623, 0.0
      %v653 = vadd.f32 %v651, %v652
      %v654 = vsel %vm525, %v624, 0.0
      %v655 = vadd.f32 %v653, %v654
      %v656 = vsel %vm525, %v625, 0.0
      %v657 = vadd.f32 %v655, %v656
      %v658 = vsel %vm525, %v626, 0.0
      %v659 = vadd.f32 %v657, %v658
      %v660 = vsel %vm525, %v627, 0.0
      %v661 = vadd.f32 %v659, %v660
      %v662 = vsel %vm525, %v628, 0.0
      %v663 = vadd.f32 %v661, %v662
      %v664 = vsel %vm525, %v629, 0.0
      %v665 = vadd.f32 %v663, %v664
      %v666 = vsel %vm525, %v630, 0.0
      %v667 = vadd.f32 %v665, %v666
      %v668 = vsel %vm525, %v631, 0.0
      %v669 = vadd.f32 %v667, %v668
      %v670 = vsel %vm525, %v632, 0.0
      %v671 = vadd.f32 %v669, %v670
      %v672 = vsel %vm525, %v633, 0.0
      %v673 = vadd.f32 %v671, %v672
      %v674 = vsel %vm525, %v634, 0.0
      %v675 = vadd.f32 %v673, %v674
      %v676 = vsel %vm525, %v635, 0.0
      %v677 = vadd.f32 %v675, %v676
      %v678 = vsel %vm525, %v636, 0.0
      %v679 = vadd.f32 %v677, %v678
      %v680 = vsel %vm525, %v637, 0.0
      %v681 = vadd.f32 %v679, %v680
      %v682 = vsel %vm525, %v638, 0.0
      %v683 = vadd.f32 %v681, %v682
      %v684 = vsel %vm525, %v639, 0.0
      %v685 = vadd.f32 %v683, %v684
      %v686 = vsel %vm525, %v640, 0.0
      %v687 = vadd.f32 %v685, %v686
      %v688 = vsel %vm525, %v641, 0.0
      %v689 = vadd.f32 %v687, %v688
      %v690 = vsel %vm525, %v642, 0.0
      %v691 = vadd.f32 %v689, %v690
      %v692 = vrot.slane %v691, 4
      %v693 = vadd.f32 %v691, %v692
      %v694 = vrot.slane %v693, 2
      %v695 = vadd.f32 %v693, %v694
      %v696 = vrot.slane %v695, 1
      %v697 = vadd.f32 %v695, %v696
      %v698 = vadd.f32 %v617, %v697
      %699 = vst.msk [vmem:[%s5] sm:$0x1] %vm615, %v698
      %s700 = smul.u32 25, %s17
      %p701 = scmp.lt.s32.totalorder %s700, 49
      %s702 = scalar_select %p701, %s700, 49
      %s703 = smul.addr %s702, 8
      %s704 = scalar_lea.vmem %s3, %s703
      // Predicated region
      $region37: #{spatial_bottleneck_block.6} parent=31 // pred_check
        %p705 = pneg %p103
      $region38: #{spatial_bottleneck_block.6} parent=31 // pred_check_branch
        %707 = sbr.rel (%p705) target = $region40
      $region39: #{spatial_bottleneck_block.6} parent=31 // pred_region
        %s708 = smul.u32 25, %s17
      $region40: #{spatial_bottleneck_block.6} parent=31 // pred_fallthru
        _
      // Predicated region
      $region41: #{spatial_bottleneck_block.6} parent=31 // pred_check
        %p709 = pneg %p124
      $region42: #{spatial_bottleneck_block.6} parent=31 // pred_check_branch
        %711 = sbr.rel (%p709) target = $region44
      $region43: #{spatial_bottleneck_block.6} parent=31 // pred_region
        _
      $region44: #{spatial_bottleneck_block.6} parent=31 // pred_fallthru
        _
      // Predicated region
      $region45: #{spatial_bottleneck_block.6} parent=31 // pred_check
        %p712 = pneg %p145
      $region46: #{spatial_bottleneck_block.6} parent=31 // pred_check_branch
        %714 = sbr.rel (%p712) target = $region48
      $region47: #{spatial_bottleneck_block.6} parent=31 // pred_region
        _
      $region48: #{spatial_bottleneck_block.6} parent=31 // pred_fallthru
        _
      // Predicated region
      $region49: #{spatial_bottleneck_block.6} parent=31 // pred_check
        %p715 = pneg %p124
      $region50: #{spatial_bottleneck_block.6} parent=31 // pred_check_branch
        %717 = sbr.rel (%p715) target = $region52
      $region51: #{spatial_bottleneck_block.6} parent=31 // pred_region
        _
      $region52: #{spatial_bottleneck_block.6} parent=31 // pred_fallthru
        _
      // Predicated region
      $region53: #{spatial_bottleneck_block.6} parent=31 // pred_check
        %p718 = pneg %p145
      $region54: #{spatial_bottleneck_block.6} parent=31 // pred_check_branch
        %720 = sbr.rel (%p718) target = $region56
      $region55: #{spatial_bottleneck_block.6} parent=31 // pred_region
        _
      $region56: #{spatial_bottleneck_block.6} parent=31 // pred_fallthru
        _
    $region32: #{spatial_bottleneck_block.6} parent=5 // pred_fallthru
      _
    %p721 = scmp.le.s32.totalorder 2, %s12
    // Predicated region
    $region57: #{spatial_bottleneck_block.6} parent=5 // pred_check
      %p722 = pneg %p721
    $region58: #{spatial_bottleneck_block.6} parent=5 // pred_check_branch
      %724 = sbr.rel (%p722) target = $region60
    $region59: #{spatial_bottleneck_block.6} parent=5 // pred_region
      %s725 = ssub.s32 %s12, 2
      // Predicated region
      $region61: #{spatial_bottleneck_block.6} parent=59 // pred_check
        %p726 = pneg %p109
      $region62: #{spatial_bottleneck_block.6} parent=59 // pred_check_branch
        %728 = sbr.rel (%p726) target = $region64
      $region63: #{spatial_bottleneck_block.6} parent=59 // pred_region
        %s729 = smul.u32 25, %s18
        %p730 = scmp.lt.s32.totalorder %s729, 49
        %s731 = scalar_select %p730, %s729, 49
        %s732 = smul.addr %s731, 8
        %s733 = scalar_lea.vmem %s3, %s732
      $region64: #{spatial_bottleneck_block.6} parent=59 // pred_fallthru
        _
    $region60: #{spatial_bottleneck_block.6} parent=5 // pred_fallthru
      _
  $region6: #{spatial_bottleneck_block.6} parent=0 // loop_footer
    %s16 = sadd.s32 1, %s12
  $region7: #{spatial_bottleneck_block.6} parent=0 // loop_footer_branch
    %11 = sbr.rel target = $region3
  $region8: #{spatial_bottleneck_block.6} parent=0 // loop_exit
    _

// kernel: spatial_bottleneck_block.9
$region0: #{spatial_bottleneck_block.9}
  #allocation0 [shape = 'u32[]', space=smem, size = 0x4, offset = 0x4, fixed_abs, tag = 'smem constant byte address 0x4 - core index']
  #allocation1 [shape = 'u32[144,128]{1,0:T(1,128)}', space=vmem, size = 0x12000, scoped, tag = 'internal scratch']
  %s0 = inlined_call_operand.vmem [shape: f32[400,16], index: 0, kind: input, shape index: {}]
  %s1 = inlined_call_operand.vmem [shape: f32[16,64], index: 1, kind: input, shape index: {}]
  %s2 = inlined_call_operand.vmem [shape: f32[1,64], index: 2, kind: input, shape index: {}]
  %s3 = inlined_call_operand.vmem [shape: f32[1,16], index: 3, kind: input, shape index: {}]
  %s4 = inlined_call_operand.vmem [shape: f32[1,16], index: 4, kind: input, shape index: {}]
  %s5 = inlined_call_operand.vmem [shape: f32[400,64], index: 5, kind: output, shape index: {0}]
  %s6 = inlined_call_operand.vmem [shape: f32[1,64], index: 6, kind: output, shape index: {1}]
  %s7 = inlined_call_operand.vmem [shape: f32[1,64], index: 7, kind: output, shape index: {2}]
  %8 = xla_tuple %s5, %s6, %s7
  %s9 = sld [smem:[#allocation0]]
  $region73: #{spatial_bottleneck_block.9} parent=0
    _
  %s11 = ssub.s32 1, %s9
  %s12 = scalar_select 0, %s11, %s9
  loop: start=0, step=1, limit=4
  $region2: #{spatial_bottleneck_block.9} parent=0 // loop_pre_header
    _
  $region3: #{spatial_bottleneck_block.9} parent=0 // loop_header
    %s14 = sphi 0, %s18
    %p15 = scmp.ge.s32.totalorder %s14, 4
    %s24 = sphi 0, %s26
    %s27 = sphi 0, %s24
    %s28 = sphi 0, %s27
    %s44 = sphi 0, %s28
    %s48 = sphi 0, %s48
    %s50 = sphi 0, %s48
    %s51 = sphi 0, %s50
    %s65 = sphi 0, %s51
    %s69 = sphi 0, %s69
    %s71 = sphi 0, %s69
    %s72 = sphi 0, %s71
    %s86 = sphi 0, %s72
    %s90 = sphi 0, %s90
    %s92 = sphi 0, %s90
    %s93 = sphi 0, %s92
    %s107 = sphi 0, %s93
    %s111 = sphi 0, %s111
    %s113 = sphi 0, %s111
    %s114 = sphi 0, %s113
    %s128 = sphi 0, %s114
    %s134 = sphi 0, %s136
    %s137 = sphi 0, %s134
    %s138 = sphi 0, %s137
    %s154 = sphi 0, %s138
    %s158 = sphi 0, %s158
    %s160 = sphi 0, %s158
    %s161 = sphi 0, %s160
    %s175 = sphi 0, %s161
    %s179 = sphi 0, %s179
    %s181 = sphi 0, %s179
    %s182 = sphi 0, %s181
    %s196 = sphi 0, %s182
  $region4: #{spatial_bottleneck_block.9} parent=0 // loop_header_branch
    %17 = sbr.rel (%p15) target = $region8
  $region5: #{spatial_bottleneck_block.9} parent=0 // loop_body
    %s19 = ssub.s32 %s14, 1
    %s20 = ssub.s32 %s14, 2
    %s21 = sadd.s32 %s14, 1
    %s22 = ssub.s32 %s14, %s21
    %p23 = scmp.eq.s32.totalorder %s22, 0
    %s25 = sadd.s32 %s24, 1
    %s26 = scalar_select %p23, %s24, %s25
    %p29 = pneg %p23
    %p30 = scmp.eq.s32.totalorder %s14, 1
    %p31 = por %p29, %p30
    %p32 = scmp.ne.s32.totalorder %s24, %s27
    %p33 = scmp.eq.s32.totalorder %s14, 0
    %p34 = por %p32, %p33
    %p35 = scmp.ne.s32.totalorder %s24, %s27
    %p36 = scmp.eq.s32.totalorder %s19, 1
    %p37 = por %p35, %p36
    %p38 = scmp.ne.s32.totalorder %s27, %s28
    %p39 = scmp.eq.s32.totalorder %s19, 0
    %p40 = por %p38, %p39
    %p41 = scmp.ne.s32.totalorder %s27, %s28
    %p42 = scmp.eq.s32.totalorder %s20, 1
    %p43 = por %p41, %p42
    %p45 = scmp.ne.s32.totalorder %s28, %s44
    %p46 = scmp.eq.s32.totalorder %s20, 0
    %p47 = por %p45, %p46
    %s49 = sadd.s32 %s48, 1
    %p52 = scmp.eq.s32.totalorder %s14, 1
    %p53 = scmp.ne.s32.totalorder %s48, %s50
    %p54 = scmp.eq.s32.totalorder %s14, 0
    %p55 = por %p53, %p54
    %p56 = scmp.ne.s32.totalorder %s48, %s50
    %p57 = scmp.eq.s32.totalorder %s19, 1
    %p58 = por %p56, %p57
    %p59 = scmp.ne.s32.totalorder %s50, %s51
    %p60 = scmp.eq.s32.totalorder %s19, 0
    %p61 = por %p59, %p60
    %p62 = scmp.ne.s32.totalorder %s50, %s51
    %p63 = scmp.eq.s32.totalorder %s20, 1
    %p64 = por %p62, %p63
    %p66 = scmp.ne.s32.totalorder %s51, %s65
    %p67 = scmp.eq.s32.totalorder %s20, 0
    %p68 = por %p66, %p67
    %s70 = sadd.s32 %s69, 1
    %p73 = scmp.eq.s32.totalorder %s14, 1
    %p74 = scmp.ne.s32.totalorder %s69, %s71
    %p75 = scmp.eq.s32.totalorder %s14, 0
    %p76 = por %p74, %p75
    %p77 = scmp.ne.s32.totalorder %s69, %s71
    %p78 = scmp.eq.s32.totalorder %s19, 1
    %p79 = por %p77, %p78
    %p80 = scmp.ne.s32.totalorder %s71, %s72
    %p81 = scmp.eq.s32.totalorder %s19, 0
    %p82 = por %p80, %p81
    %p83 = scmp.ne.s32.totalorder %s71, %s72
    %p84 = scmp.eq.s32.totalorder %s20, 1
    %p85 = por %p83, %p84
    %p87 = scmp.ne.s32.totalorder %s72, %s86
    %p88 = scmp.eq.s32.totalorder %s20, 0
    %p89 = por %p87, %p88
    %s91 = sadd.s32 %s90, 1
    %p94 = scmp.eq.s32.totalorder %s14, 1
    %p95 = scmp.ne.s32.totalorder %s90, %s92
    %p96 = scmp.eq.s32.totalorder %s14, 0
    %p97 = por %p95, %p96
    %p98 = scmp.ne.s32.totalorder %s90, %s92
    %p99 = scmp.eq.s32.totalorder %s19, 1
    %p100 = por %p98, %p99
    %p101 = scmp.ne.s32.totalorder %s92, %s93
    %p102 = scmp.eq.s32.totalorder %s19, 0
    %p103 = por %p101, %p102
    %p104 = scmp.ne.s32.totalorder %s92, %s93
    %p105 = scmp.eq.s32.totalorder %s20, 1
    %p106 = por %p104, %p105
    %p108 = scmp.ne.s32.totalorder %s93, %s107
    %p109 = scmp.eq.s32.totalorder %s20, 0
    %p110 = por %p108, %p109
    %s112 = sadd.s32 %s111, 1
    %p115 = scmp.eq.s32.totalorder %s14, 1
    %p116 = scmp.ne.s32.totalorder %s111, %s113
    %p117 = scmp.eq.s32.totalorder %s14, 0
    %p118 = por %p116, %p117
    %p119 = scmp.ne.s32.totalorder %s111, %s113
    %p120 = scmp.eq.s32.totalorder %s19, 1
    %p121 = por %p119, %p120
    %p122 = scmp.ne.s32.totalorder %s113, %s114
    %p123 = scmp.eq.s32.totalorder %s19, 0
    %p124 = por %p122, %p123
    %p125 = scmp.ne.s32.totalorder %s113, %s114
    %p126 = scmp.eq.s32.totalorder %s20, 1
    %p127 = por %p125, %p126
    %p129 = scmp.ne.s32.totalorder %s114, %s128
    %p130 = scmp.eq.s32.totalorder %s20, 0
    %p131 = por %p129, %p130
    %s132 = ssub.s32 %s14, %s21
    %p133 = scmp.eq.s32.totalorder %s132, 0
    %s135 = sadd.s32 %s134, 1
    %s136 = scalar_select %p133, %s134, %s135
    %p139 = pneg %p133
    %p140 = scmp.eq.s32.totalorder %s14, 1
    %p141 = por %p139, %p140
    %p142 = scmp.ne.s32.totalorder %s134, %s137
    %p143 = scmp.eq.s32.totalorder %s14, 0
    %p144 = por %p142, %p143
    %p145 = scmp.ne.s32.totalorder %s134, %s137
    %p146 = scmp.eq.s32.totalorder %s19, 1
    %p147 = por %p145, %p146
    %p148 = scmp.ne.s32.totalorder %s137, %s138
    %p149 = scmp.eq.s32.totalorder %s19, 0
    %p150 = por %p148, %p149
    %p151 = scmp.ne.s32.totalorder %s137, %s138
    %p152 = scmp.eq.s32.totalorder %s20, 1
    %p153 = por %p151, %p152
    %p155 = scmp.ne.s32.totalorder %s138, %s154
    %p156 = scmp.eq.s32.totalorder %s20, 0
    %p157 = por %p155, %p156
    %s159 = sadd.s32 %s158, 1
    %p162 = scmp.eq.s32.totalorder %s14, 1
    %p163 = scmp.ne.s32.totalorder %s158, %s160
    %p164 = scmp.eq.s32.totalorder %s14, 0
    %p165 = por %p163, %p164
    %p166 = scmp.ne.s32.totalorder %s158, %s160
    %p167 = scmp.eq.s32.totalorder %s19, 1
    %p168 = por %p166, %p167
    %p169 = scmp.ne.s32.totalorder %s160, %s161
    %p170 = scmp.eq.s32.totalorder %s19, 0
    %p171 = por %p169, %p170
    %p172 = scmp.ne.s32.totalorder %s160, %s161
    %p173 = scmp.eq.s32.totalorder %s20, 1
    %p174 = por %p172, %p173
    %p176 = scmp.ne.s32.totalorder %s161, %s175
    %p177 = scmp.eq.s32.totalorder %s20, 0
    %p178 = por %p176, %p177
    %s180 = sadd.s32 %s179, 1
    %p183 = scmp.eq.s32.totalorder %s14, 1
    %p184 = scmp.ne.s32.totalorder %s179, %s181
    %p185 = scmp.eq.s32.totalorder %s14, 0
    %p186 = por %p184, %p185
    %p187 = scmp.ne.s32.totalorder %s179, %s181
    %p188 = scmp.eq.s32.totalorder %s19, 1
    %p189 = por %p187, %p188
    %p190 = scmp.ne.s32.totalorder %s181, %s182
    %p191 = scmp.eq.s32.totalorder %s19, 0
    %p192 = por %p190, %p191
    %p193 = scmp.ne.s32.totalorder %s181, %s182
    %p194 = scmp.eq.s32.totalorder %s20, 1
    %p195 = por %p193, %p194
    %p197 = scmp.ne.s32.totalorder %s182, %s196
    %p198 = scmp.eq.s32.totalorder %s20, 0
    %p199 = por %p197, %p198
    %p200 = scmp.le.s32.totalorder 1, %s14
    %p201 = scmp.lt.s32.totalorder %s14, 3
    %p202 = pnand %p200, %p201
    %p203 = pneg %p202
    // Predicated region
    $region9: #{spatial_bottleneck_block.9} parent=5 // pred_check
      _
    $region10: #{spatial_bottleneck_block.9} parent=5 // pred_check_branch
      %205 = sbr.rel (%p202) target = $region12
    $region11: #{spatial_bottleneck_block.9} parent=5 // pred_region
      %s206 = ssub.s32 %s14, 1
      // Predicated region
      $region13: #{spatial_bottleneck_block.9} parent=11 // pred_check
        %p207 = pneg %p61
      $region14: #{spatial_bottleneck_block.9} parent=11 // pred_check_branch
        %209 = sbr.rel (%p207) target = $region16
      $region15: #{spatial_bottleneck_block.9} parent=11 // pred_region
        _
      $region16: #{spatial_bottleneck_block.9} parent=11 // pred_fallthru
        _
      // Predicated region
      $region17: #{spatial_bottleneck_block.9} parent=11 // pred_check
        %p210 = pneg %p82
      $region18: #{spatial_bottleneck_block.9} parent=11 // pred_check_branch
        %212 = sbr.rel (%p210) target = $region20
      $region19: #{spatial_bottleneck_block.9} parent=11 // pred_region
        _
      $region20: #{spatial_bottleneck_block.9} parent=11 // pred_fallthru
        _
      // Predicated region
      $region21: #{spatial_bottleneck_block.9} parent=11 // pred_check
        %p213 = pneg %p103
      $region22: #{spatial_bottleneck_block.9} parent=11 // pred_check_branch
        %215 = sbr.rel (%p213) target = $region24
      $region23: #{spatial_bottleneck_block.9} parent=11 // pred_region
        _
      $region24: #{spatial_bottleneck_block.9} parent=11 // pred_fallthru
        _
      // Predicated region
      $region25: #{spatial_bottleneck_block.9} parent=11 // pred_check
        %p216 = pneg %p124
      $region26: #{spatial_bottleneck_block.9} parent=11 // pred_check_branch
        %218 = sbr.rel (%p216) target = $region28
      $region27: #{spatial_bottleneck_block.9} parent=11 // pred_region
        _
      $region28: #{spatial_bottleneck_block.9} parent=11 // pred_fallthru
        _
    $region12: #{spatial_bottleneck_block.9} parent=5 // pred_fallthru
      _
    %p219 = scmp.lt.s32.totalorder %s14, 2
    // Predicated region
    $region29: #{spatial_bottleneck_block.9} parent=5 // pred_check
      %p220 = pneg %p219
    $region30: #{spatial_bottleneck_block.9} parent=5 // pred_check_branch
      %222 = sbr.rel (%p220) target = $region32
    $region31: #{spatial_bottleneck_block.9} parent=5 // pred_region
      // Predicated region
      $region33: #{spatial_bottleneck_block.9} parent=31 // pred_check
        %p223 = pneg %p34
      $region34: #{spatial_bottleneck_block.9} parent=31 // pred_check_branch
        %225 = sbr.rel (%p223) target = $region36
      $region35: #{spatial_bottleneck_block.9} parent=31 // pred_region
        %s226 = smul.u32 25, %s14
        %p227 = scmp.lt.s32.totalorder %s226, 49
        %s228 = scalar_select %p227, %s226, 49
        %s229 = smul.addr %s228, 8
        %s230 = scalar_lea.vmem %s0, %s229
        %s231 = smul.u32 25, %s14
      $region36: #{spatial_bottleneck_block.9} parent=31 // pred_fallthru
        _
    $region32: #{spatial_bottleneck_block.9} parent=5 // pred_fallthru
      _
    %p232 = scmp.le.s32.totalorder 1, %s14
    %p233 = scmp.lt.s32.totalorder %s14, 3
    %p234 = pnand %p232, %p233
    %p235 = pneg %p234
    // Predicated region
    $region37: #{spatial_bottleneck_block.9} parent=5 // pred_check
      _
    $region38: #{spatial_bottleneck_block.9} parent=5 // pred_check_branch
      %237 = sbr.rel (%p234) target = $region40
    $region39: #{spatial_bottleneck_block.9} parent=5 // pred_region
      %s238 = ssub.s32 %s14, 1
      %s239 = smul.u32 25, %s19
      %p240 = scmp.lt.s32.totalorder %s239, 49
      %s241 = scalar_select %p240, %s239, 49
      %s242 = smul.addr %s241, 8
      %s243 = scalar_lea.vmem %s0, %s242
      %p244 = pneg %p40
      %p245 = pneg %p37
      %p246 = pneg %p61
      %p247 = pneg %p58
      %p248 = pneg %p82
      %p249 = pneg %p79
      %p250 = pneg %p103
      %p251 = pneg %p100
      %p252 = pneg %p124
      %p253 = pneg %p121
      %p254 = pneg %p150
      %p255 = pneg %p147
      %s256 = smul.u32 25, %s19
      %p257 = scmp.lt.s32.totalorder %s256, 49
      %s258 = scalar_select %p257, %s256, 49
      %s259 = smul.addr %s258, 8
      %s260 = scalar_lea.vmem %s5, %s259
      %p261 = pneg %p171
      %p262 = pneg %p168
      %p263 = pneg %p192
      %p264 = pneg %p189
      %s265 = smul.u32 25, %s19
      %p266 = scmp.lt.s32.totalorder %s265, 49
      %s267 = scalar_select %p266, %s265, 49
      %s268 = smul.addr %s267, 8
      %s269 = scalar_lea.vmem %s0, %s268
      %s270 = smul.u32 25, %s19
      %s271 = smul.u32 25, %s19
      %p272 = scmp.lt.s32.totalorder %s271, 49
      %s273 = scalar_select %p272, %s271, 49
      %s274 = smul.addr %s273, 8
      %s275 = scalar_lea.vmem %s5, %s274
      %s276 = smul.u32 25, %s19
      %v277 = vld [vmem:[%s269] sm:$0xff]
      %v278 = vld [vmem:[%s269 + $0x8] sm:$0xff]
      %v279 = vld [vmem:[%s269 + $0x10] sm:$0xff]
      %v280 = vld [vmem:[%s269 + $0x18] sm:$0xff]
      %v281 = vld [vmem:[%s269 + $0x20] sm:$0xff]
      %v282 = vld [vmem:[%s269 + $0x28] sm:$0xff]
      %v283 = vld [vmem:[%s269 + $0x30] sm:$0xff]
      %v284 = vld [vmem:[%s269 + $0x38] sm:$0xff]
      %v285 = vld [vmem:[%s269 + $0x40] sm:$0xff]
      %v286 = vld [vmem:[%s269 + $0x48] sm:$0xff]
      %v287 = vld [vmem:[%s269 + $0x50] sm:$0xff]
      %v288 = vld [vmem:[%s269 + $0x58] sm:$0xff]
      %v289 = vld [vmem:[%s269 + $0x60] sm:$0xff]
      %v290 = vld [vmem:[%s269 + $0x68] sm:$0xff]
      %v291 = vld [vmem:[%s269 + $0x70] sm:$0xff]
      %v292 = vld [vmem:[%s269 + $0x78] sm:$0xff]
      %v293 = vld [vmem:[%s269 + $0x80] sm:$0xff]
      %v294 = vld [vmem:[%s269 + $0x88] sm:$0xff]
      %v295 = vld [vmem:[%s269 + $0x90] sm:$0xff]
      %v296 = vld [vmem:[%s269 + $0x98] sm:$0xff]
      %v297 = vld [vmem:[%s269 + $0xa0] sm:$0xff]
      %v298 = vld [vmem:[%s269 + $0xa8] sm:$0xff]
      %v299 = vld [vmem:[%s269 + $0xb0] sm:$0xff]
      %v300 = vld [vmem:[%s269 + $0xb8] sm:$0xff]
      %v301 = vld [vmem:[%s269 + $0xc0] sm:$0xff]
      %v302 = vld [vmem:[%s3] sm:$0x1]
      %v304 = vlaneseq
      %v305 = vshrl.u32 %v304, 7
      %v306 = vsub.s32 0, %v305
      %v307 = vrot.slane %v302, %v306
      %v309 = vmul.f32 %v277, %v307
      %v310 = vmul.f32 %v278, %v307
      %v311 = vmul.f32 %v279, %v307
      %v312 = vmul.f32 %v280, %v307
      %v313 = vmul.f32 %v281, %v307
      %v314 = vmul.f32 %v282, %v307
      %v315 = vmul.f32 %v283, %v307
      %v316 = vmul.f32 %v284, %v307
      %v317 = vmul.f32 %v285, %v307
      %v318 = vmul.f32 %v286, %v307
      %v319 = vmul.f32 %v287, %v307
      %v320 = vmul.f32 %v288, %v307
      %v321 = vmul.f32 %v289, %v307
      %v322 = vmul.f32 %v290, %v307
      %v323 = vmul.f32 %v291, %v307
      %v324 = vmul.f32 %v292, %v307
      %v325 = vmul.f32 %v293, %v307
      %v326 = vmul.f32 %v294, %v307
      %v327 = vmul.f32 %v295, %v307
      %v328 = vmul.f32 %v296, %v307
      %v329 = vmul.f32 %v297, %v307
      %v330 = vmul.f32 %v298, %v307
      %v331 = vmul.f32 %v299, %v307
      %v332 = vmul.f32 %v300, %v307
      %v333 = vmul.f32 %v301, %v307
      %v334 = vld [vmem:[%s4] sm:$0x1]
      %v336 = vlaneseq
      %v337 = vshrl.u32 %v336, 7
      %v338 = vsub.s32 0, %v337
      %v339 = vrot.slane %v334, %v338
      %v341 = vadd.f32 %v309, %v339
      %v342 = vadd.f32 %v310, %v339
      %v343 = vadd.f32 %v311, %v339
      %v344 = vadd.f32 %v312, %v339
      %v345 = vadd.f32 %v313, %v339
      %v346 = vadd.f32 %v314, %v339
      %v347 = vadd.f32 %v315, %v339
      %v348 = vadd.f32 %v316, %v339
      %v349 = vadd.f32 %v317, %v339
      %v350 = vadd.f32 %v318, %v339
      %v351 = vadd.f32 %v319, %v339
      %v352 = vadd.f32 %v320, %v339
      %v353 = vadd.f32 %v321, %v339
      %v354 = vadd.f32 %v322, %v339
      %v355 = vadd.f32 %v323, %v339
      %v356 = vadd.f32 %v324, %v339
      %v357 = vadd.f32 %v325, %v339
      %v358 = vadd.f32 %v326, %v339
      %v359 = vadd.f32 %v327, %v339
      %v360 = vadd.f32 %v328, %v339
      %v361 = vadd.f32 %v329, %v339
      %v362 = vadd.f32 %v330, %v339
      %v363 = vadd.f32 %v331, %v339
      %v364 = vadd.f32 %v332, %v339
      %v365 = vadd.f32 %v333, %v339
      %v366 = vmax.f32 %v341, 0.0
      %v367 = vmax.f32 %v342, 0.0
      %v368 = vmax.f32 %v343, 0.0
      %v369 = vmax.f32 %v344, 0.0
      %v370 = vmax.f32 %v345, 0.0
      %v371 = vmax.f32 %v346, 0.0
      %v372 = vmax.f32 %v347, 0.0
      %v373 = vmax.f32 %v348, 0.0
      %v374 = vmax.f32 %v349, 0.0
      %v375 = vmax.f32 %v350, 0.0
      %v376 = vmax.f32 %v351, 0.0
      %v377 = vmax.f32 %v352, 0.0
      %v378 = vmax.f32 %v353, 0.0
      %v379 = vmax.f32 %v354, 0.0
      %v380 = vmax.f32 %v355, 0.0
      %v381 = vmax.f32 %v356, 0.0
      %v382 = vmax.f32 %v357, 0.0
      %v383 = vmax.f32 %v358, 0.0
      %v384 = vmax.f32 %v359, 0.0
      %v385 = vmax.f32 %v360, 0.0
      %v386 = vmax.f32 %v361, 0.0
      %v387 = vmax.f32 %v362, 0.0
      %v388 = vmax.f32 %v363, 0.0
      %v389 = vmax.f32 %v364, 0.0
      %v390 = vmax.f32 %v365, 0.0
      %v391 = vld [vmem:[%s1] sm:$0xff]
      %v392 = vld [vmem:[%s1 + $0x8] sm:$0xff]
      %v393 = vld [vmem:[%s2] sm:$0x1]
      %v395 = vlaneseq
      %v396 = vshrl.u32 %v395, 7
      %v397 = vsub.s32 0, %v396
      %v398 = vrot.slane %v393, %v397
      %vm400 = vcmask 130048
      %v402 = vsel %vm400, %v366, 0
      %v405 = vsel %vm400, %v367, 0
      %v408 = vsel %vm400, %v368, 0
      %v411 = vsel %vm400, %v369, 0
      %v414 = vsel %vm400, %v370, 0
      %v417 = vsel %vm400, %v371, 0
      %v420 = vsel %vm400, %v372, 0
      %v423 = vsel %vm400, %v373, 0
      %v426 = vsel %vm400, %v374, 0
      %v429 = vsel %vm400, %v375, 0
      %v432 = vsel %vm400, %v376, 0
      %v435 = vsel %vm400, %v377, 0
      %v438 = vsel %vm400, %v378, 0
      %v441 = vsel %vm400, %v379, 0
      %v444 = vsel %vm400, %v380, 0
      %v447 = vsel %vm400, %v381, 0
      %v450 = vsel %vm400, %v382, 0
      %v453 = vsel %vm400, %v383, 0
      %v456 = vsel %vm400, %v384, 0
      %v459 = vsel %vm400, %v385, 0
      %v462 = vsel %vm400, %v386, 0
      %v465 = vsel %vm400, %v387, 0
      %v468 = vsel %vm400, %v388, 0
      %v471 = vsel %vm400, %v389, 0
      %v474 = vsel %vm400, %v390, 0
      %476 = vmatprep.subr.mxu0 0.0
      %477 = vmatpush1.msra.mxu0 0.0
      %478 = vmatprep.subr.mxu0 0.0
      %479 = vmatpush1.msra.mxu0 0.0
      %480 = vmatprep.subr.mxu0 0.0
      %481 = vmatpush1.msra.mxu0 0.0
      %482 = vmatprep.subr.mxu0 0.0
      %483 = vmatpush1.msra.mxu0 0.0
      %484 = vmatprep.subr.mxu0 0.0
      %485 = vmatpush1.msra.mxu0 0.0
      %486 = vmatprep.subr.mxu0 0.0
      %487 = vmatpush1.msra.mxu0 0.0
      %488 = vmatprep.subr.mxu0 0.0
      %489 = vmatpush1.msra.mxu0 0.0
      %490 = vmatprep.subr.mxu0 0.0
      %491 = vmatpush1.msra.mxu0 0.0
      %492 = vmatprep.subr.mxu0 0.0
      %493 = vmatpush1.msra.mxu0 0.0
      %494 = vmatprep.subr.mxu0 0.0
      %495 = vmatpush1.msra.mxu0 0.0
      %496 = vmatprep.subr.mxu0 0.0
      %497 = vmatpush1.msra.mxu0 0.0
      %498 = vmatprep.subr.mxu0 0.0
      %499 = vmatpush1.msra.mxu0 0.0
      %500 = vmatprep.subr.mxu0 0.0
      %501 = vmatpush1.msra.mxu0 0.0
      %502 = vmatprep.subr.mxu0 0.0
      %503 = vmatpush1.msra.mxu0 0.0
      %504 = vmatprep.subr.mxu0 0.0
      %505 = vmatpush1.msra.mxu0 %v392
      %506 = vmatprep.subr.mxu0 0.0
      %507 = vmatpush1.msra.mxu0 %v391
      %508 = vmatprep.subr.mxu0 0.0
      %509 = vmatpush2.msra.mxu0 0.0
      %510 = vmatprep.subr.mxu0 0.0
      %511 = vmatpush2.msra.mxu0 0.0
      %512 = vmatprep.subr.mxu0 0.0
      %513 = vmatpush2.msra.mxu0 0.0
      %514 = vmatprep.subr.mxu0 0.0
      %515 = vmatpush2.msra.mxu0 0.0
      %516 = vmatprep.subr.mxu0 0.0
      %517 = vmatpush2.msra.mxu0 0.0
      %518 = vmatprep.subr.mxu0 0.0
      %519 = vmatpush2.msra.mxu0 0.0
      %520 = vmatprep.subr.mxu0 0.0
      %521 = vmatpush2.msra.mxu0 0.0
      %522 = vmatprep.subr.mxu0 0.0
      %523 = vmatpush2.msra.mxu0 0.0
      %524 = vmatprep.subr.mxu0 0.0
      %525 = vmatpush2.msra.mxu0 0.0
      %526 = vmatprep.subr.mxu0 0.0
      %527 = vmatpush2.msra.mxu0 0.0
      %528 = vmatprep.subr.mxu0 0.0
      %529 = vmatpush2.msra.mxu0 0.0
      %530 = vmatprep.subr.mxu0 0.0
      %531 = vmatpush2.msra.mxu0 0.0
      %532 = vmatprep.subr.mxu0 0.0
      %533 = vmatpush2.msra.mxu0 0.0
      %534 = vmatprep.subr.mxu0 0.0
      %535 = vmatpush2.msra.mxu0 0.0
      %536 = vmatprep.subr.mxu0 0.0
      %537 = vmatpush2.msra.mxu0 0.0
      %538 = vmatprep.subr.mxu0 0.0
      %539 = vmatpush2.msra.mxu0 0.0
      %540 = vmatprep.mubr.f32.mxu0 0.0
      %541 = vmatmul.mubr.f32.gmra.mxu0 %v402
      %v542 = vpop.f32.mrf.mxu0
      %v543 = vadd.f32 %v398, %v542
      %v544 = vpop.f32.mrf.mxu0
      %545 = vmatprep.mubr.f32.mxu0 0.0
      %546 = vmatmul.mubr.f32.gmra.mxu0 %v405
      %v547 = vpop.f32.mrf.mxu0
      %v548 = vadd.f32 %v398, %v547
      %v549 = vpop.f32.mrf.mxu0
      %550 = vmatprep.mubr.f32.mxu0 0.0
      %551 = vmatmul.mubr.f32.gmra.mxu0 %v408
      %v552 = vpop.f32.mrf.mxu0
      %v553 = vadd.f32 %v398, %v552
      %v554 = vpop.f32.mrf.mxu0
      %555 = vmatprep.mubr.f32.mxu0 0.0
      %556 = vmatmul.mubr.f32.gmra.mxu0 %v411
      %v557 = vpop.f32.mrf.mxu0
      %v558 = vadd.f32 %v398, %v557
      %v559 = vpop.f32.mrf.mxu0
      %560 = vmatprep.mubr.f32.mxu0 0.0
      %561 = vmatmul.mubr.f32.gmra.mxu0 %v414
      %v562 = vpop.f32.mrf.mxu0
      %v563 = vadd.f32 %v398, %v562
      %v564 = vpop.f32.mrf.mxu0
      %565 = vmatprep.mubr.f32.mxu0 0.0
      %566 = vmatmul.mubr.f32.gmra.mxu0 %v417
      %v567 = vpop.f32.mrf.mxu0
      %v568 = vadd.f32 %v398, %v567
      %v569 = vpop.f32.mrf.mxu0
      %570 = vmatprep.mubr.f32.mxu0 0.0
      %571 = vmatmul.mubr.f32.gmra.mxu0 %v420
      %v572 = vpop.f32.mrf.mxu0
      %v573 = vadd.f32 %v398, %v572
      %v574 = vpop.f32.mrf.mxu0
      %575 = vmatprep.mubr.f32.mxu0 0.0
      %576 = vmatmul.mubr.f32.gmra.mxu0 %v423
      %v577 = vpop.f32.mrf.mxu0
      %v578 = vadd.f32 %v398, %v577
      %v579 = vpop.f32.mrf.mxu0
      %580 = vmatprep.mubr.f32.mxu0 0.0
      %581 = vmatmul.mubr.f32.gmra.mxu0 %v426
      %v582 = vpop.f32.mrf.mxu0
      %v583 = vadd.f32 %v398, %v582
      %v584 = vpop.f32.mrf.mxu0
      %585 = vmatprep.mubr.f32.mxu0 0.0
      %586 = vmatmul.mubr.f32.gmra.mxu0 %v429
      %v587 = vpop.f32.mrf.mxu0
      %v588 = vadd.f32 %v398, %v587
      %v589 = vpop.f32.mrf.mxu0
      %590 = vmatprep.mubr.f32.mxu0 0.0
      %591 = vmatmul.mubr.f32.gmra.mxu0 %v432
      %v592 = vpop.f32.mrf.mxu0
      %v593 = vadd.f32 %v398, %v592
      %v594 = vpop.f32.mrf.mxu0
      %595 = vmatprep.mubr.f32.mxu0 0.0
      %596 = vmatmul.mubr.f32.gmra.mxu0 %v435
      %v597 = vpop.f32.mrf.mxu0
      %v598 = vadd.f32 %v398, %v597
      %v599 = vpop.f32.mrf.mxu0
      %600 = vmatprep.mubr.f32.mxu0 0.0
      %601 = vmatmul.mubr.f32.gmra.mxu0 %v438
      %v602 = vpop.f32.mrf.mxu0
      %v603 = vadd.f32 %v398, %v602
      %v604 = vpop.f32.mrf.mxu0
      %605 = vmatprep.mubr.f32.mxu0 0.0
      %606 = vmatmul.mubr.f32.gmra.mxu0 %v441
      %v607 = vpop.f32.mrf.mxu0
      %v608 = vadd.f32 %v398, %v607
      %v609 = vpop.f32.mrf.mxu0
      %610 = vmatprep.mubr.f32.mxu0 0.0
      %611 = vmatmul.mubr.f32.gmra.mxu0 %v444
      %v612 = vpop.f32.mrf.mxu0
      %v613 = vadd.f32 %v398, %v612
      %v614 = vpop.f32.mrf.mxu0
      %615 = vmatprep.mubr.f32.mxu0 0.0
      %616 = vmatmul.mubr.f32.gmra.mxu0 %v447
      %v617 = vpop.f32.mrf.mxu0
      %v618 = vadd.f32 %v398, %v617
      %v619 = vpop.f32.mrf.mxu0
      %620 = vmatprep.mubr.f32.mxu0 0.0
      %621 = vmatmul.mubr.f32.gmra.mxu0 %v450
      %v622 = vpop.f32.mrf.mxu0
      %v623 = vadd.f32 %v398, %v622
      %v624 = vpop.f32.mrf.mxu0
      %625 = vmatprep.mubr.f32.mxu0 0.0
      %626 = vmatmul.mubr.f32.gmra.mxu0 %v453
      %v627 = vpop.f32.mrf.mxu0
      %v628 = vadd.f32 %v398, %v627
      %v629 = vpop.f32.mrf.mxu0
      %630 = vmatprep.mubr.f32.mxu0 0.0
      %631 = vmatmul.mubr.f32.gmra.mxu0 %v456
      %v632 = vpop.f32.mrf.mxu0
      %v633 = vadd.f32 %v398, %v632
      %v634 = vpop.f32.mrf.mxu0
      %635 = vmatprep.mubr.f32.mxu0 0.0
      %636 = vmatmul.mubr.f32.gmra.mxu0 %v459
      %v637 = vpop.f32.mrf.mxu0
      %v638 = vadd.f32 %v398, %v637
      %v639 = vpop.f32.mrf.mxu0
      %640 = vmatprep.mubr.f32.mxu0 0.0
      %641 = vmatmul.mubr.f32.gmra.mxu0 %v462
      %v642 = vpop.f32.mrf.mxu0
      %v643 = vadd.f32 %v398, %v642
      %v644 = vpop.f32.mrf.mxu0
      %645 = vmatprep.mubr.f32.mxu0 0.0
      %646 = vmatmul.mubr.f32.gmra.mxu0 %v465
      %v647 = vpop.f32.mrf.mxu0
      %v648 = vadd.f32 %v398, %v647
      %v649 = vpop.f32.mrf.mxu0
      %650 = vmatprep.mubr.f32.mxu0 0.0
      %651 = vmatmul.mubr.f32.gmra.mxu0 %v468
      %v652 = vpop.f32.mrf.mxu0
      %v653 = vadd.f32 %v398, %v652
      %v654 = vpop.f32.mrf.mxu0
      %655 = vmatprep.mubr.f32.mxu0 0.0
      %656 = vmatmul.mubr.f32.gmra.mxu0 %v471
      %v657 = vpop.f32.mrf.mxu0
      %v658 = vadd.f32 %v398, %v657
      %v659 = vpop.f32.mrf.mxu0
      %660 = vmatprep.mubr.f32.mxu0 0.0
      %661 = vmatmul.mubr.f32.gmra.mxu0 %v474
      %v662 = vpop.f32.mrf.mxu0
      %v663 = vadd.f32 %v398, %v662
      %v664 = vpop.f32.mrf.mxu0
      %665 = vdwg.mxu0
      %vm666 = vcmask 523264
      %667 = vst.msk [vmem:[%s275] sm:$0xff] %vm666, %v543
      %668 = vst.msk [vmem:[%s275 + $0x8] sm:$0xff] %vm666, %v548
      %669 = vst.msk [vmem:[%s275 + $0x10] sm:$0xff] %vm666, %v553
      %670 = vst.msk [vmem:[%s275 + $0x18] sm:$0xff] %vm666, %v558
      %671 = vst.msk [vmem:[%s275 + $0x20] sm:$0xff] %vm666, %v563
      %672 = vst.msk [vmem:[%s275 + $0x28] sm:$0xff] %vm666, %v568
      %673 = vst.msk [vmem:[%s275 + $0x30] sm:$0xff] %vm666, %v573
      %674 = vst.msk [vmem:[%s275 + $0x38] sm:$0xff] %vm666, %v578
      %675 = vst.msk [vmem:[%s275 + $0x40] sm:$0xff] %vm666, %v583
      %676 = vst.msk [vmem:[%s275 + $0x48] sm:$0xff] %vm666, %v588
      %677 = vst.msk [vmem:[%s275 + $0x50] sm:$0xff] %vm666, %v593
      %678 = vst.msk [vmem:[%s275 + $0x58] sm:$0xff] %vm666, %v598
      %679 = vst.msk [vmem:[%s275 + $0x60] sm:$0xff] %vm666, %v603
      %680 = vst.msk [vmem:[%s275 + $0x68] sm:$0xff] %vm666, %v608
      %681 = vst.msk [vmem:[%s275 + $0x70] sm:$0xff] %vm666, %v613
      %682 = vst.msk [vmem:[%s275 + $0x78] sm:$0xff] %vm666, %v618
      %683 = vst.msk [vmem:[%s275 + $0x80] sm:$0xff] %vm666, %v623
      %684 = vst.msk [vmem:[%s275 + $0x88] sm:$0xff] %vm666, %v628
      %685 = vst.msk [vmem:[%s275 + $0x90] sm:$0xff] %vm666, %v633
      %686 = vst.msk [vmem:[%s275 + $0x98] sm:$0xff] %vm666, %v638
      %687 = vst.msk [vmem:[%s275 + $0xa0] sm:$0xff] %vm666, %v643
      %688 = vst.msk [vmem:[%s275 + $0xa8] sm:$0xff] %vm666, %v648
      %689 = vst.msk [vmem:[%s275 + $0xb0] sm:$0xff] %vm666, %v653
      %690 = vst.msk [vmem:[%s275 + $0xb8] sm:$0xff] %vm666, %v658
      %691 = vst.msk [vmem:[%s275 + $0xc0] sm:$0xff] %vm666, %v663
      %p692 = scmp.eq.s32.totalorder %s19, 0
      // Predicated region
      $region41: #{spatial_bottleneck_block.9} parent=39 // pred_check
        %p693 = pneg %p692
      $region42: #{spatial_bottleneck_block.9} parent=39 // pred_check_branch
        %695 = sbr.rel (%p693) target = $region44
      $region43: #{spatial_bottleneck_block.9} parent=39 // pred_region
        %vm696 = vcmask 516096
        %697 = vst.msk [vmem:[%s6] sm:$0x1] %vm696, 0.0
        %698 = vst.msk [vmem:[%s7] sm:$0x1] %vm696, 0.0
      $region44: #{spatial_bottleneck_block.9} parent=39 // pred_fallthru
        _
      %v699 = vld [vmem:[%s6] sm:$0x1]
      %v700 = vsel %vm666, %v543, 0.0
      %v701 = vsel %vm666, %v548, 0.0
      %v702 = vadd.f32 %v700, %v701
      %v703 = vsel %vm666, %v553, 0.0
      %v704 = vadd.f32 %v702, %v703
      %v705 = vsel %vm666, %v558, 0.0
      %v706 = vadd.f32 %v704, %v705
      %v707 = vsel %vm666, %v563, 0.0
      %v708 = vadd.f32 %v706, %v707
      %v709 = vsel %vm666, %v568, 0.0
      %v710 = vadd.f32 %v708, %v709
      %v711 = vsel %vm666, %v573, 0.0
      %v712 = vadd.f32 %v710, %v711
      %v713 = vsel %vm666, %v578, 0.0
      %v714 = vadd.f32 %v712, %v713
      %v715 = vsel %vm666, %v583, 0.0
      %v716 = vadd.f32 %v714, %v715
      %v717 = vsel %vm666, %v588, 0.0
      %v718 = vadd.f32 %v716, %v717
      %v719 = vsel %vm666, %v593, 0.0
      %v720 = vadd.f32 %v718, %v719
      %v721 = vsel %vm666, %v598, 0.0
      %v722 = vadd.f32 %v720, %v721
      %v723 = vsel %vm666, %v603, 0.0
      %v724 = vadd.f32 %v722, %v723
      %v725 = vsel %vm666, %v608, 0.0
      %v726 = vadd.f32 %v724, %v725
      %v727 = vsel %vm666, %v613, 0.0
      %v728 = vadd.f32 %v726, %v727
      %v729 = vsel %vm666, %v618, 0.0
      %v730 = vadd.f32 %v728, %v729
      %v731 = vsel %vm666, %v623, 0.0
      %v732 = vadd.f32 %v730, %v731
      %v733 = vsel %vm666, %v628, 0.0
      %v734 = vadd.f32 %v732, %v733
      %v735 = vsel %vm666, %v633, 0.0
      %v736 = vadd.f32 %v734, %v735
      %v737 = vsel %vm666, %v638, 0.0
      %v738 = vadd.f32 %v736, %v737
      %v739 = vsel %vm666, %v643, 0.0
      %v740 = vadd.f32 %v738, %v739
      %v741 = vsel %vm666, %v648, 0.0
      %v742 = vadd.f32 %v740, %v741
      %v743 = vsel %vm666, %v653, 0.0
      %v744 = vadd.f32 %v742, %v743
      %v745 = vsel %vm666, %v658, 0.0
      %v746 = vadd.f32 %v744, %v745
      %v747 = vsel %vm666, %v663, 0.0
      %v748 = vadd.f32 %v746, %v747
      %v749 = vrot.slane %v748, 4
      %v750 = vadd.f32 %v748, %v749
      %v751 = vrot.slane %v750, 2
      %v752 = vadd.f32 %v750, %v751
      %v753 = vrot.slane %v752, 1
      %v754 = vadd.f32 %v752, %v753
      %v755 = vadd.f32 %v699, %v754
      %vm756 = vcmask 516096
      %757 = vst.msk [vmem:[%s6] sm:$0x1] %vm756, %v755
      %v758 = vld [vmem:[%s7] sm:$0x1]
      %v759 = vmul.f32 %v543, %v543
      %v760 = vmul.f32 %v548, %v548
      %v761 = vmul.f32 %v553, %v553
      %v762 = vmul.f32 %v558, %v558
      %v763 = vmul.f32 %v563, %v563
      %v764 = vmul.f32 %v568, %v568
      %v765 = vmul.f32 %v573, %v573
      %v766 = vmul.f32 %v578, %v578
      %v767 = vmul.f32 %v583, %v583
      %v768 = vmul.f32 %v588, %v588
      %v769 = vmul.f32 %v593, %v593
      %v770 = vmul.f32 %v598, %v598
      %v771 = vmul.f32 %v603, %v603
      %v772 = vmul.f32 %v608, %v608
      %v773 = vmul.f32 %v613, %v613
      %v774 = vmul.f32 %v618, %v618
      %v775 = vmul.f32 %v623, %v623
      %v776 = vmul.f32 %v628, %v628
      %v777 = vmul.f32 %v633, %v633
      %v778 = vmul.f32 %v638, %v638
      %v779 = vmul.f32 %v643, %v643
      %v780 = vmul.f32 %v648, %v648
      %v781 = vmul.f32 %v653, %v653
      %v782 = vmul.f32 %v658, %v658
      %v783 = vmul.f32 %v663, %v663
      %v784 = vsel %vm666, %v759, 0.0
      %v785 = vsel %vm666, %v760, 0.0
      %v786 = vadd.f32 %v784, %v785
      %v787 = vsel %vm666, %v761, 0.0
      %v788 = vadd.f32 %v786, %v787
      %v789 = vsel %vm666, %v762, 0.0
      %v790 = vadd.f32 %v788, %v789
      %v791 = vsel %vm666, %v763, 0.0
      %v792 = vadd.f32 %v790, %v791
      %v793 = vsel %vm666, %v764, 0.0
      %v794 = vadd.f32 %v792, %v793
      %v795 = vsel %vm666, %v765, 0.0
      %v796 = vadd.f32 %v794, %v795
      %v797 = vsel %vm666, %v766, 0.0
      %v798 = vadd.f32 %v796, %v797
      %v799 = vsel %vm666, %v767, 0.0
      %v800 = vadd.f32 %v798, %v799
      %v801 = vsel %vm666, %v768, 0.0
      %v802 = vadd.f32 %v800, %v801
      %v803 = vsel %vm666, %v769, 0.0
      %v804 = vadd.f32 %v802, %v803
      %v805 = vsel %vm666, %v770, 0.0
      %v806 = vadd.f32 %v804, %v805
      %v807 = vsel %vm666, %v771, 0.0
      %v808 = vadd.f32 %v806, %v807
      %v809 = vsel %vm666, %v772, 0.0
      %v810 = vadd.f32 %v808, %v809
      %v811 = vsel %vm666, %v773, 0.0
      %v812 = vadd.f32 %v810, %v811
      %v813 = vsel %vm666, %v774, 0.0
      %v814 = vadd.f32 %v812, %v813
      %v815 = vsel %vm666, %v775, 0.0
      %v816 = vadd.f32 %v814, %v815
      %v817 = vsel %vm666, %v776, 0.0
      %v818 = vadd.f32 %v816, %v817
      %v819 = vsel %vm666, %v777, 0.0
      %v820 = vadd.f32 %v818, %v819
      %v821 = vsel %vm666, %v778, 0.0
      %v822 = vadd.f32 %v820, %v821
      %v823 = vsel %vm666, %v779, 0.0
      %v824 = vadd.f32 %v822, %v823
      %v825 = vsel %vm666, %v780, 0.0
      %v826 = vadd.f32 %v824, %v825
      %v827 = vsel %vm666, %v781, 0.0
      %v828 = vadd.f32 %v826, %v827
      %v829 = vsel %vm666, %v782, 0.0
      %v830 = vadd.f32 %v828, %v829
      %v831 = vsel %vm666, %v783, 0.0
      %v832 = vadd.f32 %v830, %v831
      %v833 = vrot.slane %v832, 4
      %v834 = vadd.f32 %v832, %v833
      %v835 = vrot.slane %v834, 2
      %v836 = vadd.f32 %v834, %v835
      %v837 = vrot.slane %v836, 1
      %v838 = vadd.f32 %v836, %v837
      %v839 = vadd.f32 %v758, %v838
      %840 = vst.msk [vmem:[%s7] sm:$0x1] %vm756, %v839
      %s841 = smul.u32 25, %s19
      %p842 = scmp.lt.s32.totalorder %s841, 49
      %s843 = scalar_select %p842, %s841, 49
      %s844 = smul.addr %s843, 8
      %s845 = scalar_lea.vmem %s5, %s844
      // Predicated region
      $region45: #{spatial_bottleneck_block.9} parent=39 // pred_check
        %p846 = pneg %p147
      $region46: #{spatial_bottleneck_block.9} parent=39 // pred_check_branch
        %848 = sbr.rel (%p846) target = $region48
      $region47: #{spatial_bottleneck_block.9} parent=39 // pred_region
        %s849 = smul.u32 25, %s19
      $region48: #{spatial_bottleneck_block.9} parent=39 // pred_fallthru
        _
      // Predicated region
      $region49: #{spatial_bottleneck_block.9} parent=39 // pred_check
        %p850 = pneg %p168
      $region50: #{spatial_bottleneck_block.9} parent=39 // pred_check_branch
        %852 = sbr.rel (%p850) target = $region52
      $region51: #{spatial_bottleneck_block.9} parent=39 // pred_region
        _
      $region52: #{spatial_bottleneck_block.9} parent=39 // pred_fallthru
        _
      // Predicated region
      $region53: #{spatial_bottleneck_block.9} parent=39 // pred_check
        %p853 = pneg %p189
      $region54: #{spatial_bottleneck_block.9} parent=39 // pred_check_branch
        %855 = sbr.rel (%p853) target = $region56
      $region55: #{spatial_bottleneck_block.9} parent=39 // pred_region
        _
      $region56: #{spatial_bottleneck_block.9} parent=39 // pred_fallthru
        _
      // Predicated region
      $region57: #{spatial_bottleneck_block.9} parent=39 // pred_check
        %p856 = pneg %p168
      $region58: #{spatial_bottleneck_block.9} parent=39 // pred_check_branch
        %858 = sbr.rel (%p856) target = $region60
      $region59: #{spatial_bottleneck_block.9} parent=39 // pred_region
        _
      $region60: #{spatial_bottleneck_block.9} parent=39 // pred_fallthru
        _
      // Predicated region
      $region61: #{spatial_bottleneck_block.9} parent=39 // pred_check
        %p859 = pneg %p189
      $region62: #{spatial_bottleneck_block.9} parent=39 // pred_check_branch
        %861 = sbr.rel (%p859) target = $region64
      $region63: #{spatial_bottleneck_block.9} parent=39 // pred_region
        _
      $region64: #{spatial_bottleneck_block.9} parent=39 // pred_fallthru
        _
    $region40: #{spatial_bottleneck_block.9} parent=5 // pred_fallthru
      _
    %p862 = scmp.le.s32.totalorder 2, %s14
    // Predicated region
    $region65: #{spatial_bottleneck_block.9} parent=5 // pred_check
      %p863 = pneg %p862
    $region66: #{spatial_bottleneck_block.9} parent=5 // pred_check_branch
      %865 = sbr.rel (%p863) target = $region68
    $region67: #{spatial_bottleneck_block.9} parent=5 // pred_region
      %s866 = ssub.s32 %s14, 2
      // Predicated region
      $region69: #{spatial_bottleneck_block.9} parent=67 // pred_check
        %p867 = pneg %p153
      $region70: #{spatial_bottleneck_block.9} parent=67 // pred_check_branch
        %869 = sbr.rel (%p867) target = $region72
      $region71: #{spatial_bottleneck_block.9} parent=67 // pred_region
        %s870 = smul.u32 25, %s20
        %p871 = scmp.lt.s32.totalorder %s870, 49
        %s872 = scalar_select %p871, %s870, 49
        %s873 = smul.addr %s872, 8
        %s874 = scalar_lea.vmem %s5, %s873
      $region72: #{spatial_bottleneck_block.9} parent=67 // pred_fallthru
        _
    $region68: #{spatial_bottleneck_block.9} parent=5 // pred_fallthru
      _
  $region6: #{spatial_bottleneck_block.9} parent=0 // loop_footer
    %s18 = sadd.s32 1, %s14
  $region7: #{spatial_bottleneck_block.9} parent=0 // loop_footer_branch
    %13 = sbr.rel target = $region3
  $region8: #{spatial_bottleneck_block.9} parent=0 // loop_exit
    _

// kernel: spatial_bottleneck_block.8
$region0: #{spatial_bottleneck_block.8}
  #allocation0 [shape = 'u32[]', space=smem, size = 0x4, offset = 0x4, fixed_abs, tag = 'smem constant byte address 0x4 - core index']
  #allocation1 [shape = 'u32[144,128]{1,0:T(1,128)}', space=vmem, size = 0x12000, scoped, tag = 'internal scratch']
  %s0 = inlined_call_operand.vmem [shape: f32[16,25,48], index: 0, kind: input, shape index: {}]
  %s1 = inlined_call_operand.vmem [shape: f32[3,25,25], index: 1, kind: input, shape index: {}]
  %s2 = inlined_call_operand.vmem [shape: f32[16,25,16], index: 2, kind: output, shape index: {0}]
  %s3 = inlined_call_operand.vmem [shape: f32[1,16], index: 3, kind: output, shape index: {1}]
  %s4 = inlined_call_operand.vmem [shape: f32[1,16], index: 4, kind: output, shape index: {2}]
  %5 = xla_tuple %s2, %s3, %s4
  %s6 = sld [smem:[#allocation0]]
  $region61: #{spatial_bottleneck_block.8} parent=0
    _
  %s8 = ssub.s32 1, %s6
  %s9 = scalar_select 0, %s8, %s6
  loop: start=0, step=1, limit=6
  $region2: #{spatial_bottleneck_block.8} parent=0 // loop_pre_header
    _
  $region3: #{spatial_bottleneck_block.8} parent=0 // loop_header
    %s11 = sphi 0, %s15
    %p12 = scmp.ge.s32.totalorder %s11, 6
    %s21 = sphi 0, %s23
    %s24 = sphi 0, %s21
    %s25 = sphi 0, %s24
    %s41 = sphi 0, %s25
    %s45 = sphi 0, %s45
    %s47 = sphi 0, %s45
    %s48 = sphi 0, %s47
    %s62 = sphi 0, %s48
    %s68 = sphi 0, %s70
    %s71 = sphi 0, %s68
    %s72 = sphi 0, %s71
    %s88 = sphi 0, %s72
    %s92 = sphi 0, %s92
    %s94 = sphi 0, %s92
    %s95 = sphi 0, %s94
    %s109 = sphi 0, %s95
    %s113 = sphi 0, %s113
    %s115 = sphi 0, %s113
    %s116 = sphi 0, %s115
    %s130 = sphi 0, %s116
  $region4: #{spatial_bottleneck_block.8} parent=0 // loop_header_branch
    %14 = sbr.rel (%p12) target = $region8
  $region5: #{spatial_bottleneck_block.8} parent=0 // loop_body
    %s16 = ssub.s32 %s11, 1
    %s17 = ssub.s32 %s11, 2
    %s18 = sadd.s32 %s11, 1
    %s19 = ssub.s32 %s11, %s18
    %p20 = scmp.eq.s32.totalorder %s19, 0
    %s22 = sadd.s32 %s21, 1
    %s23 = scalar_select %p20, %s21, %s22
    %p26 = pneg %p20
    %p27 = scmp.eq.s32.totalorder %s11, 3
    %p28 = por %p26, %p27
    %p29 = scmp.ne.s32.totalorder %s21, %s24
    %p30 = scmp.eq.s32.totalorder %s11, 0
    %p31 = por %p29, %p30
    %p32 = scmp.ne.s32.totalorder %s21, %s24
    %p33 = scmp.eq.s32.totalorder %s16, 3
    %p34 = por %p32, %p33
    %p35 = scmp.ne.s32.totalorder %s24, %s25
    %p36 = scmp.eq.s32.totalorder %s16, 0
    %p37 = por %p35, %p36
    %p38 = scmp.ne.s32.totalorder %s24, %s25
    %p39 = scmp.eq.s32.totalorder %s17, 3
    %p40 = por %p38, %p39
    %p42 = scmp.ne.s32.totalorder %s25, %s41
    %p43 = scmp.eq.s32.totalorder %s17, 0
    %p44 = por %p42, %p43
    %s46 = sadd.s32 %s45, 1
    %p49 = scmp.eq.s32.totalorder %s11, 3
    %p50 = scmp.ne.s32.totalorder %s45, %s47
    %p51 = scmp.eq.s32.totalorder %s11, 0
    %p52 = por %p50, %p51
    %p53 = scmp.ne.s32.totalorder %s45, %s47
    %p54 = scmp.eq.s32.totalorder %s16, 3
    %p55 = por %p53, %p54
    %p56 = scmp.ne.s32.totalorder %s47, %s48
    %p57 = scmp.eq.s32.totalorder %s16, 0
    %p58 = por %p56, %p57
    %p59 = scmp.ne.s32.totalorder %s47, %s48
    %p60 = scmp.eq.s32.totalorder %s17, 3
    %p61 = por %p59, %p60
    %p63 = scmp.ne.s32.totalorder %s48, %s62
    %p64 = scmp.eq.s32.totalorder %s17, 0
    %p65 = por %p63, %p64
    %s66 = ssub.s32 %s11, %s18
    %p67 = scmp.eq.s32.totalorder %s66, 0
    %s69 = sadd.s32 %s68, 1
    %s70 = scalar_select %p67, %s68, %s69
    %p73 = pneg %p67
    %p74 = scmp.eq.s32.totalorder %s11, 3
    %p75 = por %p73, %p74
    %p76 = scmp.ne.s32.totalorder %s68, %s71
    %p77 = scmp.eq.s32.totalorder %s11, 0
    %p78 = por %p76, %p77
    %p79 = scmp.ne.s32.totalorder %s68, %s71
    %p80 = scmp.eq.s32.totalorder %s16, 3
    %p81 = por %p79, %p80
    %p82 = scmp.ne.s32.totalorder %s71, %s72
    %p83 = scmp.eq.s32.totalorder %s16, 0
    %p84 = por %p82, %p83
    %p85 = scmp.ne.s32.totalorder %s71, %s72
    %p86 = scmp.eq.s32.totalorder %s17, 3
    %p87 = por %p85, %p86
    %p89 = scmp.ne.s32.totalorder %s72, %s88
    %p90 = scmp.eq.s32.totalorder %s17, 0
    %p91 = por %p89, %p90
    %s93 = sadd.s32 %s92, 1
    %p96 = scmp.eq.s32.totalorder %s11, 3
    %p97 = scmp.ne.s32.totalorder %s92, %s94
    %p98 = scmp.eq.s32.totalorder %s11, 0
    %p99 = por %p97, %p98
    %p100 = scmp.ne.s32.totalorder %s92, %s94
    %p101 = scmp.eq.s32.totalorder %s16, 3
    %p102 = por %p100, %p101
    %p103 = scmp.ne.s32.totalorder %s94, %s95
    %p104 = scmp.eq.s32.totalorder %s16, 0
    %p105 = por %p103, %p104
    %p106 = scmp.ne.s32.totalorder %s94, %s95
    %p107 = scmp.eq.s32.totalorder %s17, 3
    %p108 = por %p106, %p107
    %p110 = scmp.ne.s32.totalorder %s95, %s109
    %p111 = scmp.eq.s32.totalorder %s17, 0
    %p112 = por %p110, %p111
    %s114 = sadd.s32 %s113, 1
    %p117 = scmp.eq.s32.totalorder %s11, 3
    %p118 = scmp.ne.s32.totalorder %s113, %s115
    %p119 = scmp.eq.s32.totalorder %s11, 0
    %p120 = por %p118, %p119
    %p121 = scmp.ne.s32.totalorder %s113, %s115
    %p122 = scmp.eq.s32.totalorder %s16, 3
    %p123 = por %p121, %p122
    %p124 = scmp.ne.s32.totalorder %s115, %s116
    %p125 = scmp.eq.s32.totalorder %s16, 0
    %p126 = por %p124, %p125
    %p127 = scmp.ne.s32.totalorder %s115, %s116
    %p128 = scmp.eq.s32.totalorder %s17, 3
    %p129 = por %p127, %p128
    %p131 = scmp.ne.s32.totalorder %s116, %s130
    %p132 = scmp.eq.s32.totalorder %s17, 0
    %p133 = por %p131, %p132
    %p134 = scmp.le.s32.totalorder 1, %s11
    %p135 = scmp.lt.s32.totalorder %s11, 5
    %p136 = pnand %p134, %p135
    %p137 = pneg %p136
    // Predicated region
    $region9: #{spatial_bottleneck_block.8} parent=5 // pred_check
      _
    $region10: #{spatial_bottleneck_block.8} parent=5 // pred_check_branch
      %139 = sbr.rel (%p136) target = $region12
    $region11: #{spatial_bottleneck_block.8} parent=5 // pred_region
      %s140 = ssub.s32 %s11, 1
      // Predicated region
      $region13: #{spatial_bottleneck_block.8} parent=11 // pred_check
        %p141 = pneg %p58
      $region14: #{spatial_bottleneck_block.8} parent=11 // pred_check_branch
        %143 = sbr.rel (%p141) target = $region16
      $region15: #{spatial_bottleneck_block.8} parent=11 // pred_region
        _
      $region16: #{spatial_bottleneck_block.8} parent=11 // pred_fallthru
        _
    $region12: #{spatial_bottleneck_block.8} parent=5 // pred_fallthru
      _
    %p144 = scmp.lt.s32.totalorder %s11, 4
    // Predicated region
    $region17: #{spatial_bottleneck_block.8} parent=5 // pred_check
      %p145 = pneg %p144
    $region18: #{spatial_bottleneck_block.8} parent=5 // pred_check_branch
      %147 = sbr.rel (%p145) target = $region20
    $region19: #{spatial_bottleneck_block.8} parent=5 // pred_region
      // Predicated region
      $region21: #{spatial_bottleneck_block.8} parent=19 // pred_check
        %p148 = pneg %p31
      $region22: #{spatial_bottleneck_block.8} parent=19 // pred_check_branch
        %150 = sbr.rel (%p148) target = $region24
      $region23: #{spatial_bottleneck_block.8} parent=19 // pred_region
        %s151 = smul.u32 4, %s11
        %p152 = scmp.lt.s32.totalorder %s151, 15
        %s153 = scalar_select %p152, %s151, 15
        %s154 = smul.addr %s153, 4
        %s155 = smul.addr %s154, 8
        %s156 = scalar_lea.vmem %s0, %s155
        %s157 = smul.u32 4, %s11
      $region24: #{spatial_bottleneck_block.8} parent=19 // pred_fallthru
        _
    $region20: #{spatial_bottleneck_block.8} parent=5 // pred_fallthru
      _
    %p158 = scmp.le.s32.totalorder 1, %s11
    %p159 = scmp.lt.s32.totalorder %s11, 5
    %p160 = pnand %p158, %p159
    %p161 = pneg %p160
    // Predicated region
    $region25: #{spatial_bottleneck_block.8} parent=5 // pred_check
      _
    $region26: #{spatial_bottleneck_block.8} parent=5 // pred_check_branch
      %163 = sbr.rel (%p160) target = $region28
    $region27: #{spatial_bottleneck_block.8} parent=5 // pred_region
      %s164 = ssub.s32 %s11, 1
      %s165 = smul.u32 4, %s16
      %p166 = scmp.lt.s32.totalorder %s165, 15
      %s167 = scalar_select %p166, %s165, 15
      %s168 = smul.addr %s167, 4
      %s169 = smul.addr %s168, 8
      %s170 = scalar_lea.vmem %s0, %s169
      %p171 = pneg %p37
      %p172 = pneg %p34
      %p173 = pneg %p58
      %p174 = pneg %p55
      %p175 = pneg %p84
      %p176 = pneg %p81
      %s177 = smul.u32 4, %s16
      %p178 = scmp.lt.s32.totalorder %s177, 15
      %s179 = scalar_select %p178, %s177, 15
      %s180 = smul.addr %s179, 4
      %s181 = smul.addr %s180, 8
      %s182 = scalar_lea.vmem %s2, %s181
      %p183 = pneg %p105
      %p184 = pneg %p102
      %p185 = pneg %p126
      %p186 = pneg %p123
      %s187 = smul.u32 4, %s16
      %p188 = scmp.lt.s32.totalorder %s187, 15
      %s189 = scalar_select %p188, %s187, 15
      %s190 = smul.addr %s189, 4
      %s191 = smul.addr %s190, 8
      %s192 = scalar_lea.vmem %s0, %s191
      %s193 = smul.u32 4, %s16
      %s194 = smul.u32 4, %s16
      %p195 = scmp.lt.s32.totalorder %s194, 15
      %s196 = scalar_select %p195, %s194, 15
      %s197 = smul.addr %s196, 4
      %s198 = smul.addr %s197, 8
      %s199 = scalar_lea.vmem %s2, %s198
      %s200 = smul.u32 4, %s16
      %p201 = scmp.eq.s32.totalorder %s16, 0
      // Predicated region
      $region29: #{spatial_bottleneck_block.8} parent=27 // pred_check
        %p202 = pneg %p201
      $region30: #{spatial_bottleneck_block.8} parent=27 // pred_check_branch
        %204 = sbr.rel (%p202) target = $region32
      $region31: #{spatial_bottleneck_block.8} parent=27 // pred_region
        %vm205 = vcmask 122880
        %206 = vst.msk [vmem:[%s3] sm:$0x1] %vm205, 0.0
        %207 = vst.msk [vmem:[%s4] sm:$0x1] %vm205, 0.0
      $region32: #{spatial_bottleneck_block.8} parent=27 // pred_fallthru
        _
      %v208 = vld [vmem:[%s1] sm:$0xff]
      %v209 = vld [vmem:[%s1 + $0x8] sm:$0xff]
      %v210 = vld [vmem:[%s1 + $0x10] sm:$0xff]
      %v211 = vld [vmem:[%s1 + $0x18] sm:$0x1]
      %v212 = vld [vmem:[%s1 + $0x20] sm:$0xff]
      %v213 = vld [vmem:[%s1 + $0x28] sm:$0xff]
      %v214 = vld [vmem:[%s1 + $0x30] sm:$0xff]
      %v215 = vld [vmem:[%s1 + $0x38] sm:$0x1]
      %v216 = vld [vmem:[%s1 + $0x40] sm:$0xff]
      %v217 = vld [vmem:[%s1 + $0x48] sm:$0xff]
      %v218 = vld [vmem:[%s1 + $0x50] sm:$0xff]
      %v219 = vld [vmem:[%s1 + $0x58] sm:$0x1]
      %v220 = vld [vmem:[%s192] sm:$0xff]
      %v221 = vld [vmem:[%s192 + $0x8] sm:$0xff]
      %v222 = vld [vmem:[%s192 + $0x10] sm:$0xff]
      %v223 = vld [vmem:[%s192 + $0x18] sm:$0x1]
      %v224 = vld [vmem:[%s192 + $0x20] sm:$0xff]
      %v225 = vld [vmem:[%s192 + $0x28] sm:$0xff]
      %v226 = vld [vmem:[%s192 + $0x30] sm:$0xff]
      %v227 = vld [vmem:[%s192 + $0x38] sm:$0x1]
      %v228 = vld [vmem:[%s192 + $0x40] sm:$0xff]
      %v229 = vld [vmem:[%s192 + $0x48] sm:$0xff]
      %v230 = vld [vmem:[%s192 + $0x50] sm:$0xff]
      %v231 = vld [vmem:[%s192 + $0x58] sm:$0x1]
      %v232 = vld [vmem:[%s192 + $0x60] sm:$0xff]
      %v233 = vld [vmem:[%s192 + $0x68] sm:$0xff]
      %v234 = vld [vmem:[%s192 + $0x70] sm:$0xff]
      %v235 = vld [vmem:[%s192 + $0x78] sm:$0x1]
      %240 = vrot.lane.b32.xlu0 %v220, 112
      %v241 = vpop.permute.xlu0 %240
      %242 = vrot.lane.b32.xlu0 %v221, 112
      %v243 = vpop.permute.xlu0 %242
      %244 = vrot.lane.b32.xlu0 %v222, 112
      %v245 = vpop.permute.xlu0 %244
      %246 = vrot.lane.b32.xlu0 %v223, 112
      %v247 = vpop.permute.xlu0 %246
      %vm251 = vcmask 203776
      %v253 = vsel %vm251, %v212, 0
      %v256 = vsel %vm251, %v213, 0
      %v259 = vsel %vm251, %v214, 0
      %v262 = vsel %vm251, %v215, 0
      %vm264 = vcmask 1040384
      %v265 = vsel %vm264, %v247, 0
      %267 = vmatprep.subr.mxu0 0.0
      %268 = vmatpush1.msra.mxu0 0.0
      %269 = vmatprep.subr.mxu0 0.0
      %270 = vmatpush1.msra.mxu0 0.0
      %271 = vmatprep.subr.mxu0 0.0
      %272 = vmatpush1.msra.mxu0 0.0
      %273 = vmatprep.subr.mxu0 0.0
      %274 = vmatpush1.msra.mxu0 0.0
      %275 = vmatprep.subr.mxu0 0.0
      %276 = vmatpush1.msra.mxu0 0.0
      %277 = vmatprep.subr.mxu0 0.0
      %278 = vmatpush1.msra.mxu0 0.0
      %279 = vmatprep.subr.mxu0 0.0
      %280 = vmatpush1.msra.mxu0 0.0
      %281 = vmatprep.subr.mxu0 0.0
      %282 = vmatpush1.msra.mxu0 0.0
      %283 = vmatprep.subr.mxu0 0.0
      %284 = vmatpush1.msra.mxu0 0.0
      %285 = vmatprep.subr.mxu0 0.0
      %286 = vmatpush1.msra.mxu0 0.0
      %287 = vmatprep.subr.mxu0 0.0
      %288 = vmatpush1.msra.mxu0 0.0
      %289 = vmatprep.subr.mxu0 0.0
      %290 = vmatpush1.msra.mxu0 0.0
      %291 = vmatprep.subr.mxu0 0.0
      %292 = vmatpush1.msra.mxu0 %v265
      %293 = vmatprep.subr.mxu0 0.0
      %294 = vmatpush1.msra.mxu0 %v245
      %295 = vmatprep.subr.mxu0 0.0
      %296 = vmatpush1.msra.mxu0 %v243
      %297 = vmatprep.subr.mxu0 0.0
      %298 = vmatpush1.msra.mxu0 %v241
      %299 = vmatprep.subr.mxu0 0.0
      %300 = vmatpush2.msra.mxu0 0.0
      %301 = vmatprep.subr.mxu0 0.0
      %302 = vmatpush2.msra.mxu0 0.0
      %303 = vmatprep.subr.mxu0 0.0
      %304 = vmatpush2.msra.mxu0 0.0
      %305 = vmatprep.subr.mxu0 0.0
      %306 = vmatpush2.msra.mxu0 0.0
      %307 = vmatprep.subr.mxu0 0.0
      %308 = vmatpush2.msra.mxu0 0.0
      %309 = vmatprep.subr.mxu0 0.0
      %310 = vmatpush2.msra.mxu0 0.0
      %311 = vmatprep.subr.mxu0 0.0
      %312 = vmatpush2.msra.mxu0 0.0
      %313 = vmatprep.subr.mxu0 0.0
      %314 = vmatpush2.msra.mxu0 0.0
      %315 = vmatprep.subr.mxu0 0.0
      %316 = vmatpush2.msra.mxu0 0.0
      %317 = vmatprep.subr.mxu0 0.0
      %318 = vmatpush2.msra.mxu0 0.0
      %319 = vmatprep.subr.mxu0 0.0
      %320 = vmatpush2.msra.mxu0 0.0
      %321 = vmatprep.subr.mxu0 0.0
      %322 = vmatpush2.msra.mxu0 0.0
      %323 = vmatprep.subr.mxu0 0.0
      %324 = vmatpush2.msra.mxu0 0.0
      %325 = vmatprep.subr.mxu0 0.0
      %326 = vmatpush2.msra.mxu0 0.0
      %327 = vmatprep.subr.mxu0 0.0
      %328 = vmatpush2.msra.mxu0 0.0
      %329 = vmatprep.subr.mxu0 0.0
      %330 = vmatpush2.msra.mxu0 0.0
      %331 = vmatprep.mubr.f32.mxu0 0.0
      %332 = vmatmul.mubr.f32.gmra.mxu0 %v253
      %v333 = vpop.f32.mrf.mxu0
      %v334 = vadd.f32 0.0, %v333
      %v335 = vpop.f32.mrf.mxu0
      %336 = vmatprep.mubr.f32.mxu0 0.0
      %337 = vmatmul.mubr.f32.gmra.mxu0 %v256
      %v338 = vpop.f32.mrf.mxu0
      %v339 = vadd.f32 0.0, %v338
      %v340 = vpop.f32.mrf.mxu0
      %341 = vmatprep.mubr.f32.mxu0 0.0
      %342 = vmatmul.mubr.f32.gmra.mxu0 %v259
      %v343 = vpop.f32.mrf.mxu0
      %v344 = vadd.f32 0.0, %v343
      %v345 = vpop.f32.mrf.mxu0
      %346 = vmatprep.mubr.f32.mxu0 0.0
      %347 = vmatmul.mubr.f32.gmra.mxu0 %v262
      %v348 = vpop.f32.mrf.mxu0
      %v349 = vadd.f32 0.0, %v348
      %v350 = vpop.f32.mrf.mxu0
      %351 = vdwg.mxu0
      %v353 = vsel %vm251, %v208, 0
      %v356 = vsel %vm251, %v209, 0
      %v359 = vsel %vm251, %v210, 0
      %v362 = vsel %vm251, %v211, 0
      %v364 = vsel %vm264, %v223, 0
      %366 = vmatprep.subr.mxu0 0.0
      %367 = vmatpush1.msra.mxu0 0.0
      %368 = vmatprep.subr.mxu0 0.0
      %369 = vmatpush1.msra.mxu0 0.0
      %370 = vmatprep.subr.mxu0 0.0
      %371 = vmatpush1.msra.mxu0 0.0
      %372 = vmatprep.subr.mxu0 0.0
      %373 = vmatpush1.msra.mxu0 0.0
      %374 = vmatprep.subr.mxu0 0.0
      %375 = vmatpush1.msra.mxu0 0.0
      %376 = vmatprep.subr.mxu0 0.0
      %377 = vmatpush1.msra.mxu0 0.0
      %378 = vmatprep.subr.mxu0 0.0
      %379 = vmatpush1.msra.mxu0 0.0
      %380 = vmatprep.subr.mxu0 0.0
      %381 = vmatpush1.msra.mxu0 0.0
      %382 = vmatprep.subr.mxu0 0.0
      %383 = vmatpush1.msra.mxu0 0.0
      %384 = vmatprep.subr.mxu0 0.0
      %385 = vmatpush1.msra.mxu0 0.0
      %386 = vmatprep.subr.mxu0 0.0
      %387 = vmatpush1.msra.mxu0 0.0
      %388 = vmatprep.subr.mxu0 0.0
      %389 = vmatpush1.msra.mxu0 0.0
      %390 = vmatprep.subr.mxu0 0.0
      %391 = vmatpush1.msra.mxu0 %v364
      %392 = vmatprep.subr.mxu0 0.0
      %393 = vmatpush1.msra.mxu0 %v222
      %394 = vmatprep.subr.mxu0 0.0
      %395 = vmatpush1.msra.mxu0 %v221
      %396 = vmatprep.subr.mxu0 0.0
      %397 = vmatpush1.msra.mxu0 %v220
      %398 = vmatprep.subr.mxu0 0.0
      %399 = vmatpush2.msra.mxu0 0.0
      %400 = vmatprep.subr.mxu0 0.0
      %401 = vmatpush2.msra.mxu0 0.0
      %402 = vmatprep.subr.mxu0 0.0
      %403 = vmatpush2.msra.mxu0 0.0
      %404 = vmatprep.subr.mxu0 0.0
      %405 = vmatpush2.msra.mxu0 0.0
      %406 = vmatprep.subr.mxu0 0.0
      %407 = vmatpush2.msra.mxu0 0.0
      %408 = vmatprep.subr.mxu0 0.0
      %409 = vmatpush2.msra.mxu0 0.0
      %410 = vmatprep.subr.mxu0 0.0
      %411 = vmatpush2.msra.mxu0 0.0
      %412 = vmatprep.subr.mxu0 0.0
      %413 = vmatpush2.msra.mxu0 0.0
      %414 = vmatprep.subr.mxu0 0.0
      %415 = vmatpush2.msra.mxu0 0.0
      %416 = vmatprep.subr.mxu0 0.0
      %417 = vmatpush2.msra.mxu0 0.0
      %418 = vmatprep.subr.mxu0 0.0
      %419 = vmatpush2.msra.mxu0 0.0
      %420 = vmatprep.subr.mxu0 0.0
      %421 = vmatpush2.msra.mxu0 0.0
      %422 = vmatprep.subr.mxu0 0.0
      %423 = vmatpush2.msra.mxu0 0.0
      %424 = vmatprep.subr.mxu0 0.0
      %425 = vmatpush2.msra.mxu0 0.0
      %426 = vmatprep.subr.mxu0 0.0
      %427 = vmatpush2.msra.mxu0 0.0
      %428 = vmatprep.subr.mxu0 0.0
      %429 = vmatpush2.msra.mxu0 0.0
      %430 = vmatprep.mubr.f32.mxu0 0.0
      %431 = vmatmul.mubr.f32.gmra.mxu0 %v353
      %v432 = vpop.f32.mrf.mxu0
      %v433 = vadd.f32 %v334, %v432
      %v434 = vpop.f32.mrf.mxu0
      %435 = vmatprep.mubr.f32.mxu0 0.0
      %436 = vmatmul.mubr.f32.gmra.mxu0 %v356
      %v437 = vpop.f32.mrf.mxu0
      %v438 = vadd.f32 %v339, %v437
      %v439 = vpop.f32.mrf.mxu0
      %440 = vmatprep.mubr.f32.mxu0 0.0
      %441 = vmatmul.mubr.f32.gmra.mxu0 %v359
      %v442 = vpop.f32.mrf.mxu0
      %v443 = vadd.f32 %v344, %v442
      %v444 = vpop.f32.mrf.mxu0
      %445 = vmatprep.mubr.f32.mxu0 0.0
      %446 = vmatmul.mubr.f32.gmra.mxu0 %v362
      %v447 = vpop.f32.mrf.mxu0
      %v448 = vadd.f32 %v349, %v447
      %v449 = vpop.f32.mrf.mxu0
      %450 = vdwg.mxu0
      %451 = vrot.lane.b32.xlu0 %v220, 96
      %v452 = vpop.permute.xlu0 %451
      %453 = vrot.lane.b32.xlu0 %v221, 96
      %v454 = vpop.permute.xlu0 %453
      %455 = vrot.lane.b32.xlu0 %v222, 96
      %v456 = vpop.permute.xlu0 %455
      %457 = vrot.lane.b32.xlu0 %v223, 96
      %v458 = vpop.permute.xlu0 %457
      %v463 = vsel %vm251, %v216, 0
      %v466 = vsel %vm251, %v217, 0
      %v469 = vsel %vm251, %v218, 0
      %v472 = vsel %vm251, %v219, 0
      %v474 = vsel %vm264, %v458, 0
      %476 = vmatprep.subr.mxu0 0.0
      %477 = vmatpush1.msra.mxu0 0.0
      %478 = vmatprep.subr.mxu0 0.0
      %479 = vmatpush1.msra.mxu0 0.0
      %480 = vmatprep.subr.mxu0 0.0
      %481 = vmatpush1.msra.mxu0 0.0
      %482 = vmatprep.subr.mxu0 0.0
      %483 = vmatpush1.msra.mxu0 0.0
      %484 = vmatprep.subr.mxu0 0.0
      %485 = vmatpush1.msra.mxu0 0.0
      %486 = vmatprep.subr.mxu0 0.0
      %487 = vmatpush1.msra.mxu0 0.0
      %488 = vmatprep.subr.mxu0 0.0
      %489 = vmatpush1.msra.mxu0 0.0
      %490 = vmatprep.subr.mxu0 0.0
      %491 = vmatpush1.msra.mxu0 0.0
      %492 = vmatprep.subr.mxu0 0.0
      %493 = vmatpush1.msra.mxu0 0.0
      %494 = vmatprep.subr.mxu0 0.0
      %495 = vmatpush1.msra.mxu0 0.0
      %496 = vmatprep.subr.mxu0 0.0
      %497 = vmatpush1.msra.mxu0 0.0
      %498 = vmatprep.subr.mxu0 0.0
      %499 = vmatpush1.msra.mxu0 0.0
      %500 = vmatprep.subr.mxu0 0.0
      %501 = vmatpush1.msra.mxu0 %v474
      %502 = vmatprep.subr.mxu0 0.0
      %503 = vmatpush1.msra.mxu0 %v456
      %504 = vmatprep.subr.mxu0 0.0
      %505 = vmatpush1.msra.mxu0 %v454
      %506 = vmatprep.subr.mxu0 0.0
      %507 = vmatpush1.msra.mxu0 %v452
      %508 = vmatprep.subr.mxu0 0.0
      %509 = vmatpush2.msra.mxu0 0.0
      %510 = vmatprep.subr.mxu0 0.0
      %511 = vmatpush2.msra.mxu0 0.0
      %512 = vmatprep.subr.mxu0 0.0
      %513 = vmatpush2.msra.mxu0 0.0
      %514 = vmatprep.subr.mxu0 0.0
      %515 = vmatpush2.msra.mxu0 0.0
      %516 = vmatprep.subr.mxu0 0.0
      %517 = vmatpush2.msra.mxu0 0.0
      %518 = vmatprep.subr.mxu0 0.0
      %519 = vmatpush2.msra.mxu0 0.0
      %520 = vmatprep.subr.mxu0 0.0
      %521 = vmatpush2.msra.mxu0 0.0
      %522 = vmatprep.subr.mxu0 0.0
      %523 = vmatpush2.msra.mxu0 0.0
      %524 = vmatprep.subr.mxu0 0.0
      %525 = vmatpush2.msra.mxu0 0.0
      %526 = vmatprep.subr.mxu0 0.0
      %527 = vmatpush2.msra.mxu0 0.0
      %528 = vmatprep.subr.mxu0 0.0
      %529 = vmatpush2.msra.mxu0 0.0
      %530 = vmatprep.subr.mxu0 0.0
      %531 = vmatpush2.msra.mxu0 0.0
      %532 = vmatprep.subr.mxu0 0.0
      %533 = vmatpush2.msra.mxu0 0.0
      %534 = vmatprep.subr.mxu0 0.0
      %535 = vmatpush2.msra.mxu0 0.0
      %536 = vmatprep.subr.mxu0 0.0
      %537 = vmatpush2.msra.mxu0 0.0
      %538 = vmatprep.subr.mxu0 0.0
      %539 = vmatpush2.msra.mxu0 0.0
      %540 = vmatprep.mubr.f32.mxu0 0.0
      %541 = vmatmul.mubr.f32.gmra.mxu0 %v463
      %v542 = vpop.f32.mrf.mxu0
      %v543 = vadd.f32 0.0, %v542
      %v544 = vpop.f32.mrf.mxu0
      %545 = vmatprep.mubr.f32.mxu0 0.0
      %546 = vmatmul.mubr.f32.gmra.mxu0 %v466
      %v547 = vpop.f32.mrf.mxu0
      %v548 = vadd.f32 0.0, %v547
      %v549 = vpop.f32.mrf.mxu0
      %550 = vmatprep.mubr.f32.mxu0 0.0
      %551 = vmatmul.mubr.f32.gmra.mxu0 %v469
      %v552 = vpop.f32.mrf.mxu0
      %v553 = vadd.f32 0.0, %v552
      %v554 = vpop.f32.mrf.mxu0
      %555 = vmatprep.mubr.f32.mxu0 0.0
      %556 = vmatmul.mubr.f32.gmra.mxu0 %v472
      %v557 = vpop.f32.mrf.mxu0
      %v558 = vadd.f32 0.0, %v557
      %v559 = vpop.f32.mrf.mxu0
      %560 = vdwg.mxu0
      %v561 = vadd.f32 %v433, %v543
      %v562 = vadd.f32 %v438, %v548
      %v563 = vadd.f32 %v443, %v553
      %v564 = vadd.f32 %v448, %v558
      %vm565 = vcmask 130048
      %566 = vst.msk [vmem:[%s199] sm:$0xff] %vm565, %v561
      %567 = vst.msk [vmem:[%s199 + $0x8] sm:$0xff] %vm565, %v562
      %568 = vst.msk [vmem:[%s199 + $0x10] sm:$0xff] %vm565, %v563
      %vm569 = vcmask 122880
      %570 = vst.msk [vmem:[%s199 + $0x18] sm:$0x1] %vm569, %v564
      %v571 = vsel %vm565, %v561, 0.0
      %v572 = vsel %vm565, %v562, 0.0
      %v573 = vadd.f32 %v571, %v572
      %v574 = vsel %vm565, %v563, 0.0
      %v575 = vadd.f32 %v573, %v574
      %v576 = vsel %vm569, %v564, 0.0
      %v577 = vadd.f32 %v575, %v576
      %v578 = vrot.slane %v577, 4
      %v579 = vadd.f32 %v577, %v578
      %v580 = vrot.slane %v579, 2
      %v581 = vadd.f32 %v579, %v580
      %v582 = vrot.slane %v581, 1
      %v583 = vadd.f32 %v581, %v582
      %v584 = vadd.f32 %v583, 0.0
      %v585 = vmul.f32 %v561, %v561
      %v586 = vmul.f32 %v562, %v562
      %v587 = vmul.f32 %v563, %v563
      %v588 = vmul.f32 %v564, %v564
      %v589 = vsel %vm565, %v585, 0.0
      %v590 = vsel %vm565, %v586, 0.0
      %v591 = vadd.f32 %v589, %v590
      %v592 = vsel %vm565, %v587, 0.0
      %v593 = vadd.f32 %v591, %v592
      %v594 = vsel %vm569, %v588, 0.0
      %v595 = vadd.f32 %v593, %v594
      %v596 = vrot.slane %v595, 4
      %v597 = vadd.f32 %v595, %v596
      %v598 = vrot.slane %v597, 2
      %v599 = vadd.f32 %v597, %v598
      %v600 = vrot.slane %v599, 1
      %v601 = vadd.f32 %v599, %v600
      %v602 = vadd.f32 %v601, 0.0
      %607 = vrot.lane.b32.xlu0 %v224, 112
      %v608 = vpop.permute.xlu0 %607
      %609 = vrot.lane.b32.xlu0 %v225, 112
      %v610 = vpop.permute.xlu0 %609
      %611 = vrot.lane.b32.xlu0 %v226, 112
      %v612 = vpop.permute.xlu0 %611
      %613 = vrot.lane.b32.xlu0 %v227, 112
      %v614 = vpop.permute.xlu0 %613
      %v618 = vsel %vm264, %v614, 0
      %620 = vmatprep.subr.mxu0 0.0
      %621 = vmatpush1.msra.mxu0 0.0
      %622 = vmatprep.subr.mxu0 0.0
      %623 = vmatpush1.msra.mxu0 0.0
      %624 = vmatprep.subr.mxu0 0.0
      %625 = vmatpush1.msra.mxu0 0.0
      %626 = vmatprep.subr.mxu0 0.0
      %627 = vmatpush1.msra.mxu0 0.0
      %628 = vmatprep.subr.mxu0 0.0
      %629 = vmatpush1.msra.mxu0 0.0
      %630 = vmatprep.subr.mxu0 0.0
      %631 = vmatpush1.msra.mxu0 0.0
      %632 = vmatprep.subr.mxu0 0.0
      %633 = vmatpush1.msra.mxu0 0.0
      %634 = vmatprep.subr.mxu0 0.0
      %635 = vmatpush1.msra.mxu0 0.0
      %636 = vmatprep.subr.mxu0 0.0
      %637 = vmatpush1.msra.mxu0 0.0
      %638 = vmatprep.subr.mxu0 0.0
      %639 = vmatpush1.msra.mxu0 0.0
      %640 = vmatprep.subr.mxu0 0.0
      %641 = vmatpush1.msra.mxu0 0.0
      %642 = vmatprep.subr.mxu0 0.0
      %643 = vmatpush1.msra.mxu0 0.0
      %644 = vmatprep.subr.mxu0 0.0
      %645 = vmatpush1.msra.mxu0 %v618
      %646 = vmatprep.subr.mxu0 0.0
      %647 = vmatpush1.msra.mxu0 %v612
      %648 = vmatprep.subr.mxu0 0.0
      %649 = vmatpush1.msra.mxu0 %v610
      %650 = vmatprep.subr.mxu0 0.0
      %651 = vmatpush1.msra.mxu0 %v608
      %652 = vmatprep.subr.mxu0 0.0
      %653 = vmatpush2.msra.mxu0 0.0
      %654 = vmatprep.subr.mxu0 0.0
      %655 = vmatpush2.msra.mxu0 0.0
      %656 = vmatprep.subr.mxu0 0.0
      %657 = vmatpush2.msra.mxu0 0.0
      %658 = vmatprep.subr.mxu0 0.0
      %659 = vmatpush2.msra.mxu0 0.0
      %660 = vmatprep.subr.mxu0 0.0
      %661 = vmatpush2.msra.mxu0 0.0
      %662 = vmatprep.subr.mxu0 0.0
      %663 = vmatpush2.msra.mxu0 0.0
      %664 = vmatprep.subr.mxu0 0.0
      %665 = vmatpush2.msra.mxu0 0.0
      %666 = vmatprep.subr.mxu0 0.0
      %667 = vmatpush2.msra.mxu0 0.0
      %668 = vmatprep.subr.mxu0 0.0
      %669 = vmatpush2.msra.mxu0 0.0
      %670 = vmatprep.subr.mxu0 0.0
      %671 = vmatpush2.msra.mxu0 0.0
      %672 = vmatprep.subr.mxu0 0.0
      %673 = vmatpush2.msra.mxu0 0.0
      %674 = vmatprep.subr.mxu0 0.0
      %675 = vmatpush2.msra.mxu0 0.0
      %676 = vmatprep.subr.mxu0 0.0
      %677 = vmatpush2.msra.mxu0 0.0
      %678 = vmatprep.subr.mxu0 0.0
      %679 = vmatpush2.msra.mxu0 0.0
      %680 = vmatprep.subr.mxu0 0.0
      %681 = vmatpush2.msra.mxu0 0.0
      %682 = vmatprep.subr.mxu0 0.0
      %683 = vmatpush2.msra.mxu0 0.0
      %684 = vmatprep.mubr.f32.mxu0 0.0
      %685 = vmatmul.mubr.f32.gmra.mxu0 %v253
      %v686 = vpop.f32.mrf.mxu0
      %v687 = vadd.f32 0.0, %v686
      %v688 = vpop.f32.mrf.mxu0
      %689 = vmatprep.mubr.f32.mxu0 0.0
      %690 = vmatmul.mubr.f32.gmra.mxu0 %v256
      %v691 = vpop.f32.mrf.mxu0
      %v692 = vadd.f32 0.0, %v691
      %v693 = vpop.f32.mrf.mxu0
      %694 = vmatprep.mubr.f32.mxu0 0.0
      %695 = vmatmul.mubr.f32.gmra.mxu0 %v259
      %v696 = vpop.f32.mrf.mxu0
      %v697 = vadd.f32 0.0, %v696
      %v698 = vpop.f32.mrf.mxu0
      %699 = vmatprep.mubr.f32.mxu0 0.0
      %700 = vmatmul.mubr.f32.gmra.mxu0 %v262
      %v701 = vpop.f32.mrf.mxu0
      %v702 = vadd.f32 0.0, %v701
      %v703 = vpop.f32.mrf.mxu0
      %704 = vdwg.mxu0
      %v705 = vsel %vm264, %v227, 0
      %707 = vmatprep.subr.mxu0 0.0
      %708 = vmatpush1.msra.mxu0 0.0
      %709 = vmatprep.subr.mxu0 0.0
      %710 = vmatpush1.msra.mxu0 0.0
      %711 = vmatprep.subr.mxu0 0.0
      %712 = vmatpush1.msra.mxu0 0.0
      %713 = vmatprep.subr.mxu0 0.0
      %714 = vmatpush1.msra.mxu0 0.0
      %715 = vmatprep.subr.mxu0 0.0
      %716 = vmatpush1.msra.mxu0 0.0
      %717 = vmatprep.subr.mxu0 0.0
      %718 = vmatpush1.msra.mxu0 0.0
      %719 = vmatprep.subr.mxu0 0.0
      %720 = vmatpush1.msra.mxu0 0.0
      %721 = vmatprep.subr.mxu0 0.0
      %722 = vmatpush1.msra.mxu0 0.0
      %723 = vmatprep.subr.mxu0 0.0
      %724 = vmatpush1.msra.mxu0 0.0
      %725 = vmatprep.subr.mxu0 0.0
      %726 = vmatpush1.msra.mxu0 0.0
      %727 = vmatprep.subr.mxu0 0.0
      %728 = vmatpush1.msra.mxu0 0.0
      %729 = vmatprep.subr.mxu0 0.0
      %730 = vmatpush1.msra.mxu0 0.0
      %731 = vmatprep.subr.mxu0 0.0
      %732 = vmatpush1.msra.mxu0 %v705
      %733 = vmatprep.subr.mxu0 0.0
      %734 = vmatpush1.msra.mxu0 %v226
      %735 = vmatprep.subr.mxu0 0.0
      %736 = vmatpush1.msra.mxu0 %v225
      %737 = vmatprep.subr.mxu0 0.0
      %738 = vmatpush1.msra.mxu0 %v224
      %739 = vmatprep.subr.mxu0 0.0
      %740 = vmatpush2.msra.mxu0 0.0
      %741 = vmatprep.subr.mxu0 0.0
      %742 = vmatpush2.msra.mxu0 0.0
      %743 = vmatprep.subr.mxu0 0.0
      %744 = vmatpush2.msra.mxu0 0.0
      %745 = vmatprep.subr.mxu0 0.0
      %746 = vmatpush2.msra.mxu0 0.0
      %747 = vmatprep.subr.mxu0 0.0
      %748 = vmatpush2.msra.mxu0 0.0
      %749 = vmatprep.subr.mxu0 0.0
      %750 = vmatpush2.msra.mxu0 0.0
      %751 = vmatprep.subr.mxu0 0.0
      %752 = vmatpush2.msra.mxu0 0.0
      %753 = vmatprep.subr.mxu0 0.0
      %754 = vmatpush2.msra.mxu0 0.0
      %755 = vmatprep.subr.mxu0 0.0
      %756 = vmatpush2.msra.mxu0 0.0
      %757 = vmatprep.subr.mxu0 0.0
      %758 = vmatpush2.msra.mxu0 0.0
      %759 = vmatprep.subr.mxu0 0.0
      %760 = vmatpush2.msra.mxu0 0.0
      %761 = vmatprep.subr.mxu0 0.0
      %762 = vmatpush2.msra.mxu0 0.0
      %763 = vmatprep.subr.mxu0 0.0
      %764 = vmatpush2.msra.mxu0 0.0
      %765 = vmatprep.subr.mxu0 0.0
      %766 = vmatpush2.msra.mxu0 0.0
      %767 = vmatprep.subr.mxu0 0.0
      %768 = vmatpush2.msra.mxu0 0.0
      %769 = vmatprep.subr.mxu0 0.0
      %770 = vmatpush2.msra.mxu0 0.0
      %771 = vmatprep.mubr.f32.mxu0 0.0
      %772 = vmatmul.mubr.f32.gmra.mxu0 %v353
      %v773 = vpop.f32.mrf.mxu0
      %v774 = vadd.f32 %v687, %v773
      %v775 = vpop.f32.mrf.mxu0
      %776 = vmatprep.mubr.f32.mxu0 0.0
      %777 = vmatmul.mubr.f32.gmra.mxu0 %v356
      %v778 = vpop.f32.mrf.mxu0
      %v779 = vadd.f32 %v692, %v778
      %v780 = vpop.f32.mrf.mxu0
      %781 = vmatprep.mubr.f32.mxu0 0.0
      %782 = vmatmul.mubr.f32.gmra.mxu0 %v359
      %v783 = vpop.f32.mrf.mxu0
      %v784 = vadd.f32 %v697, %v783
      %v785 = vpop.f32.mrf.mxu0
      %786 = vmatprep.mubr.f32.mxu0 0.0
      %787 = vmatmul.mubr.f32.gmra.mxu0 %v362
      %v788 = vpop.f32.mrf.mxu0
      %v789 = vadd.f32 %v702, %v788
      %v790 = vpop.f32.mrf.mxu0
      %791 = vdwg.mxu0
      %792 = vrot.lane.b32.xlu0 %v224, 96
      %v793 = vpop.permute.xlu0 %792
      %794 = vrot.lane.b32.xlu0 %v225, 96
      %v795 = vpop.permute.xlu0 %794
      %796 = vrot.lane.b32.xlu0 %v226, 96
      %v797 = vpop.permute.xlu0 %796
      %798 = vrot.lane.b32.xlu0 %v227, 96
      %v799 = vpop.permute.xlu0 %798
      %v803 = vsel %vm264, %v799, 0
      %805 = vmatprep.subr.mxu0 0.0
      %806 = vmatpush1.msra.mxu0 0.0
      %807 = vmatprep.subr.mxu0 0.0
      %808 = vmatpush1.msra.mxu0 0.0
      %809 = vmatprep.subr.mxu0 0.0
      %810 = vmatpush1.msra.mxu0 0.0
      %811 = vmatprep.subr.mxu0 0.0
      %812 = vmatpush1.msra.mxu0 0.0
      %813 = vmatprep.subr.mxu0 0.0
      %814 = vmatpush1.msra.mxu0 0.0
      %815 = vmatprep.subr.mxu0 0.0
      %816 = vmatpush1.msra.mxu0 0.0
      %817 = vmatprep.subr.mxu0 0.0
      %818 = vmatpush1.msra.mxu0 0.0
      %819 = vmatprep.subr.mxu0 0.0
      %820 = vmatpush1.msra.mxu0 0.0
      %821 = vmatprep.subr.mxu0 0.0
      %822 = vmatpush1.msra.mxu0 0.0
      %823 = vmatprep.subr.mxu0 0.0
      %824 = vmatpush1.msra.mxu0 0.0
      %825 = vmatprep.subr.mxu0 0.0
      %826 = vmatpush1.msra.mxu0 0.0
      %827 = vmatprep.subr.mxu0 0.0
      %828 = vmatpush1.msra.mxu0 0.0
      %829 = vmatprep.subr.mxu0 0.0
      %830 = vmatpush1.msra.mxu0 %v803
      %831 = vmatprep.subr.mxu0 0.0
      %832 = vmatpush1.msra.mxu0 %v797
      %833 = vmatprep.subr.mxu0 0.0
      %834 = vmatpush1.msra.mxu0 %v795
      %835 = vmatprep.subr.mxu0 0.0
      %836 = vmatpush1.msra.mxu0 %v793
      %837 = vmatprep.subr.mxu0 0.0
      %838 = vmatpush2.msra.mxu0 0.0
      %839 = vmatprep.subr.mxu0 0.0
      %840 = vmatpush2.msra.mxu0 0.0
      %841 = vmatprep.subr.mxu0 0.0
      %842 = vmatpush2.msra.mxu0 0.0
      %843 = vmatprep.subr.mxu0 0.0
      %844 = vmatpush2.msra.mxu0 0.0
      %845 = vmatprep.subr.mxu0 0.0
      %846 = vmatpush2.msra.mxu0 0.0
      %847 = vmatprep.subr.mxu0 0.0
      %848 = vmatpush2.msra.mxu0 0.0
      %849 = vmatprep.subr.mxu0 0.0
      %850 = vmatpush2.msra.mxu0 0.0
      %851 = vmatprep.subr.mxu0 0.0
      %852 = vmatpush2.msra.mxu0 0.0
      %853 = vmatprep.subr.mxu0 0.0
      %854 = vmatpush2.msra.mxu0 0.0
      %855 = vmatprep.subr.mxu0 0.0
      %856 = vmatpush2.msra.mxu0 0.0
      %857 = vmatprep.subr.mxu0 0.0
      %858 = vmatpush2.msra.mxu0 0.0
      %859 = vmatprep.subr.mxu0 0.0
      %860 = vmatpush2.msra.mxu0 0.0
      %861 = vmatprep.subr.mxu0 0.0
      %862 = vmatpush2.msra.mxu0 0.0
      %863 = vmatprep.subr.mxu0 0.0
      %864 = vmatpush2.msra.mxu0 0.0
      %865 = vmatprep.subr.mxu0 0.0
      %866 = vmatpush2.msra.mxu0 0.0
      %867 = vmatprep.subr.mxu0 0.0
      %868 = vmatpush2.msra.mxu0 0.0
      %869 = vmatprep.mubr.f32.mxu0 0.0
      %870 = vmatmul.mubr.f32.gmra.mxu0 %v463
      %v871 = vpop.f32.mrf.mxu0
      %v872 = vadd.f32 0.0, %v871
      %v873 = vpop.f32.mrf.mxu0
      %874 = vmatprep.mubr.f32.mxu0 0.0
      %875 = vmatmul.mubr.f32.gmra.mxu0 %v466
      %v876 = vpop.f32.mrf.mxu0
      %v877 = vadd.f32 0.0, %v876
      %v878 = vpop.f32.mrf.mxu0
      %879 = vmatprep.mubr.f32.mxu0 0.0
      %880 = vmatmul.mubr.f32.gmra.mxu0 %v469
      %v881 = vpop.f32.mrf.mxu0
      %v882 = vadd.f32 0.0, %v881
      %v883 = vpop.f32.mrf.mxu0
      %884 = vmatprep.mubr.f32.mxu0 0.0
      %885 = vmatmul.mubr.f32.gmra.mxu0 %v472
      %v886 = vpop.f32.mrf.mxu0
      %v887 = vadd.f32 0.0, %v886
      %v888 = vpop.f32.mrf.mxu0
      %889 = vdwg.mxu0
      %v890 = vadd.f32 %v774, %v872
      %v891 = vadd.f32 %v779, %v877
      %v892 = vadd.f32 %v784, %v882
      %v893 = vadd.f32 %v789, %v887
      %s894 = scalar_lea.vmem %s199, 32
      %895 = vst.msk [vmem:[%s894] sm:$0xff] %vm565, %v890
      %896 = vst.msk [vmem:[%s894 + $0x8] sm:$0xff] %vm565, %v891
      %897 = vst.msk [vmem:[%s894 + $0x10] sm:$0xff] %vm565, %v892
      %898 = vst.msk [vmem:[%s894 + $0x18] sm:$0x1] %vm569, %v893
      %v899 = vsel %vm565, %v890, 0.0
      %v900 = vsel %vm565, %v891, 0.0
      %v901 = vadd.f32 %v899, %v900
      %v902 = vsel %vm565, %v892, 0.0
      %v903 = vadd.f32 %v901, %v902
      %v904 = vsel %vm569, %v893, 0.0
      %v905 = vadd.f32 %v903, %v904
      %v906 = vrot.slane %v905, 4
      %v907 = vadd.f32 %v905, %v906
      %v908 = vrot.slane %v907, 2
      %v909 = vadd.f32 %v907, %v908
      %v910 = vrot.slane %v909, 1
      %v911 = vadd.f32 %v909, %v910
      %v912 = vadd.f32 %v584, %v911
      %v913 = vmul.f32 %v890, %v890
      %v914 = vmul.f32 %v891, %v891
      %v915 = vmul.f32 %v892, %v892
      %v916 = vmul.f32 %v893, %v893
      %v917 = vsel %vm565, %v913, 0.0
      %v918 = vsel %vm565, %v914, 0.0
      %v919 = vadd.f32 %v917, %v918
      %v920 = vsel %vm565, %v915, 0.0
      %v921 = vadd.f32 %v919, %v920
      %v922 = vsel %vm569, %v916, 0.0
      %v923 = vadd.f32 %v921, %v922
      %v924 = vrot.slane %v923, 4
      %v925 = vadd.f32 %v923, %v924
      %v926 = vrot.slane %v925, 2
      %v927 = vadd.f32 %v925, %v926
      %v928 = vrot.slane %v927, 1
      %v929 = vadd.f32 %v927, %v928
      %v930 = vadd.f32 %v602, %v929
      %935 = vrot.lane.b32.xlu0 %v228, 112
      %v936 = vpop.permute.xlu0 %935
      %937 = vrot.lane.b32.xlu0 %v229, 112
      %v938 = vpop.permute.xlu0 %937
      %939 = vrot.lane.b32.xlu0 %v230, 112
      %v940 = vpop.permute.xlu0 %939
      %941 = vrot.lane.b32.xlu0 %v231, 112
      %v942 = vpop.permute.xlu0 %941
      %v946 = vsel %vm264, %v942, 0
      %948 = vmatprep.subr.mxu0 0.0
      %949 = vmatpush1.msra.mxu0 0.0
      %950 = vmatprep.subr.mxu0 0.0
      %951 = vmatpush1.msra.mxu0 0.0
      %952 = vmatprep.subr.mxu0 0.0
      %953 = vmatpush1.msra.mxu0 0.0
      %954 = vmatprep.subr.mxu0 0.0
      %955 = vmatpush1.msra.mxu0 0.0
      %956 = vmatprep.subr.mxu0 0.0
      %957 = vmatpush1.msra.mxu0 0.0
      %958 = vmatprep.subr.mxu0 0.0
      %959 = vmatpush1.msra.mxu0 0.0
      %960 = vmatprep.subr.mxu0 0.0
      %961 = vmatpush1.msra.mxu0 0.0
      %962 = vmatprep.subr.mxu0 0.0
      %963 = vmatpush1.msra.mxu0 0.0
      %964 = vmatprep.subr.mxu0 0.0
      %965 = vmatpush1.msra.mxu0 0.0
      %966 = vmatprep.subr.mxu0 0.0
      %967 = vmatpush1.msra.mxu0 0.0
      %968 = vmatprep.subr.mxu0 0.0
      %969 = vmatpush1.msra.mxu0 0.0
      %970 = vmatprep.subr.mxu0 0.0
      %971 = vmatpush1.msra.mxu0 0.0
      %972 = vmatprep.subr.mxu0 0.0
      %973 = vmatpush1.msra.mxu0 %v946
      %974 = vmatprep.subr.mxu0 0.0
      %975 = vmatpush1.msra.mxu0 %v940
      %976 = vmatprep.subr.mxu0 0.0
      %977 = vmatpush1.msra.mxu0 %v938
      %978 = vmatprep.subr.mxu0 0.0
      %979 = vmatpush1.msra.mxu0 %v936
      %980 = vmatprep.subr.mxu0 0.0
      %981 = vmatpush2.msra.mxu0 0.0
      %982 = vmatprep.subr.mxu0 0.0
      %983 = vmatpush2.msra.mxu0 0.0
      %984 = vmatprep.subr.mxu0 0.0
      %985 = vmatpush2.msra.mxu0 0.0
      %986 = vmatprep.subr.mxu0 0.0
      %987 = vmatpush2.msra.mxu0 0.0
      %988 = vmatprep.subr.mxu0 0.0
      %989 = vmatpush2.msra.mxu0 0.0
      %990 = vmatprep.subr.mxu0 0.0
      %991 = vmatpush2.msra.mxu0 0.0
      %992 = vmatprep.subr.mxu0 0.0
      %993 = vmatpush2.msra.mxu0 0.0
      %994 = vmatprep.subr.mxu0 0.0
      %995 = vmatpush2.msra.mxu0 0.0
      %996 = vmatprep.subr.mxu0 0.0
      %997 = vmatpush2.msra.mxu0 0.0
      %998 = vmatprep.subr.mxu0 0.0
      %999 = vmatpush2.msra.mxu0 0.0
      %1000 = vmatprep.subr.mxu0 0.0
      %1001 = vmatpush2.msra.mxu0 0.0
      %1002 = vmatprep.subr.mxu0 0.0
      %1003 = vmatpush2.msra.mxu0 0.0
      %1004 = vmatprep.subr.mxu0 0.0
      %1005 = vmatpush2.msra.mxu0 0.0
      %1006 = vmatprep.subr.mxu0 0.0
      %1007 = vmatpush2.msra.mxu0 0.0
      %1008 = vmatprep.subr.mxu0 0.0
      %1009 = vmatpush2.msra.mxu0 0.0
      %1010 = vmatprep.subr.mxu0 0.0
      %1011 = vmatpush2.msra.mxu0 0.0
      %1012 = vmatprep.mubr.f32.mxu0 0.0
      %1013 = vmatmul.mubr.f32.gmra.mxu0 %v253
      %v1014 = vpop.f32.mrf.mxu0
      %v1015 = vadd.f32 0.0, %v1014
      %v1016 = vpop.f32.mrf.mxu0
      %1017 = vmatprep.mubr.f32.mxu0 0.0
      %1018 = vmatmul.mubr.f32.gmra.mxu0 %v256
      %v1019 = vpop.f32.mrf.mxu0
      %v1020 = vadd.f32 0.0, %v1019
      %v1021 = vpop.f32.mrf.mxu0
      %1022 = vmatprep.mubr.f32.mxu0 0.0
      %1023 = vmatmul.mubr.f32.gmra.mxu0 %v259
      %v1024 = vpop.f32.mrf.mxu0
      %v1025 = vadd.f32 0.0, %v1024
      %v1026 = vpop.f32.mrf.mxu0
      %1027 = vmatprep.mubr.f32.mxu0 0.0
      %1028 = vmatmul.mubr.f32.gmra.mxu0 %v262
      %v1029 = vpop.f32.mrf.mxu0
      %v1030 = vadd.f32 0.0, %v1029
      %v1031 = vpop.f32.mrf.mxu0
      %1032 = vdwg.mxu0
      %v1033 = vsel %vm264, %v231, 0
      %1035 = vmatprep.subr.mxu0 0.0
      %1036 = vmatpush1.msra.mxu0 0.0
      %1037 = vmatprep.subr.mxu0 0.0
      %1038 = vmatpush1.msra.mxu0 0.0
      %1039 = vmatprep.subr.mxu0 0.0
      %1040 = vmatpush1.msra.mxu0 0.0
      %1041 = vmatprep.subr.mxu0 0.0
      %1042 = vmatpush1.msra.mxu0 0.0
      %1043 = vmatprep.subr.mxu0 0.0
      %1044 = vmatpush1.msra.mxu0 0.0
      %1045 = vmatprep.subr.mxu0 0.0
      %1046 = vmatpush1.msra.mxu0 0.0
      %1047 = vmatprep.subr.mxu0 0.0
      %1048 = vmatpush1.msra.mxu0 0.0
      %1049 = vmatprep.subr.mxu0 0.0
      %1050 = vmatpush1.msra.mxu0 0.0
      %1051 = vmatprep.subr.mxu0 0.0
      %1052 = vmatpush1.msra.mxu0 0.0
      %1053 = vmatprep.subr.mxu0 0.0
      %1054 = vmatpush1.msra.mxu0 0.0
      %1055 = vmatprep.subr.mxu0 0.0
      %1056 = vmatpush1.msra.mxu0 0.0
      %1057 = vmatprep.subr.mxu0 0.0
      %1058 = vmatpush1.msra.mxu0 0.0
      %1059 = vmatprep.subr.mxu0 0.0
      %1060 = vmatpush1.msra.mxu0 %v1033
      %1061 = vmatprep.subr.mxu0 0.0
      %1062 = vmatpush1.msra.mxu0 %v230
      %1063 = vmatprep.subr.mxu0 0.0
      %1064 = vmatpush1.msra.mxu0 %v229
      %1065 = vmatprep.subr.mxu0 0.0
      %1066 = vmatpush1.msra.mxu0 %v228
      %1067 = vmatprep.subr.mxu0 0.0
      %1068 = vmatpush2.msra.mxu0 0.0
      %1069 = vmatprep.subr.mxu0 0.0
      %1070 = vmatpush2.msra.mxu0 0.0
      %1071 = vmatprep.subr.mxu0 0.0
      %1072 = vmatpush2.msra.mxu0 0.0
      %1073 = vmatprep.subr.mxu0 0.0
      %1074 = vmatpush2.msra.mxu0 0.0
      %1075 = vmatprep.subr.mxu0 0.0
      %1076 = vmatpush2.msra.mxu0 0.0
      %1077 = vmatprep.subr.mxu0 0.0
      %1078 = vmatpush2.msra.mxu0 0.0
      %1079 = vmatprep.subr.mxu0 0.0
      %1080 = vmatpush2.msra.mxu0 0.0
      %1081 = vmatprep.subr.mxu0 0.0
      %1082 = vmatpush2.msra.mxu0 0.0
      %1083 = vmatprep.subr.mxu0 0.0
      %1084 = vmatpush2.msra.mxu0 0.0
      %1085 = vmatprep.subr.mxu0 0.0
      %1086 = vmatpush2.msra.mxu0 0.0
      %1087 = vmatprep.subr.mxu0 0.0
      %1088 = vmatpush2.msra.mxu0 0.0
      %1089 = vmatprep.subr.mxu0 0.0
      %1090 = vmatpush2.msra.mxu0 0.0
      %1091 = vmatprep.subr.mxu0 0.0
      %1092 = vmatpush2.msra.mxu0 0.0
      %1093 = vmatprep.subr.mxu0 0.0
      %1094 = vmatpush2.msra.mxu0 0.0
      %1095 = vmatprep.subr.mxu0 0.0
      %1096 = vmatpush2.msra.mxu0 0.0
      %1097 = vmatprep.subr.mxu0 0.0
      %1098 = vmatpush2.msra.mxu0 0.0
      %1099 = vmatprep.mubr.f32.mxu0 0.0
      %1100 = vmatmul.mubr.f32.gmra.mxu0 %v353
      %v1101 = vpop.f32.mrf.mxu0
      %v1102 = vadd.f32 %v1015, %v1101
      %v1103 = vpop.f32.mrf.mxu0
      %1104 = vmatprep.mubr.f32.mxu0 0.0
      %1105 = vmatmul.mubr.f32.gmra.mxu0 %v356
      %v1106 = vpop.f32.mrf.mxu0
      %v1107 = vadd.f32 %v1020, %v1106
      %v1108 = vpop.f32.mrf.mxu0
      %1109 = vmatprep.mubr.f32.mxu0 0.0
      %1110 = vmatmul.mubr.f32.gmra.mxu0 %v359
      %v1111 = vpop.f32.mrf.mxu0
      %v1112 = vadd.f32 %v1025, %v1111
      %v1113 = vpop.f32.mrf.mxu0
      %1114 = vmatprep.mubr.f32.mxu0 0.0
      %1115 = vmatmul.mubr.f32.gmra.mxu0 %v362
      %v1116 = vpop.f32.mrf.mxu0
      %v1117 = vadd.f32 %v1030, %v1116
      %v1118 = vpop.f32.mrf.mxu0
      %1119 = vdwg.mxu0
      %1120 = vrot.lane.b32.xlu0 %v228, 96
      %v1121 = vpop.permute.xlu0 %1120
      %1122 = vrot.lane.b32.xlu0 %v229, 96
      %v1123 = vpop.permute.xlu0 %1122
      %1124 = vrot.lane.b32.xlu0 %v230, 96
      %v1125 = vpop.permute.xlu0 %1124
      %1126 = vrot.lane.b32.xlu0 %v231, 96
      %v1127 = vpop.permute.xlu0 %1126
      %v1131 = vsel %vm264, %v1127, 0
      %1133 = vmatprep.subr.mxu0 0.0
      %1134 = vmatpush1.msra.mxu0 0.0
      %1135 = vmatprep.subr.mxu0 0.0
      %1136 = vmatpush1.msra.mxu0 0.0
      %1137 = vmatprep.subr.mxu0 0.0
      %1138 = vmatpush1.msra.mxu0 0.0
      %1139 = vmatprep.subr.mxu0 0.0
      %1140 = vmatpush1.msra.mxu0 0.0
      %1141 = vmatprep.subr.mxu0 0.0
      %1142 = vmatpush1.msra.mxu0 0.0
      %1143 = vmatprep.subr.mxu0 0.0
      %1144 = vmatpush1.msra.mxu0 0.0
      %1145 = vmatprep.subr.mxu0 0.0
      %1146 = vmatpush1.msra.mxu0 0.0
      %1147 = vmatprep.subr.mxu0 0.0
      %1148 = vmatpush1.msra.mxu0 0.0
      %1149 = vmatprep.subr.mxu0 0.0
      %1150 = vmatpush1.msra.mxu0 0.0
      %1151 = vmatprep.subr.mxu0 0.0
      %1152 = vmatpush1.msra.mxu0 0.0
      %1153 = vmatprep.subr.mxu0 0.0
      %1154 = vmatpush1.msra.mxu0 0.0
      %1155 = vmatprep.subr.mxu0 0.0
      %1156 = vmatpush1.msra.mxu0 0.0
      %1157 = vmatprep.subr.mxu0 0.0
      %1158 = vmatpush1.msra.mxu0 %v1131
      %1159 = vmatprep.subr.mxu0 0.0
      %1160 = vmatpush1.msra.mxu0 %v1125
      %1161 = vmatprep.subr.mxu0 0.0
      %1162 = vmatpush1.msra.mxu0 %v1123
      %1163 = vmatprep.subr.mxu0 0.0
      %1164 = vmatpush1.msra.mxu0 %v1121
      %1165 = vmatprep.subr.mxu0 0.0
      %1166 = vmatpush2.msra.mxu0 0.0
      %1167 = vmatprep.subr.mxu0 0.0
      %1168 = vmatpush2.msra.mxu0 0.0
      %1169 = vmatprep.subr.mxu0 0.0
      %1170 = vmatpush2.msra.mxu0 0.0
      %1171 = vmatprep.subr.mxu0 0.0
      %1172 = vmatpush2.msra.mxu0 0.0
      %1173 = vmatprep.subr.mxu0 0.0
      %1174 = vmatpush2.msra.mxu0 0.0
      %1175 = vmatprep.subr.mxu0 0.0
      %1176 = vmatpush2.msra.mxu0 0.0
      %1177 = vmatprep.subr.mxu0 0.0
      %1178 = vmatpush2.msra.mxu0 0.0
      %1179 = vmatprep.subr.mxu0 0.0
      %1180 = vmatpush2.msra.mxu0 0.0
      %1181 = vmatprep.subr.mxu0 0.0
      %1182 = vmatpush2.msra.mxu0 0.0
      %1183 = vmatprep.subr.mxu0 0.0
      %1184 = vmatpush2.msra.mxu0 0.0
      %1185 = vmatprep.subr.mxu0 0.0
      %1186 = vmatpush2.msra.mxu0 0.0
      %1187 = vmatprep.subr.mxu0 0.0
      %1188 = vmatpush2.msra.mxu0 0.0
      %1189 = vmatprep.subr.mxu0 0.0
      %1190 = vmatpush2.msra.mxu0 0.0
      %1191 = vmatprep.subr.mxu0 0.0
      %1192 = vmatpush2.msra.mxu0 0.0
      %1193 = vmatprep.subr.mxu0 0.0
      %1194 = vmatpush2.msra.mxu0 0.0
      %1195 = vmatprep.subr.mxu0 0.0
      %1196 = vmatpush2.msra.mxu0 0.0
      %1197 = vmatprep.mubr.f32.mxu0 0.0
      %1198 = vmatmul.mubr.f32.gmra.mxu0 %v463
      %v1199 = vpop.f32.mrf.mxu0
      %v1200 = vadd.f32 0.0, %v1199
      %v1201 = vpop.f32.mrf.mxu0
      %1202 = vmatprep.mubr.f32.mxu0 0.0
      %1203 = vmatmul.mubr.f32.gmra.mxu0 %v466
      %v1204 = vpop.f32.mrf.mxu0
      %v1205 = vadd.f32 0.0, %v1204
      %v1206 = vpop.f32.mrf.mxu0
      %1207 = vmatprep.mubr.f32.mxu0 0.0
      %1208 = vmatmul.mubr.f32.gmra.mxu0 %v469
      %v1209 = vpop.f32.mrf.mxu0
      %v1210 = vadd.f32 0.0, %v1209
      %v1211 = vpop.f32.mrf.mxu0
      %1212 = vmatprep.mubr.f32.mxu0 0.0
      %1213 = vmatmul.mubr.f32.gmra.mxu0 %v472
      %v1214 = vpop.f32.mrf.mxu0
      %v1215 = vadd.f32 0.0, %v1214
      %v1216 = vpop.f32.mrf.mxu0
      %1217 = vdwg.mxu0
      %v1218 = vadd.f32 %v1102, %v1200
      %v1219 = vadd.f32 %v1107, %v1205
      %v1220 = vadd.f32 %v1112, %v1210
      %v1221 = vadd.f32 %v1117, %v1215
      %s1222 = scalar_lea.vmem %s199, 64
      %1223 = vst.msk [vmem:[%s1222] sm:$0xff] %vm565, %v1218
      %1224 = vst.msk [vmem:[%s1222 + $0x8] sm:$0xff] %vm565, %v1219
      %1225 = vst.msk [vmem:[%s1222 + $0x10] sm:$0xff] %vm565, %v1220
      %1226 = vst.msk [vmem:[%s1222 + $0x18] sm:$0x1] %vm569, %v1221
      %v1227 = vsel %vm565, %v1218, 0.0
      %v1228 = vsel %vm565, %v1219, 0.0
      %v1229 = vadd.f32 %v1227, %v1228
      %v1230 = vsel %vm565, %v1220, 0.0
      %v1231 = vadd.f32 %v1229, %v1230
      %v1232 = vsel %vm569, %v1221, 0.0
      %v1233 = vadd.f32 %v1231, %v1232
      %v1234 = vrot.slane %v1233, 4
      %v1235 = vadd.f32 %v1233, %v1234
      %v1236 = vrot.slane %v1235, 2
      %v1237 = vadd.f32 %v1235, %v1236
      %v1238 = vrot.slane %v1237, 1
      %v1239 = vadd.f32 %v1237, %v1238
      %v1240 = vadd.f32 %v912, %v1239
      %v1241 = vmul.f32 %v1218, %v1218
      %v1242 = vmul.f32 %v1219, %v1219
      %v1243 = vmul.f32 %v1220, %v1220
      %v1244 = vmul.f32 %v1221, %v1221
      %v1245 = vsel %vm565, %v1241, 0.0
      %v1246 = vsel %vm565, %v1242, 0.0
      %v1247 = vadd.f32 %v1245, %v1246
      %v1248 = vsel %vm565, %v1243, 0.0
      %v1249 = vadd.f32 %v1247, %v1248
      %v1250 = vsel %vm569, %v1244, 0.0
      %v1251 = vadd.f32 %v1249, %v1250
      %v1252 = vrot.slane %v1251, 4
      %v1253 = vadd.f32 %v1251, %v1252
      %v1254 = vrot.slane %v1253, 2
      %v1255 = vadd.f32 %v1253, %v1254
      %v1256 = vrot.slane %v1255, 1
      %v1257 = vadd.f32 %v1255, %v1256
      %v1258 = vadd.f32 %v930, %v1257
      %1263 = vrot.lane.b32.xlu0 %v232, 112
      %v1264 = vpop.permute.xlu0 %1263
      %1265 = vrot.lane.b32.xlu0 %v233, 112
      %v1266 = vpop.permute.xlu0 %1265
      %1267 = vrot.lane.b32.xlu0 %v234, 112
      %v1268 = vpop.permute.xlu0 %1267
      %1269 = vrot.lane.b32.xlu0 %v235, 112
      %v1270 = vpop.permute.xlu0 %1269
      %v1274 = vsel %vm264, %v1270, 0
      %1276 = vmatprep.subr.mxu0 0.0
      %1277 = vmatpush1.msra.mxu0 0.0
      %1278 = vmatprep.subr.mxu0 0.0
      %1279 = vmatpush1.msra.mxu0 0.0
      %1280 = vmatprep.subr.mxu0 0.0
      %1281 = vmatpush1.msra.mxu0 0.0
      %1282 = vmatprep.subr.mxu0 0.0
      %1283 = vmatpush1.msra.mxu0 0.0
      %1284 = vmatprep.subr.mxu0 0.0
      %1285 = vmatpush1.msra.mxu0 0.0
      %1286 = vmatprep.subr.mxu0 0.0
      %1287 = vmatpush1.msra.mxu0 0.0
      %1288 = vmatprep.subr.mxu0 0.0
      %1289 = vmatpush1.msra.mxu0 0.0
      %1290 = vmatprep.subr.mxu0 0.0
      %1291 = vmatpush1.msra.mxu0 0.0
      %1292 = vmatprep.subr.mxu0 0.0
      %1293 = vmatpush1.msra.mxu0 0.0
      %1294 = vmatprep.subr.mxu0 0.0
      %1295 = vmatpush1.msra.mxu0 0.0
      %1296 = vmatprep.subr.mxu0 0.0
      %1297 = vmatpush1.msra.mxu0 0.0
      %1298 = vmatprep.subr.mxu0 0.0
      %1299 = vmatpush1.msra.mxu0 0.0
      %1300 = vmatprep.subr.mxu0 0.0
      %1301 = vmatpush1.msra.mxu0 %v1274
      %1302 = vmatprep.subr.mxu0 0.0
      %1303 = vmatpush1.msra.mxu0 %v1268
      %1304 = vmatprep.subr.mxu0 0.0
      %1305 = vmatpush1.msra.mxu0 %v1266
      %1306 = vmatprep.subr.mxu0 0.0
      %1307 = vmatpush1.msra.mxu0 %v1264
      %1308 = vmatprep.subr.mxu0 0.0
      %1309 = vmatpush2.msra.mxu0 0.0
      %1310 = vmatprep.subr.mxu0 0.0
      %1311 = vmatpush2.msra.mxu0 0.0
      %1312 = vmatprep.subr.mxu0 0.0
      %1313 = vmatpush2.msra.mxu0 0.0
      %1314 = vmatprep.subr.mxu0 0.0
      %1315 = vmatpush2.msra.mxu0 0.0
      %1316 = vmatprep.subr.mxu0 0.0
      %1317 = vmatpush2.msra.mxu0 0.0
      %1318 = vmatprep.subr.mxu0 0.0
      %1319 = vmatpush2.msra.mxu0 0.0
      %1320 = vmatprep.subr.mxu0 0.0
      %1321 = vmatpush2.msra.mxu0 0.0
      %1322 = vmatprep.subr.mxu0 0.0
      %1323 = vmatpush2.msra.mxu0 0.0
      %1324 = vmatprep.subr.mxu0 0.0
      %1325 = vmatpush2.msra.mxu0 0.0
      %1326 = vmatprep.subr.mxu0 0.0
      %1327 = vmatpush2.msra.mxu0 0.0
      %1328 = vmatprep.subr.mxu0 0.0
      %1329 = vmatpush2.msra.mxu0 0.0
      %1330 = vmatprep.subr.mxu0 0.0
      %1331 = vmatpush2.msra.mxu0 0.0
      %1332 = vmatprep.subr.mxu0 0.0
      %1333 = vmatpush2.msra.mxu0 0.0
      %1334 = vmatprep.subr.mxu0 0.0
      %1335 = vmatpush2.msra.mxu0 0.0
      %1336 = vmatprep.subr.mxu0 0.0
      %1337 = vmatpush2.msra.mxu0 0.0
      %1338 = vmatprep.subr.mxu0 0.0
      %1339 = vmatpush2.msra.mxu0 0.0
      %1340 = vmatprep.mubr.f32.mxu0 0.0
      %1341 = vmatmul.mubr.f32.gmra.mxu0 %v253
      %v1342 = vpop.f32.mrf.mxu0
      %v1343 = vadd.f32 0.0, %v1342
      %v1344 = vpop.f32.mrf.mxu0
      %1345 = vmatprep.mubr.f32.mxu0 0.0
      %1346 = vmatmul.mubr.f32.gmra.mxu0 %v256
      %v1347 = vpop.f32.mrf.mxu0
      %v1348 = vadd.f32 0.0, %v1347
      %v1349 = vpop.f32.mrf.mxu0
      %1350 = vmatprep.mubr.f32.mxu0 0.0
      %1351 = vmatmul.mubr.f32.gmra.mxu0 %v259
      %v1352 = vpop.f32.mrf.mxu0
      %v1353 = vadd.f32 0.0, %v1352
      %v1354 = vpop.f32.mrf.mxu0
      %1355 = vmatprep.mubr.f32.mxu0 0.0
      %1356 = vmatmul.mubr.f32.gmra.mxu0 %v262
      %v1357 = vpop.f32.mrf.mxu0
      %v1358 = vadd.f32 0.0, %v1357
      %v1359 = vpop.f32.mrf.mxu0
      %1360 = vdwg.mxu0
      %v1361 = vsel %vm264, %v235, 0
      %1363 = vmatprep.subr.mxu0 0.0
      %1364 = vmatpush1.msra.mxu0 0.0
      %1365 = vmatprep.subr.mxu0 0.0
      %1366 = vmatpush1.msra.mxu0 0.0
      %1367 = vmatprep.subr.mxu0 0.0
      %1368 = vmatpush1.msra.mxu0 0.0
      %1369 = vmatprep.subr.mxu0 0.0
      %1370 = vmatpush1.msra.mxu0 0.0
      %1371 = vmatprep.subr.mxu0 0.0
      %1372 = vmatpush1.msra.mxu0 0.0
      %1373 = vmatprep.subr.mxu0 0.0
      %1374 = vmatpush1.msra.mxu0 0.0
      %1375 = vmatprep.subr.mxu0 0.0
      %1376 = vmatpush1.msra.mxu0 0.0
      %1377 = vmatprep.subr.mxu0 0.0
      %1378 = vmatpush1.msra.mxu0 0.0
      %1379 = vmatprep.subr.mxu0 0.0
      %1380 = vmatpush1.msra.mxu0 0.0
      %1381 = vmatprep.subr.mxu0 0.0
      %1382 = vmatpush1.msra.mxu0 0.0
      %1383 = vmatprep.subr.mxu0 0.0
      %1384 = vmatpush1.msra.mxu0 0.0
      %1385 = vmatprep.subr.mxu0 0.0
      %1386 = vmatpush1.msra.mxu0 0.0
      %1387 = vmatprep.subr.mxu0 0.0
      %1388 = vmatpush1.msra.mxu0 %v1361
      %1389 = vmatprep.subr.mxu0 0.0
      %1390 = vmatpush1.msra.mxu0 %v234
      %1391 = vmatprep.subr.mxu0 0.0
      %1392 = vmatpush1.msra.mxu0 %v233
      %1393 = vmatprep.subr.mxu0 0.0
      %1394 = vmatpush1.msra.mxu0 %v232
      %1395 = vmatprep.subr.mxu0 0.0
      %1396 = vmatpush2.msra.mxu0 0.0
      %1397 = vmatprep.subr.mxu0 0.0
      %1398 = vmatpush2.msra.mxu0 0.0
      %1399 = vmatprep.subr.mxu0 0.0
      %1400 = vmatpush2.msra.mxu0 0.0
      %1401 = vmatprep.subr.mxu0 0.0
      %1402 = vmatpush2.msra.mxu0 0.0
      %1403 = vmatprep.subr.mxu0 0.0
      %1404 = vmatpush2.msra.mxu0 0.0
      %1405 = vmatprep.subr.mxu0 0.0
      %1406 = vmatpush2.msra.mxu0 0.0
      %1407 = vmatprep.subr.mxu0 0.0
      %1408 = vmatpush2.msra.mxu0 0.0
      %1409 = vmatprep.subr.mxu0 0.0
      %1410 = vmatpush2.msra.mxu0 0.0
      %1411 = vmatprep.subr.mxu0 0.0
      %1412 = vmatpush2.msra.mxu0 0.0
      %1413 = vmatprep.subr.mxu0 0.0
      %1414 = vmatpush2.msra.mxu0 0.0
      %1415 = vmatprep.subr.mxu0 0.0
      %1416 = vmatpush2.msra.mxu0 0.0
      %1417 = vmatprep.subr.mxu0 0.0
      %1418 = vmatpush2.msra.mxu0 0.0
      %1419 = vmatprep.subr.mxu0 0.0
      %1420 = vmatpush2.msra.mxu0 0.0
      %1421 = vmatprep.subr.mxu0 0.0
      %1422 = vmatpush2.msra.mxu0 0.0
      %1423 = vmatprep.subr.mxu0 0.0
      %1424 = vmatpush2.msra.mxu0 0.0
      %1425 = vmatprep.subr.mxu0 0.0
      %1426 = vmatpush2.msra.mxu0 0.0
      %1427 = vmatprep.mubr.f32.mxu0 0.0
      %1428 = vmatmul.mubr.f32.gmra.mxu0 %v353
      %v1429 = vpop.f32.mrf.mxu0
      %v1430 = vadd.f32 %v1343, %v1429
      %v1431 = vpop.f32.mrf.mxu0
      %1432 = vmatprep.mubr.f32.mxu0 0.0
      %1433 = vmatmul.mubr.f32.gmra.mxu0 %v356
      %v1434 = vpop.f32.mrf.mxu0
      %v1435 = vadd.f32 %v1348, %v1434
      %v1436 = vpop.f32.mrf.mxu0
      %1437 = vmatprep.mubr.f32.mxu0 0.0
      %1438 = vmatmul.mubr.f32.gmra.mxu0 %v359
      %v1439 = vpop.f32.mrf.mxu0
      %v1440 = vadd.f32 %v1353, %v1439
      %v1441 = vpop.f32.mrf.mxu0
      %1442 = vmatprep.mubr.f32.mxu0 0.0
      %1443 = vmatmul.mubr.f32.gmra.mxu0 %v362
      %v1444 = vpop.f32.mrf.mxu0
      %v1445 = vadd.f32 %v1358, %v1444
      %v1446 = vpop.f32.mrf.mxu0
      %1447 = vdwg.mxu0
      %1448 = vrot.lane.b32.xlu0 %v232, 96
      %v1449 = vpop.permute.xlu0 %1448
      %1450 = vrot.lane.b32.xlu0 %v233, 96
      %v1451 = vpop.permute.xlu0 %1450
      %1452 = vrot.lane.b32.xlu0 %v234, 96
      %v1453 = vpop.permute.xlu0 %1452
      %1454 = vrot.lane.b32.xlu0 %v235, 96
      %v1455 = vpop.permute.xlu0 %1454
      %v1459 = vsel %vm264, %v1455, 0
      %1461 = vmatprep.subr.mxu0 0.0
      %1462 = vmatpush1.msra.mxu0 0.0
      %1463 = vmatprep.subr.mxu0 0.0
      %1464 = vmatpush1.msra.mxu0 0.0
      %1465 = vmatprep.subr.mxu0 0.0
      %1466 = vmatpush1.msra.mxu0 0.0
      %1467 = vmatprep.subr.mxu0 0.0
      %1468 = vmatpush1.msra.mxu0 0.0
      %1469 = vmatprep.subr.mxu0 0.0
      %1470 = vmatpush1.msra.mxu0 0.0
      %1471 = vmatprep.subr.mxu0 0.0
      %1472 = vmatpush1.msra.mxu0 0.0
      %1473 = vmatprep.subr.mxu0 0.0
      %1474 = vmatpush1.msra.mxu0 0.0
      %1475 = vmatprep.subr.mxu0 0.0
      %1476 = vmatpush1.msra.mxu0 0.0
      %1477 = vmatprep.subr.mxu0 0.0
      %1478 = vmatpush1.msra.mxu0 0.0
      %1479 = vmatprep.subr.mxu0 0.0
      %1480 = vmatpush1.msra.mxu0 0.0
      %1481 = vmatprep.subr.mxu0 0.0
      %1482 = vmatpush1.msra.mxu0 0.0
      %1483 = vmatprep.subr.mxu0 0.0
      %1484 = vmatpush1.msra.mxu0 0.0
      %1485 = vmatprep.subr.mxu0 0.0
      %1486 = vmatpush1.msra.mxu0 %v1459
      %1487 = vmatprep.subr.mxu0 0.0
      %1488 = vmatpush1.msra.mxu0 %v1453
      %1489 = vmatprep.subr.mxu0 0.0
      %1490 = vmatpush1.msra.mxu0 %v1451
      %1491 = vmatprep.subr.mxu0 0.0
      %1492 = vmatpush1.msra.mxu0 %v1449
      %1493 = vmatprep.subr.mxu0 0.0
      %1494 = vmatpush2.msra.mxu0 0.0
      %1495 = vmatprep.subr.mxu0 0.0
      %1496 = vmatpush2.msra.mxu0 0.0
      %1497 = vmatprep.subr.mxu0 0.0
      %1498 = vmatpush2.msra.mxu0 0.0
      %1499 = vmatprep.subr.mxu0 0.0
      %1500 = vmatpush2.msra.mxu0 0.0
      %1501 = vmatprep.subr.mxu0 0.0
      %1502 = vmatpush2.msra.mxu0 0.0
      %1503 = vmatprep.subr.mxu0 0.0
      %1504 = vmatpush2.msra.mxu0 0.0
      %1505 = vmatprep.subr.mxu0 0.0
      %1506 = vmatpush2.msra.mxu0 0.0
      %1507 = vmatprep.subr.mxu0 0.0
      %1508 = vmatpush2.msra.mxu0 0.0
      %1509 = vmatprep.subr.mxu0 0.0
      %1510 = vmatpush2.msra.mxu0 0.0
      %1511 = vmatprep.subr.mxu0 0.0
      %1512 = vmatpush2.msra.mxu0 0.0
      %1513 = vmatprep.subr.mxu0 0.0
      %1514 = vmatpush2.msra.mxu0 0.0
      %1515 = vmatprep.subr.mxu0 0.0
      %1516 = vmatpush2.msra.mxu0 0.0
      %1517 = vmatprep.subr.mxu0 0.0
      %1518 = vmatpush2.msra.mxu0 0.0
      %1519 = vmatprep.subr.mxu0 0.0
      %1520 = vmatpush2.msra.mxu0 0.0
      %1521 = vmatprep.subr.mxu0 0.0
      %1522 = vmatpush2.msra.mxu0 0.0
      %1523 = vmatprep.subr.mxu0 0.0
      %1524 = vmatpush2.msra.mxu0 0.0
      %1525 = vmatprep.mubr.f32.mxu0 0.0
      %1526 = vmatmul.mubr.f32.gmra.mxu0 %v463
      %v1527 = vpop.f32.mrf.mxu0
      %v1528 = vadd.f32 0.0, %v1527
      %v1529 = vpop.f32.mrf.mxu0
      %1530 = vmatprep.mubr.f32.mxu0 0.0
      %1531 = vmatmul.mubr.f32.gmra.mxu0 %v466
      %v1532 = vpop.f32.mrf.mxu0
      %v1533 = vadd.f32 0.0, %v1532
      %v1534 = vpop.f32.mrf.mxu0
      %1535 = vmatprep.mubr.f32.mxu0 0.0
      %1536 = vmatmul.mubr.f32.gmra.mxu0 %v469
      %v1537 = vpop.f32.mrf.mxu0
      %v1538 = vadd.f32 0.0, %v1537
      %v1539 = vpop.f32.mrf.mxu0
      %1540 = vmatprep.mubr.f32.mxu0 0.0
      %1541 = vmatmul.mubr.f32.gmra.mxu0 %v472
      %v1542 = vpop.f32.mrf.mxu0
      %v1543 = vadd.f32 0.0, %v1542
      %v1544 = vpop.f32.mrf.mxu0
      %1545 = vdwg.mxu0
      %v1546 = vadd.f32 %v1430, %v1528
      %v1547 = vadd.f32 %v1435, %v1533
      %v1548 = vadd.f32 %v1440, %v1538
      %v1549 = vadd.f32 %v1445, %v1543
      %s1550 = scalar_lea.vmem %s199, 96
      %1551 = vst.msk [vmem:[%s1550] sm:$0xff] %vm565, %v1546
      %1552 = vst.msk [vmem:[%s1550 + $0x8] sm:$0xff] %vm565, %v1547
      %1553 = vst.msk [vmem:[%s1550 + $0x10] sm:$0xff] %vm565, %v1548
      %1554 = vst.msk [vmem:[%s1550 + $0x18] sm:$0x1] %vm569, %v1549
      %v1555 = vsel %vm565, %v1546, 0.0
      %v1556 = vsel %vm565, %v1547, 0.0
      %v1557 = vadd.f32 %v1555, %v1556
      %v1558 = vsel %vm565, %v1548, 0.0
      %v1559 = vadd.f32 %v1557, %v1558
      %v1560 = vsel %vm569, %v1549, 0.0
      %v1561 = vadd.f32 %v1559, %v1560
      %v1562 = vrot.slane %v1561, 4
      %v1563 = vadd.f32 %v1561, %v1562
      %v1564 = vrot.slane %v1563, 2
      %v1565 = vadd.f32 %v1563, %v1564
      %v1566 = vrot.slane %v1565, 1
      %v1567 = vadd.f32 %v1565, %v1566
      %v1568 = vadd.f32 %v1240, %v1567
      %v1569 = vmul.f32 %v1546, %v1546
      %v1570 = vmul.f32 %v1547, %v1547
      %v1571 = vmul.f32 %v1548, %v1548
      %v1572 = vmul.f32 %v1549, %v1549
      %v1573 = vsel %vm565, %v1569, 0.0
      %v1574 = vsel %vm565, %v1570, 0.0
      %v1575 = vadd.f32 %v1573, %v1574
      %v1576 = vsel %vm565, %v1571, 0.0
      %v1577 = vadd.f32 %v1575, %v1576
      %v1578 = vsel %vm569, %v1572, 0.0
      %v1579 = vadd.f32 %v1577, %v1578
      %v1580 = vrot.slane %v1579, 4
      %v1581 = vadd.f32 %v1579, %v1580
      %v1582 = vrot.slane %v1581, 2
      %v1583 = vadd.f32 %v1581, %v1582
      %v1584 = vrot.slane %v1583, 1
      %v1585 = vadd.f32 %v1583, %v1584
      %v1586 = vadd.f32 %v1258, %v1585
      %v1587 = vld [vmem:[%s3] sm:$0x1]
      %v1588 = vadd.f32 %v1587, %v1568
      %1589 = vst.msk [vmem:[%s3] sm:$0x1] %vm569, %v1588
      %v1590 = vld [vmem:[%s4] sm:$0x1]
      %v1591 = vadd.f32 %v1590, %v1586
      %1592 = vst.msk [vmem:[%s4] sm:$0x1] %vm569, %v1591
      %s1593 = smul.u32 4, %s16
      %p1594 = scmp.lt.s32.totalorder %s1593, 15
      %s1595 = scalar_select %p1594, %s1593, 15
      %s1596 = smul.addr %s1595, 4
      %s1597 = smul.addr %s1596, 8
      %s1598 = scalar_lea.vmem %s2, %s1597
      // Predicated region
      $region33: #{spatial_bottleneck_block.8} parent=27 // pred_check
        %p1599 = pneg %p81
      $region34: #{spatial_bottleneck_block.8} parent=27 // pred_check_branch
        %1601 = sbr.rel (%p1599) target = $region36
      $region35: #{spatial_bottleneck_block.8} parent=27 // pred_region
        %s1602 = smul.u32 4, %s16
      $region36: #{spatial_bottleneck_block.8} parent=27 // pred_fallthru
        _
      // Predicated region
      $region37: #{spatial_bottleneck_block.8} parent=27 // pred_check
        %p1603 = pneg %p102
      $region38: #{spatial_bottleneck_block.8} parent=27 // pred_check_branch
        %1605 = sbr.rel (%p1603) target = $region40
      $region39: #{spatial_bottleneck_block.8} parent=27 // pred_region
        _
      $region40: #{spatial_bottleneck_block.8} parent=27 // pred_fallthru
        _
      // Predicated region
      $region41: #{spatial_bottleneck_block.8} parent=27 // pred_check
        %p1606 = pneg %p123
      $region42: #{spatial_bottleneck_block.8} parent=27 // pred_check_branch
        %1608 = sbr.rel (%p1606) target = $region44
      $region43: #{spatial_bottleneck_block.8} parent=27 // pred_region
        _
      $region44: #{spatial_bottleneck_block.8} parent=27 // pred_fallthru
        _
      // Predicated region
      $region45: #{spatial_bottleneck_block.8} parent=27 // pred_check
        %p1609 = pneg %p102
      $region46: #{spatial_bottleneck_block.8} parent=27 // pred_check_branch
        %1611 = sbr.rel (%p1609) target = $region48
      $region47: #{spatial_bottleneck_block.8} parent=27 // pred_region
        _
      $region48: #{spatial_bottleneck_block.8} parent=27 // pred_fallthru
        _
      // Predicated region
      $region49: #{spatial_bottleneck_block.8} parent=27 // pred_check
        %p1612 = pneg %p123
      $region50: #{spatial_bottleneck_block.8} parent=27 // pred_check_branch
        %1614 = sbr.rel (%p1612) target = $region52
      $region51: #{spatial_bottleneck_block.8} parent=27 // pred_region
        _
      $region52: #{spatial_bottleneck_block.8} parent=27 // pred_fallthru
        _
    $region28: #{spatial_bottleneck_block.8} parent=5 // pred_fallthru
      _
    %p1615 = scmp.le.s32.totalorder 2, %s11
    // Predicated region
    $region53: #{spatial_bottleneck_block.8} parent=5 // pred_check
      %p1616 = pneg %p1615
    $region54: #{spatial_bottleneck_block.8} parent=5 // pred_check_branch
      %1618 = sbr.rel (%p1616) target = $region56
    $region55: #{spatial_bottleneck_block.8} parent=5 // pred_region
      %s1619 = ssub.s32 %s11, 2
      // Predicated region
      $region57: #{spatial_bottleneck_block.8} parent=55 // pred_check
        %p1620 = pneg %p87
      $region58: #{spatial_bottleneck_block.8} parent=55 // pred_check_branch
        %1622 = sbr.rel (%p1620) target = $region60
      $region59: #{spatial_bottleneck_block.8} parent=55 // pred_region
        %s1623 = smul.u32 4, %s17
        %p1624 = scmp.lt.s32.totalorder %s1623, 15
        %s1625 = scalar_select %p1624, %s1623, 15
        %s1626 = smul.addr %s1625, 4
        %s1627 = smul.addr %s1626, 8
        %s1628 = scalar_lea.vmem %s2, %s1627
      $region60: #{spatial_bottleneck_block.8} parent=55 // pred_fallthru
        _
    $region56: #{spatial_bottleneck_block.8} parent=5 // pred_fallthru
      _
  $region6: #{spatial_bottleneck_block.8} parent=0 // loop_footer
    %s15 = sadd.s32 1, %s11
  $region7: #{spatial_bottleneck_block.8} parent=0 // loop_footer_branch
    %10 = sbr.rel target = $region3
  $region8: #{spatial_bottleneck_block.8} parent=0 // loop_exit
    _

// kernel: spatial_bottleneck_block.10
$region0: #{spatial_bottleneck_block.10}
  #allocation0 [shape = 'u32[]', space=smem, size = 0x4, offset = 0x4, fixed_abs, tag = 'smem constant byte address 0x4 - core index']
  #allocation1 [shape = 'u32[144,128]{1,0:T(1,128)}', space=vmem, size = 0x12000, scoped, tag = 'internal scratch']
  %s0 = inlined_call_operand.vmem [shape: f32[400,32], index: 0, kind: input, shape index: {}]
  %s1 = inlined_call_operand.vmem [shape: f32[32,64], index: 1, kind: input, shape index: {}]
  %s2 = inlined_call_operand.vmem [shape: f32[1,64], index: 2, kind: input, shape index: {}]
  %s3 = inlined_call_operand.vmem [shape: f32[400,64], index: 3, kind: output, shape index: {0}]
  %s4 = inlined_call_operand.vmem [shape: f32[1,64], index: 4, kind: output, shape index: {1}]
  %s5 = inlined_call_operand.vmem [shape: f32[1,64], index: 5, kind: output, shape index: {2}]
  %6 = xla_tuple %s3, %s4, %s5
  %s7 = sld [smem:[#allocation0]]
  $region65: #{spatial_bottleneck_block.10} parent=0
    _
  %s9 = ssub.s32 1, %s7
  %s10 = scalar_select 0, %s9, %s7
  loop: start=0, step=1, limit=4
  $region2: #{spatial_bottleneck_block.10} parent=0 // loop_pre_header
    _
  $region3: #{spatial_bottleneck_block.10} parent=0 // loop_header
    %s12 = sphi 0, %s16
    %p13 = scmp.ge.s32.totalorder %s12, 4
    %s22 = sphi 0, %s24
    %s25 = sphi 0, %s22
    %s26 = sphi 0, %s25
    %s42 = sphi 0, %s26
    %s46 = sphi 0, %s46
    %s48 = sphi 0, %s46
    %s49 = sphi 0, %s48
    %s63 = sphi 0, %s49
    %s67 = sphi 0, %s67
    %s69 = sphi 0, %s67
    %s70 = sphi 0, %s69
    %s84 = sphi 0, %s70
    %s90 = sphi 0, %s92
    %s93 = sphi 0, %s90
    %s94 = sphi 0, %s93
    %s110 = sphi 0, %s94
    %s114 = sphi 0, %s114
    %s116 = sphi 0, %s114
    %s117 = sphi 0, %s116
    %s131 = sphi 0, %s117
    %s135 = sphi 0, %s135
    %s137 = sphi 0, %s135
    %s138 = sphi 0, %s137
    %s152 = sphi 0, %s138
  $region4: #{spatial_bottleneck_block.10} parent=0 // loop_header_branch
    %15 = sbr.rel (%p13) target = $region8
  $region5: #{spatial_bottleneck_block.10} parent=0 // loop_body
    %s17 = ssub.s32 %s12, 1
    %s18 = ssub.s32 %s12, 2
    %s19 = sadd.s32 %s12, 1
    %s20 = ssub.s32 %s12, %s19
    %p21 = scmp.eq.s32.totalorder %s20, 0
    %s23 = sadd.s32 %s22, 1
    %s24 = scalar_select %p21, %s22, %s23
    %p27 = pneg %p21
    %p28 = scmp.eq.s32.totalorder %s12, 1
    %p29 = por %p27, %p28
    %p30 = scmp.ne.s32.totalorder %s22, %s25
    %p31 = scmp.eq.s32.totalorder %s12, 0
    %p32 = por %p30, %p31
    %p33 = scmp.ne.s32.totalorder %s22, %s25
    %p34 = scmp.eq.s32.totalorder %s17, 1
    %p35 = por %p33, %p34
    %p36 = scmp.ne.s32.totalorder %s25, %s26
    %p37 = scmp.eq.s32.totalorder %s17, 0
    %p38 = por %p36, %p37
    %p39 = scmp.ne.s32.totalorder %s25, %s26
    %p40 = scmp.eq.s32.totalorder %s18, 1
    %p41 = por %p39, %p40
    %p43 = scmp.ne.s32.totalorder %s26, %s42
    %p44 = scmp.eq.s32.totalorder %s18, 0
    %p45 = por %p43, %p44
    %s47 = sadd.s32 %s46, 1
    %p50 = scmp.eq.s32.totalorder %s12, 1
    %p51 = scmp.ne.s32.totalorder %s46, %s48
    %p52 = scmp.eq.s32.totalorder %s12, 0
    %p53 = por %p51, %p52
    %p54 = scmp.ne.s32.totalorder %s46, %s48
    %p55 = scmp.eq.s32.totalorder %s17, 1
    %p56 = por %p54, %p55
    %p57 = scmp.ne.s32.totalorder %s48, %s49
    %p58 = scmp.eq.s32.totalorder %s17, 0
    %p59 = por %p57, %p58
    %p60 = scmp.ne.s32.totalorder %s48, %s49
    %p61 = scmp.eq.s32.totalorder %s18, 1
    %p62 = por %p60, %p61
    %p64 = scmp.ne.s32.totalorder %s49, %s63
    %p65 = scmp.eq.s32.totalorder %s18, 0
    %p66 = por %p64, %p65
    %s68 = sadd.s32 %s67, 1
    %p71 = scmp.eq.s32.totalorder %s12, 1
    %p72 = scmp.ne.s32.totalorder %s67, %s69
    %p73 = scmp.eq.s32.totalorder %s12, 0
    %p74 = por %p72, %p73
    %p75 = scmp.ne.s32.totalorder %s67, %s69
    %p76 = scmp.eq.s32.totalorder %s17, 1
    %p77 = por %p75, %p76
    %p78 = scmp.ne.s32.totalorder %s69, %s70
    %p79 = scmp.eq.s32.totalorder %s17, 0
    %p80 = por %p78, %p79
    %p81 = scmp.ne.s32.totalorder %s69, %s70
    %p82 = scmp.eq.s32.totalorder %s18, 1
    %p83 = por %p81, %p82
    %p85 = scmp.ne.s32.totalorder %s70, %s84
    %p86 = scmp.eq.s32.totalorder %s18, 0
    %p87 = por %p85, %p86
    %s88 = ssub.s32 %s12, %s19
    %p89 = scmp.eq.s32.totalorder %s88, 0
    %s91 = sadd.s32 %s90, 1
    %s92 = scalar_select %p89, %s90, %s91
    %p95 = pneg %p89
    %p96 = scmp.eq.s32.totalorder %s12, 1
    %p97 = por %p95, %p96
    %p98 = scmp.ne.s32.totalorder %s90, %s93
    %p99 = scmp.eq.s32.totalorder %s12, 0
    %p100 = por %p98, %p99
    %p101 = scmp.ne.s32.totalorder %s90, %s93
    %p102 = scmp.eq.s32.totalorder %s17, 1
    %p103 = por %p101, %p102
    %p104 = scmp.ne.s32.totalorder %s93, %s94
    %p105 = scmp.eq.s32.totalorder %s17, 0
    %p106 = por %p104, %p105
    %p107 = scmp.ne.s32.totalorder %s93, %s94
    %p108 = scmp.eq.s32.totalorder %s18, 1
    %p109 = por %p107, %p108
    %p111 = scmp.ne.s32.totalorder %s94, %s110
    %p112 = scmp.eq.s32.totalorder %s18, 0
    %p113 = por %p111, %p112
    %s115 = sadd.s32 %s114, 1
    %p118 = scmp.eq.s32.totalorder %s12, 1
    %p119 = scmp.ne.s32.totalorder %s114, %s116
    %p120 = scmp.eq.s32.totalorder %s12, 0
    %p121 = por %p119, %p120
    %p122 = scmp.ne.s32.totalorder %s114, %s116
    %p123 = scmp.eq.s32.totalorder %s17, 1
    %p124 = por %p122, %p123
    %p125 = scmp.ne.s32.totalorder %s116, %s117
    %p126 = scmp.eq.s32.totalorder %s17, 0
    %p127 = por %p125, %p126
    %p128 = scmp.ne.s32.totalorder %s116, %s117
    %p129 = scmp.eq.s32.totalorder %s18, 1
    %p130 = por %p128, %p129
    %p132 = scmp.ne.s32.totalorder %s117, %s131
    %p133 = scmp.eq.s32.totalorder %s18, 0
    %p134 = por %p132, %p133
    %s136 = sadd.s32 %s135, 1
    %p139 = scmp.eq.s32.totalorder %s12, 1
    %p140 = scmp.ne.s32.totalorder %s135, %s137
    %p141 = scmp.eq.s32.totalorder %s12, 0
    %p142 = por %p140, %p141
    %p143 = scmp.ne.s32.totalorder %s135, %s137
    %p144 = scmp.eq.s32.totalorder %s17, 1
    %p145 = por %p143, %p144
    %p146 = scmp.ne.s32.totalorder %s137, %s138
    %p147 = scmp.eq.s32.totalorder %s17, 0
    %p148 = por %p146, %p147
    %p149 = scmp.ne.s32.totalorder %s137, %s138
    %p150 = scmp.eq.s32.totalorder %s18, 1
    %p151 = por %p149, %p150
    %p153 = scmp.ne.s32.totalorder %s138, %s152
    %p154 = scmp.eq.s32.totalorder %s18, 0
    %p155 = por %p153, %p154
    %p156 = scmp.le.s32.totalorder 1, %s12
    %p157 = scmp.lt.s32.totalorder %s12, 3
    %p158 = pnand %p156, %p157
    %p159 = pneg %p158
    // Predicated region
    $region9: #{spatial_bottleneck_block.10} parent=5 // pred_check
      _
    $region10: #{spatial_bottleneck_block.10} parent=5 // pred_check_branch
      %161 = sbr.rel (%p158) target = $region12
    $region11: #{spatial_bottleneck_block.10} parent=5 // pred_region
      %s162 = ssub.s32 %s12, 1
      // Predicated region
      $region13: #{spatial_bottleneck_block.10} parent=11 // pred_check
        %p163 = pneg %p59
      $region14: #{spatial_bottleneck_block.10} parent=11 // pred_check_branch
        %165 = sbr.rel (%p163) target = $region16
      $region15: #{spatial_bottleneck_block.10} parent=11 // pred_region
        _
      $region16: #{spatial_bottleneck_block.10} parent=11 // pred_fallthru
        _
      // Predicated region
      $region17: #{spatial_bottleneck_block.10} parent=11 // pred_check
        %p166 = pneg %p80
      $region18: #{spatial_bottleneck_block.10} parent=11 // pred_check_branch
        %168 = sbr.rel (%p166) target = $region20
      $region19: #{spatial_bottleneck_block.10} parent=11 // pred_region
        _
      $region20: #{spatial_bottleneck_block.10} parent=11 // pred_fallthru
        _
    $region12: #{spatial_bottleneck_block.10} parent=5 // pred_fallthru
      _
    %p169 = scmp.lt.s32.totalorder %s12, 2
    // Predicated region
    $region21: #{spatial_bottleneck_block.10} parent=5 // pred_check
      %p170 = pneg %p169
    $region22: #{spatial_bottleneck_block.10} parent=5 // pred_check_branch
      %172 = sbr.rel (%p170) target = $region24
    $region23: #{spatial_bottleneck_block.10} parent=5 // pred_region
      // Predicated region
      $region25: #{spatial_bottleneck_block.10} parent=23 // pred_check
        %p173 = pneg %p32
      $region26: #{spatial_bottleneck_block.10} parent=23 // pred_check_branch
        %175 = sbr.rel (%p173) target = $region28
      $region27: #{spatial_bottleneck_block.10} parent=23 // pred_region
        %s176 = smul.u32 25, %s12
        %p177 = scmp.lt.s32.totalorder %s176, 49
        %s178 = scalar_select %p177, %s176, 49
        %s179 = smul.addr %s178, 8
        %s180 = scalar_lea.vmem %s0, %s179
        %s181 = smul.u32 25, %s12
      $region28: #{spatial_bottleneck_block.10} parent=23 // pred_fallthru
        _
    $region24: #{spatial_bottleneck_block.10} parent=5 // pred_fallthru
      _
    %p182 = scmp.le.s32.totalorder 1, %s12
    %p183 = scmp.lt.s32.totalorder %s12, 3
    %p184 = pnand %p182, %p183
    %p185 = pneg %p184
    // Predicated region
    $region29: #{spatial_bottleneck_block.10} parent=5 // pred_check
      _
    $region30: #{spatial_bottleneck_block.10} parent=5 // pred_check_branch
      %187 = sbr.rel (%p184) target = $region32
    $region31: #{spatial_bottleneck_block.10} parent=5 // pred_region
      %s188 = ssub.s32 %s12, 1
      %s189 = smul.u32 25, %s17
      %p190 = scmp.lt.s32.totalorder %s189, 49
      %s191 = scalar_select %p190, %s189, 49
      %s192 = smul.addr %s191, 8
      %s193 = scalar_lea.vmem %s0, %s192
      %p194 = pneg %p38
      %p195 = pneg %p35
      %p196 = pneg %p59
      %p197 = pneg %p56
      %p198 = pneg %p80
      %p199 = pneg %p77
      %p200 = pneg %p106
      %p201 = pneg %p103
      %s202 = smul.u32 25, %s17
      %p203 = scmp.lt.s32.totalorder %s202, 49
      %s204 = scalar_select %p203, %s202, 49
      %s205 = smul.addr %s204, 8
      %s206 = scalar_lea.vmem %s3, %s205
      %p207 = pneg %p127
      %p208 = pneg %p124
      %p209 = pneg %p148
      %p210 = pneg %p145
      %s211 = smul.u32 25, %s17
      %p212 = scmp.lt.s32.totalorder %s211, 49
      %s213 = scalar_select %p212, %s211, 49
      %s214 = smul.addr %s213, 8
      %s215 = scalar_lea.vmem %s0, %s214
      %s216 = smul.u32 25, %s17
      %s217 = smul.u32 25, %s17
      %p218 = scmp.lt.s32.totalorder %s217, 49
      %s219 = scalar_select %p218, %s217, 49
      %s220 = smul.addr %s219, 8
      %s221 = scalar_lea.vmem %s3, %s220
      %s222 = smul.u32 25, %s17
      %v223 = vld [vmem:[%s215] sm:$0xff]
      %v224 = vld [vmem:[%s215 + $0x8] sm:$0xff]
      %v225 = vld [vmem:[%s215 + $0x10] sm:$0xff]
      %v226 = vld [vmem:[%s215 + $0x18] sm:$0xff]
      %v227 = vld [vmem:[%s215 + $0x20] sm:$0xff]
      %v228 = vld [vmem:[%s215 + $0x28] sm:$0xff]
      %v229 = vld [vmem:[%s215 + $0x30] sm:$0xff]
      %v230 = vld [vmem:[%s215 + $0x38] sm:$0xff]
      %v231 = vld [vmem:[%s215 + $0x40] sm:$0xff]
      %v232 = vld [vmem:[%s215 + $0x48] sm:$0xff]
      %v233 = vld [vmem:[%s215 + $0x50] sm:$0xff]
      %v234 = vld [vmem:[%s215 + $0x58] sm:$0xff]
      %v235 = vld [vmem:[%s215 + $0x60] sm:$0xff]
      %v236 = vld [vmem:[%s215 + $0x68] sm:$0xff]
      %v237 = vld [vmem:[%s215 + $0x70] sm:$0xff]
      %v238 = vld [vmem:[%s215 + $0x78] sm:$0xff]
      %v239 = vld [vmem:[%s215 + $0x80] sm:$0xff]
      %v240 = vld [vmem:[%s215 + $0x88] sm:$0xff]
      %v241 = vld [vmem:[%s215 + $0x90] sm:$0xff]
      %v242 = vld [vmem:[%s215 + $0x98] sm:$0xff]
      %v243 = vld [vmem:[%s215 + $0xa0] sm:$0xff]
      %v244 = vld [vmem:[%s215 + $0xa8] sm:$0xff]
      %v245 = vld [vmem:[%s215 + $0xb0] sm:$0xff]
      %v246 = vld [vmem:[%s215 + $0xb8] sm:$0xff]
      %v247 = vld [vmem:[%s215 + $0xc0] sm:$0xff]
      %v248 = vld [vmem:[%s1] sm:$0xff]
      %v249 = vld [vmem:[%s1 + $0x8] sm:$0xff]
      %v250 = vld [vmem:[%s1 + $0x10] sm:$0xff]
      %v251 = vld [vmem:[%s1 + $0x18] sm:$0xff]
      %v252 = vld [vmem:[%s2] sm:$0x1]
      %v254 = vlaneseq
      %v255 = vshrl.u32 %v254, 7
      %v256 = vsub.s32 0, %v255
      %v257 = vrot.slane %v252, %v256
      %vm259 = vcmask 261120
      %v261 = vsel %vm259, %v223, 0
      %v264 = vsel %vm259, %v224, 0
      %v267 = vsel %vm259, %v225, 0
      %v270 = vsel %vm259, %v226, 0
      %v273 = vsel %vm259, %v227, 0
      %v276 = vsel %vm259, %v228, 0
      %v279 = vsel %vm259, %v229, 0
      %v282 = vsel %vm259, %v230, 0
      %v285 = vsel %vm259, %v231, 0
      %v288 = vsel %vm259, %v232, 0
      %v291 = vsel %vm259, %v233, 0
      %v294 = vsel %vm259, %v234, 0
      %v297 = vsel %vm259, %v235, 0
      %v300 = vsel %vm259, %v236, 0
      %v303 = vsel %vm259, %v237, 0
      %v306 = vsel %vm259, %v238, 0
      %v309 = vsel %vm259, %v239, 0
      %v312 = vsel %vm259, %v240, 0
      %v315 = vsel %vm259, %v241, 0
      %v318 = vsel %vm259, %v242, 0
      %v321 = vsel %vm259, %v243, 0
      %v324 = vsel %vm259, %v244, 0
      %v327 = vsel %vm259, %v245, 0
      %v330 = vsel %vm259, %v246, 0
      %v333 = vsel %vm259, %v247, 0
      %335 = vmatprep.subr.mxu0 0.0
      %336 = vmatpush1.msra.mxu0 0.0
      %337 = vmatprep.subr.mxu0 0.0
      %338 = vmatpush1.msra.mxu0 0.0
      %339 = vmatprep.subr.mxu0 0.0
      %340 = vmatpush1.msra.mxu0 0.0
      %341 = vmatprep.subr.mxu0 0.0
      %342 = vmatpush1.msra.mxu0 0.0
      %343 = vmatprep.subr.mxu0 0.0
      %344 = vmatpush1.msra.mxu0 0.0
      %345 = vmatprep.subr.mxu0 0.0
      %346 = vmatpush1.msra.mxu0 0.0
      %347 = vmatprep.subr.mxu0 0.0
      %348 = vmatpush1.msra.mxu0 0.0
      %349 = vmatprep.subr.mxu0 0.0
      %350 = vmatpush1.msra.mxu0 0.0
      %351 = vmatprep.subr.mxu0 0.0
      %352 = vmatpush1.msra.mxu0 0.0
      %353 = vmatprep.subr.mxu0 0.0
      %354 = vmatpush1.msra.mxu0 0.0
      %355 = vmatprep.subr.mxu0 0.0
      %356 = vmatpush1.msra.mxu0 0.0
      %357 = vmatprep.subr.mxu0 0.0
      %358 = vmatpush1.msra.mxu0 0.0
      %359 = vmatprep.subr.mxu0 0.0
      %360 = vmatpush1.msra.mxu0 %v251
      %361 = vmatprep.subr.mxu0 0.0
      %362 = vmatpush1.msra.mxu0 %v250
      %363 = vmatprep.subr.mxu0 0.0
      %364 = vmatpush1.msra.mxu0 %v249
      %365 = vmatprep.subr.mxu0 0.0
      %366 = vmatpush1.msra.mxu0 %v248
      %367 = vmatprep.subr.mxu0 0.0
      %368 = vmatpush2.msra.mxu0 0.0
      %369 = vmatprep.subr.mxu0 0.0
      %370 = vmatpush2.msra.mxu0 0.0
      %371 = vmatprep.subr.mxu0 0.0
      %372 = vmatpush2.msra.mxu0 0.0
      %373 = vmatprep.subr.mxu0 0.0
      %374 = vmatpush2.msra.mxu0 0.0
      %375 = vmatprep.subr.mxu0 0.0
      %376 = vmatpush2.msra.mxu0 0.0
      %377 = vmatprep.subr.mxu0 0.0
      %378 = vmatpush2.msra.mxu0 0.0
      %379 = vmatprep.subr.mxu0 0.0
      %380 = vmatpush2.msra.mxu0 0.0
      %381 = vmatprep.subr.mxu0 0.0
      %382 = vmatpush2.msra.mxu0 0.0
      %383 = vmatprep.subr.mxu0 0.0
      %384 = vmatpush2.msra.mxu0 0.0
      %385 = vmatprep.subr.mxu0 0.0
      %386 = vmatpush2.msra.mxu0 0.0
      %387 = vmatprep.subr.mxu0 0.0
      %388 = vmatpush2.msra.mxu0 0.0
      %389 = vmatprep.subr.mxu0 0.0
      %390 = vmatpush2.msra.mxu0 0.0
      %391 = vmatprep.subr.mxu0 0.0
      %392 = vmatpush2.msra.mxu0 0.0
      %393 = vmatprep.subr.mxu0 0.0
      %394 = vmatpush2.msra.mxu0 0.0
      %395 = vmatprep.subr.mxu0 0.0
      %396 = vmatpush2.msra.mxu0 0.0
      %397 = vmatprep.subr.mxu0 0.0
      %398 = vmatpush2.msra.mxu0 0.0
      %399 = vmatprep.mubr.f32.mxu0 0.0
      %400 = vmatmul.mubr.f32.gmra.mxu0 %v261
      %v401 = vpop.f32.mrf.mxu0
      %v402 = vadd.f32 %v257, %v401
      %v403 = vpop.f32.mrf.mxu0
      %404 = vmatprep.mubr.f32.mxu0 0.0
      %405 = vmatmul.mubr.f32.gmra.mxu0 %v264
      %v406 = vpop.f32.mrf.mxu0
      %v407 = vadd.f32 %v257, %v406
      %v408 = vpop.f32.mrf.mxu0
      %409 = vmatprep.mubr.f32.mxu0 0.0
      %410 = vmatmul.mubr.f32.gmra.mxu0 %v267
      %v411 = vpop.f32.mrf.mxu0
      %v412 = vadd.f32 %v257, %v411
      %v413 = vpop.f32.mrf.mxu0
      %414 = vmatprep.mubr.f32.mxu0 0.0
      %415 = vmatmul.mubr.f32.gmra.mxu0 %v270
      %v416 = vpop.f32.mrf.mxu0
      %v417 = vadd.f32 %v257, %v416
      %v418 = vpop.f32.mrf.mxu0
      %419 = vmatprep.mubr.f32.mxu0 0.0
      %420 = vmatmul.mubr.f32.gmra.mxu0 %v273
      %v421 = vpop.f32.mrf.mxu0
      %v422 = vadd.f32 %v257, %v421
      %v423 = vpop.f32.mrf.mxu0
      %424 = vmatprep.mubr.f32.mxu0 0.0
      %425 = vmatmul.mubr.f32.gmra.mxu0 %v276
      %v426 = vpop.f32.mrf.mxu0
      %v427 = vadd.f32 %v257, %v426
      %v428 = vpop.f32.mrf.mxu0
      %429 = vmatprep.mubr.f32.mxu0 0.0
      %430 = vmatmul.mubr.f32.gmra.mxu0 %v279
      %v431 = vpop.f32.mrf.mxu0
      %v432 = vadd.f32 %v257, %v431
      %v433 = vpop.f32.mrf.mxu0
      %434 = vmatprep.mubr.f32.mxu0 0.0
      %435 = vmatmul.mubr.f32.gmra.mxu0 %v282
      %v436 = vpop.f32.mrf.mxu0
      %v437 = vadd.f32 %v257, %v436
      %v438 = vpop.f32.mrf.mxu0
      %439 = vmatprep.mubr.f32.mxu0 0.0
      %440 = vmatmul.mubr.f32.gmra.mxu0 %v285
      %v441 = vpop.f32.mrf.mxu0
      %v442 = vadd.f32 %v257, %v441
      %v443 = vpop.f32.mrf.mxu0
      %444 = vmatprep.mubr.f32.mxu0 0.0
      %445 = vmatmul.mubr.f32.gmra.mxu0 %v288
      %v446 = vpop.f32.mrf.mxu0
      %v447 = vadd.f32 %v257, %v446
      %v448 = vpop.f32.mrf.mxu0
      %449 = vmatprep.mubr.f32.mxu0 0.0
      %450 = vmatmul.mubr.f32.gmra.mxu0 %v291
      %v451 = vpop.f32.mrf.mxu0
      %v452 = vadd.f32 %v257, %v451
      %v453 = vpop.f32.mrf.mxu0
      %454 = vmatprep.mubr.f32.mxu0 0.0
      %455 = vmatmul.mubr.f32.gmra.mxu0 %v294
      %v456 = vpop.f32.mrf.mxu0
      %v457 = vadd.f32 %v257, %v456
      %v458 = vpop.f32.mrf.mxu0
      %459 = vmatprep.mubr.f32.mxu0 0.0
      %460 = vmatmul.mubr.f32.gmra.mxu0 %v297
      %v461 = vpop.f32.mrf.mxu0
      %v462 = vadd.f32 %v257, %v461
      %v463 = vpop.f32.mrf.mxu0
      %464 = vmatprep.mubr.f32.mxu0 0.0
      %465 = vmatmul.mubr.f32.gmra.mxu0 %v300
      %v466 = vpop.f32.mrf.mxu0
      %v467 = vadd.f32 %v257, %v466
      %v468 = vpop.f32.mrf.mxu0
      %469 = vmatprep.mubr.f32.mxu0 0.0
      %470 = vmatmul.mubr.f32.gmra.mxu0 %v303
      %v471 = vpop.f32.mrf.mxu0
      %v472 = vadd.f32 %v257, %v471
      %v473 = vpop.f32.mrf.mxu0
      %474 = vmatprep.mubr.f32.mxu0 0.0
      %475 = vmatmul.mubr.f32.gmra.mxu0 %v306
      %v476 = vpop.f32.mrf.mxu0
      %v477 = vadd.f32 %v257, %v476
      %v478 = vpop.f32.mrf.mxu0
      %479 = vmatprep.mubr.f32.mxu0 0.0
      %480 = vmatmul.mubr.f32.gmra.mxu0 %v309
      %v481 = vpop.f32.mrf.mxu0
      %v482 = vadd.f32 %v257, %v481
      %v483 = vpop.f32.mrf.mxu0
      %484 = vmatprep.mubr.f32.mxu0 0.0
      %485 = vmatmul.mubr.f32.gmra.mxu0 %v312
      %v486 = vpop.f32.mrf.mxu0
      %v487 = vadd.f32 %v257, %v486
      %v488 = vpop.f32.mrf.mxu0
      %489 = vmatprep.mubr.f32.mxu0 0.0
      %490 = vmatmul.mubr.f32.gmra.mxu0 %v315
      %v491 = vpop.f32.mrf.mxu0
      %v492 = vadd.f32 %v257, %v491
      %v493 = vpop.f32.mrf.mxu0
      %494 = vmatprep.mubr.f32.mxu0 0.0
      %495 = vmatmul.mubr.f32.gmra.mxu0 %v318
      %v496 = vpop.f32.mrf.mxu0
      %v497 = vadd.f32 %v257, %v496
      %v498 = vpop.f32.mrf.mxu0
      %499 = vmatprep.mubr.f32.mxu0 0.0
      %500 = vmatmul.mubr.f32.gmra.mxu0 %v321
      %v501 = vpop.f32.mrf.mxu0
      %v502 = vadd.f32 %v257, %v501
      %v503 = vpop.f32.mrf.mxu0
      %504 = vmatprep.mubr.f32.mxu0 0.0
      %505 = vmatmul.mubr.f32.gmra.mxu0 %v324
      %v506 = vpop.f32.mrf.mxu0
      %v507 = vadd.f32 %v257, %v506
      %v508 = vpop.f32.mrf.mxu0
      %509 = vmatprep.mubr.f32.mxu0 0.0
      %510 = vmatmul.mubr.f32.gmra.mxu0 %v327
      %v511 = vpop.f32.mrf.mxu0
      %v512 = vadd.f32 %v257, %v511
      %v513 = vpop.f32.mrf.mxu0
      %514 = vmatprep.mubr.f32.mxu0 0.0
      %515 = vmatmul.mubr.f32.gmra.mxu0 %v330
      %v516 = vpop.f32.mrf.mxu0
      %v517 = vadd.f32 %v257, %v516
      %v518 = vpop.f32.mrf.mxu0
      %519 = vmatprep.mubr.f32.mxu0 0.0
      %520 = vmatmul.mubr.f32.gmra.mxu0 %v333
      %v521 = vpop.f32.mrf.mxu0
      %v522 = vadd.f32 %v257, %v521
      %v523 = vpop.f32.mrf.mxu0
      %524 = vdwg.mxu0
      %vm525 = vcmask 523264
      %526 = vst.msk [vmem:[%s221] sm:$0xff] %vm525, %v402
      %527 = vst.msk [vmem:[%s221 + $0x8] sm:$0xff] %vm525, %v407
      %528 = vst.msk [vmem:[%s221 + $0x10] sm:$0xff] %vm525, %v412
      %529 = vst.msk [vmem:[%s221 + $0x18] sm:$0xff] %vm525, %v417
      %530 = vst.msk [vmem:[%s221 + $0x20] sm:$0xff] %vm525, %v422
      %531 = vst.msk [vmem:[%s221 + $0x28] sm:$0xff] %vm525, %v427
      %532 = vst.msk [vmem:[%s221 + $0x30] sm:$0xff] %vm525, %v432
      %533 = vst.msk [vmem:[%s221 + $0x38] sm:$0xff] %vm525, %v437
      %534 = vst.msk [vmem:[%s221 + $0x40] sm:$0xff] %vm525, %v442
      %535 = vst.msk [vmem:[%s221 + $0x48] sm:$0xff] %vm525, %v447
      %536 = vst.msk [vmem:[%s221 + $0x50] sm:$0xff] %vm525, %v452
      %537 = vst.msk [vmem:[%s221 + $0x58] sm:$0xff] %vm525, %v457
      %538 = vst.msk [vmem:[%s221 + $0x60] sm:$0xff] %vm525, %v462
      %539 = vst.msk [vmem:[%s221 + $0x68] sm:$0xff] %vm525, %v467
      %540 = vst.msk [vmem:[%s221 + $0x70] sm:$0xff] %vm525, %v472
      %541 = vst.msk [vmem:[%s221 + $0x78] sm:$0xff] %vm525, %v477
      %542 = vst.msk [vmem:[%s221 + $0x80] sm:$0xff] %vm525, %v482
      %543 = vst.msk [vmem:[%s221 + $0x88] sm:$0xff] %vm525, %v487
      %544 = vst.msk [vmem:[%s221 + $0x90] sm:$0xff] %vm525, %v492
      %545 = vst.msk [vmem:[%s221 + $0x98] sm:$0xff] %vm525, %v497
      %546 = vst.msk [vmem:[%s221 + $0xa0] sm:$0xff] %vm525, %v502
      %547 = vst.msk [vmem:[%s221 + $0xa8] sm:$0xff] %vm525, %v507
      %548 = vst.msk [vmem:[%s221 + $0xb0] sm:$0xff] %vm525, %v512
      %549 = vst.msk [vmem:[%s221 + $0xb8] sm:$0xff] %vm525, %v517
      %550 = vst.msk [vmem:[%s221 + $0xc0] sm:$0xff] %vm525, %v522
      %p551 = scmp.eq.s32.totalorder %s17, 0
      // Predicated region
      $region33: #{spatial_bottleneck_block.10} parent=31 // pred_check
        %p552 = pneg %p551
      $region34: #{spatial_bottleneck_block.10} parent=31 // pred_check_branch
        %554 = sbr.rel (%p552) target = $region36
      $region35: #{spatial_bottleneck_block.10} parent=31 // pred_region
        %vm555 = vcmask 516096
        %556 = vst.msk [vmem:[%s4] sm:$0x1] %vm555, 0.0
        %557 = vst.msk [vmem:[%s5] sm:$0x1] %vm555, 0.0
      $region36: #{spatial_bottleneck_block.10} parent=31 // pred_fallthru
        _
      %v558 = vld [vmem:[%s4] sm:$0x1]
      %v559 = vsel %vm525, %v402, 0.0
      %v560 = vsel %vm525, %v407, 0.0
      %v561 = vadd.f32 %v559, %v560
      %v562 = vsel %vm525, %v412, 0.0
      %v563 = vadd.f32 %v561, %v562
      %v564 = vsel %vm525, %v417, 0.0
      %v565 = vadd.f32 %v563, %v564
      %v566 = vsel %vm525, %v422, 0.0
      %v567 = vadd.f32 %v565, %v566
      %v568 = vsel %vm525, %v427, 0.0
      %v569 = vadd.f32 %v567, %v568
      %v570 = vsel %vm525, %v432, 0.0
      %v571 = vadd.f32 %v569, %v570
      %v572 = vsel %vm525, %v437, 0.0
      %v573 = vadd.f32 %v571, %v572
      %v574 = vsel %vm525, %v442, 0.0
      %v575 = vadd.f32 %v573, %v574
      %v576 = vsel %vm525, %v447, 0.0
      %v577 = vadd.f32 %v575, %v576
      %v578 = vsel %vm525, %v452, 0.0
      %v579 = vadd.f32 %v577, %v578
      %v580 = vsel %vm525, %v457, 0.0
      %v581 = vadd.f32 %v579, %v580
      %v582 = vsel %vm525, %v462, 0.0
      %v583 = vadd.f32 %v581, %v582
      %v584 = vsel %vm525, %v467, 0.0
      %v585 = vadd.f32 %v583, %v584
      %v586 = vsel %vm525, %v472, 0.0
      %v587 = vadd.f32 %v585, %v586
      %v588 = vsel %vm525, %v477, 0.0
      %v589 = vadd.f32 %v587, %v588
      %v590 = vsel %vm525, %v482, 0.0
      %v591 = vadd.f32 %v589, %v590
      %v592 = vsel %vm525, %v487, 0.0
      %v593 = vadd.f32 %v591, %v592
      %v594 = vsel %vm525, %v492, 0.0
      %v595 = vadd.f32 %v593, %v594
      %v596 = vsel %vm525, %v497, 0.0
      %v597 = vadd.f32 %v595, %v596
      %v598 = vsel %vm525, %v502, 0.0
      %v599 = vadd.f32 %v597, %v598
      %v600 = vsel %vm525, %v507, 0.0
      %v601 = vadd.f32 %v599, %v600
      %v602 = vsel %vm525, %v512, 0.0
      %v603 = vadd.f32 %v601, %v602
      %v604 = vsel %vm525, %v517, 0.0
      %v605 = vadd.f32 %v603, %v604
      %v606 = vsel %vm525, %v522, 0.0
      %v607 = vadd.f32 %v605, %v606
      %v608 = vrot.slane %v607, 4
      %v609 = vadd.f32 %v607, %v608
      %v610 = vrot.slane %v609, 2
      %v611 = vadd.f32 %v609, %v610
      %v612 = vrot.slane %v611, 1
      %v613 = vadd.f32 %v611, %v612
      %v614 = vadd.f32 %v558, %v613
      %vm615 = vcmask 516096
      %616 = vst.msk [vmem:[%s4] sm:$0x1] %vm615, %v614
      %v617 = vld [vmem:[%s5] sm:$0x1]
      %v618 = vmul.f32 %v402, %v402
      %v619 = vmul.f32 %v407, %v407
      %v620 = vmul.f32 %v412, %v412
      %v621 = vmul.f32 %v417, %v417
      %v622 = vmul.f32 %v422, %v422
      %v623 = vmul.f32 %v427, %v427
      %v624 = vmul.f32 %v432, %v432
      %v625 = vmul.f32 %v437, %v437
      %v626 = vmul.f32 %v442, %v442
      %v627 = vmul.f32 %v447, %v447
      %v628 = vmul.f32 %v452, %v452
      %v629 = vmul.f32 %v457, %v457
      %v630 = vmul.f32 %v462, %v462
      %v631 = vmul.f32 %v467, %v467
      %v632 = vmul.f32 %v472, %v472
      %v633 = vmul.f32 %v477, %v477
      %v634 = vmul.f32 %v482, %v482
      %v635 = vmul.f32 %v487, %v487
      %v636 = vmul.f32 %v492, %v492
      %v637 = vmul.f32 %v497, %v497
      %v638 = vmul.f32 %v502, %v502
      %v639 = vmul.f32 %v507, %v507
      %v640 = vmul.f32 %v512, %v512
      %v641 = vmul.f32 %v517, %v517
      %v642 = vmul.f32 %v522, %v522
      %v643 = vsel %vm525, %v618, 0.0
      %v644 = vsel %vm525, %v619, 0.0
      %v645 = vadd.f32 %v643, %v644
      %v646 = vsel %vm525, %v620, 0.0
      %v647 = vadd.f32 %v645, %v646
      %v648 = vsel %vm525, %v621, 0.0
      %v649 = vadd.f32 %v647, %v648
      %v650 = vsel %vm525, %v622, 0.0
      %v651 = vadd.f32 %v649, %v650
      %v652 = vsel %vm525, %v623, 0.0
      %v653 = vadd.f32 %v651, %v652
      %v654 = vsel %vm525, %v624, 0.0
      %v655 = vadd.f32 %v653, %v654
      %v656 = vsel %vm525, %v625, 0.0
      %v657 = vadd.f32 %v655, %v656
      %v658 = vsel %vm525, %v626, 0.0
      %v659 = vadd.f32 %v657, %v658
      %v660 = vsel %vm525, %v627, 0.0
      %v661 = vadd.f32 %v659, %v660
      %v662 = vsel %vm525, %v628, 0.0
      %v663 = vadd.f32 %v661, %v662
      %v664 = vsel %vm525, %v629, 0.0
      %v665 = vadd.f32 %v663, %v664
      %v666 = vsel %vm525, %v630, 0.0
      %v667 = vadd.f32 %v665, %v666
      %v668 = vsel %vm525, %v631, 0.0
      %v669 = vadd.f32 %v667, %v668
      %v670 = vsel %vm525, %v632, 0.0
      %v671 = vadd.f32 %v669, %v670
      %v672 = vsel %vm525, %v633, 0.0
      %v673 = vadd.f32 %v671, %v672
      %v674 = vsel %vm525, %v634, 0.0
      %v675 = vadd.f32 %v673, %v674
      %v676 = vsel %vm525, %v635, 0.0
      %v677 = vadd.f32 %v675, %v676
      %v678 = vsel %vm525, %v636, 0.0
      %v679 = vadd.f32 %v677, %v678
      %v680 = vsel %vm525, %v637, 0.0
      %v681 = vadd.f32 %v679, %v680
      %v682 = vsel %vm525, %v638, 0.0
      %v683 = vadd.f32 %v681, %v682
      %v684 = vsel %vm525, %v639, 0.0
      %v685 = vadd.f32 %v683, %v684
      %v686 = vsel %vm525, %v640, 0.0
      %v687 = vadd.f32 %v685, %v686
      %v688 = vsel %vm525, %v641, 0.0
      %v689 = vadd.f32 %v687, %v688
      %v690 = vsel %vm525, %v642, 0.0
      %v691 = vadd.f32 %v689, %v690
      %v692 = vrot.slane %v691, 4
      %v693 = vadd.f32 %v691, %v692
      %v694 = vrot.slane %v693, 2
      %v695 = vadd.f32 %v693, %v694
      %v696 = vrot.slane %v695, 1
      %v697 = vadd.f32 %v695, %v696
      %v698 = vadd.f32 %v617, %v697
      %699 = vst.msk [vmem:[%s5] sm:$0x1] %vm615, %v698
      %s700 = smul.u32 25, %s17
      %p701 = scmp.lt.s32.totalorder %s700, 49
      %s702 = scalar_select %p701, %s700, 49
      %s703 = smul.addr %s702, 8
      %s704 = scalar_lea.vmem %s3, %s703
      // Predicated region
      $region37: #{spatial_bottleneck_block.10} parent=31 // pred_check
        %p705 = pneg %p103
      $region38: #{spatial_bottleneck_block.10} parent=31 // pred_check_branch
        %707 = sbr.rel (%p705) target = $region40
      $region39: #{spatial_bottleneck_block.10} parent=31 // pred_region
        %s708 = smul.u32 25, %s17
      $region40: #{spatial_bottleneck_block.10} parent=31 // pred_fallthru
        _
      // Predicated region
      $region41: #{spatial_bottleneck_block.10} parent=31 // pred_check
        %p709 = pneg %p124
      $region42: #{spatial_bottleneck_block.10} parent=31 // pred_check_branch
        %711 = sbr.rel (%p709) target = $region44
      $region43: #{spatial_bottleneck_block.10} parent=31 // pred_region
        _
      $region44: #{spatial_bottleneck_block.10} parent=31 // pred_fallthru
        _
      // Predicated region
      $region45: #{spatial_bottleneck_block.10} parent=31 // pred_check
        %p712 = pneg %p145
      $region46: #{spatial_bottleneck_block.10} parent=31 // pred_check_branch
        %714 = sbr.rel (%p712) target = $region48
      $region47: #{spatial_bottleneck_block.10} parent=31 // pred_region
        _
      $region48: #{spatial_bottleneck_block.10} parent=31 // pred_fallthru
        _
      // Predicated region
      $region49: #{spatial_bottleneck_block.10} parent=31 // pred_check
        %p715 = pneg %p124
      $region50: #{spatial_bottleneck_block.10} parent=31 // pred_check_branch
        %717 = sbr.rel (%p715) target = $region52
      $region51: #{spatial_bottleneck_block.10} parent=31 // pred_region
        _
      $region52: #{spatial_bottleneck_block.10} parent=31 // pred_fallthru
        _
      // Predicated region
      $region53: #{spatial_bottleneck_block.10} parent=31 // pred_check
        %p718 = pneg %p145
      $region54: #{spatial_bottleneck_block.10} parent=31 // pred_check_branch
        %720 = sbr.rel (%p718) target = $region56
      $region55: #{spatial_bottleneck_block.10} parent=31 // pred_region
        _
      $region56: #{spatial_bottleneck_block.10} parent=31 // pred_fallthru
        _
    $region32: #{spatial_bottleneck_block.10} parent=5 // pred_fallthru
      _
    %p721 = scmp.le.s32.totalorder 2, %s12
    // Predicated region
    $region57: #{spatial_bottleneck_block.10} parent=5 // pred_check
      %p722 = pneg %p721
    $region58: #{spatial_bottleneck_block.10} parent=5 // pred_check_branch
      %724 = sbr.rel (%p722) target = $region60
    $region59: #{spatial_bottleneck_block.10} parent=5 // pred_region
      %s725 = ssub.s32 %s12, 2
      // Predicated region
      $region61: #{spatial_bottleneck_block.10} parent=59 // pred_check
        %p726 = pneg %p109
      $region62: #{spatial_bottleneck_block.10} parent=59 // pred_check_branch
        %728 = sbr.rel (%p726) target = $region64
      $region63: #{spatial_bottleneck_block.10} parent=59 // pred_region
        %s729 = smul.u32 25, %s18
        %p730 = scmp.lt.s32.totalorder %s729, 49
        %s731 = scalar_select %p730, %s729, 49
        %s732 = smul.addr %s731, 8
        %s733 = scalar_lea.vmem %s3, %s732
      $region64: #{spatial_bottleneck_block.10} parent=59 // pred_fallthru
        _
    $region60: #{spatial_bottleneck_block.10} parent=5 // pred_fallthru
      _
  $region6: #{spatial_bottleneck_block.10} parent=0 // loop_footer
    %s16 = sadd.s32 1, %s12
  $region7: #{spatial_bottleneck_block.10} parent=0 // loop_footer_branch
    %11 = sbr.rel target = $region3
  $region8: #{spatial_bottleneck_block.10} parent=0 // loop_exit
    _

// kernel: spatial_bottleneck_block.11
$region0: #{spatial_bottleneck_block.11}
  #allocation0 [shape = 'u32[]', space=smem, size = 0x4, offset = 0x4, fixed_abs, tag = 'smem constant byte address 0x4 - core index']
  #allocation1 [shape = 'u32[144,128]{1,0:T(1,128)}', space=vmem, size = 0x12000, scoped, tag = 'internal scratch']
  %s0 = inlined_call_operand.vmem [shape: f32[400,64], index: 0, kind: input, shape index: {}]
  %s1 = inlined_call_operand.vmem [shape: f32[1,64], index: 1, kind: input, shape index: {}]
  %s2 = inlined_call_operand.vmem [shape: f32[1,64], index: 2, kind: input, shape index: {}]
  %s3 = inlined_call_operand.vmem [shape: f32[400,64], index: 3, kind: input, shape index: {}]
  %s4 = inlined_call_operand.vmem [shape: f32[1,64], index: 4, kind: input, shape index: {}]
  %s5 = inlined_call_operand.vmem [shape: f32[1,64], index: 5, kind: input, shape index: {}]
  %s6 = inlined_call_operand.vmem [shape: f32[400,64], index: 6, kind: output, shape index: {}]
  %s7 = sld [smem:[#allocation0]]
  $region57: #{spatial_bottleneck_block.11} parent=0
    _
  %s9 = ssub.s32 1, %s7
  %s10 = scalar_select 0, %s9, %s7
  loop: start=0, step=1, limit=4
  $region2: #{spatial_bottleneck_block.11} parent=0 // loop_pre_header
    _
  $region3: #{spatial_bottleneck_block.11} parent=0 // loop_header
    %s12 = sphi 0, %s16
    %p13 = scmp.ge.s32.totalorder %s12, 4
    %s22 = sphi 0, %s24
    %s25 = sphi 0, %s22
    %s26 = sphi 0, %s25
    %s42 = sphi 0, %s26
    %s46 = sphi 0, %s46
    %s48 = sphi 0, %s46
    %s49 = sphi 0, %s48
    %s63 = sphi 0, %s49
    %s67 = sphi 0, %s67
    %s69 = sphi 0, %s67
    %s70 = sphi 0, %s69
    %s84 = sphi 0, %s70
    %s90 = sphi 0, %s92
    %s93 = sphi 0, %s90
    %s94 = sphi 0, %s93
    %s110 = sphi 0, %s94
    %s114 = sphi 0, %s114
    %s116 = sphi 0, %s114
    %s117 = sphi 0, %s116
    %s131 = sphi 0, %s117
    %s135 = sphi 0, %s135
    %s137 = sphi 0, %s135
    %s138 = sphi 0, %s137
    %s152 = sphi 0, %s138
    %s158 = sphi 0, %s160
    %s161 = sphi 0, %s158
    %s162 = sphi 0, %s161
    %s178 = sphi 0, %s162
  $region4: #{spatial_bottleneck_block.11} parent=0 // loop_header_branch
    %15 = sbr.rel (%p13) target = $region8
  $region5: #{spatial_bottleneck_block.11} parent=0 // loop_body
    %s17 = ssub.s32 %s12, 1
    %s18 = ssub.s32 %s12, 2
    %s19 = sadd.s32 %s12, 1
    %s20 = ssub.s32 %s12, %s19
    %p21 = scmp.eq.s32.totalorder %s20, 0
    %s23 = sadd.s32 %s22, 1
    %s24 = scalar_select %p21, %s22, %s23
    %p27 = pneg %p21
    %p28 = scmp.eq.s32.totalorder %s12, 1
    %p29 = por %p27, %p28
    %p30 = scmp.ne.s32.totalorder %s22, %s25
    %p31 = scmp.eq.s32.totalorder %s12, 0
    %p32 = por %p30, %p31
    %p33 = scmp.ne.s32.totalorder %s22, %s25
    %p34 = scmp.eq.s32.totalorder %s17, 1
    %p35 = por %p33, %p34
    %p36 = scmp.ne.s32.totalorder %s25, %s26
    %p37 = scmp.eq.s32.totalorder %s17, 0
    %p38 = por %p36, %p37
    %p39 = scmp.ne.s32.totalorder %s25, %s26
    %p40 = scmp.eq.s32.totalorder %s18, 1
    %p41 = por %p39, %p40
    %p43 = scmp.ne.s32.totalorder %s26, %s42
    %p44 = scmp.eq.s32.totalorder %s18, 0
    %p45 = por %p43, %p44
    %s47 = sadd.s32 %s46, 1
    %p50 = scmp.eq.s32.totalorder %s12, 1
    %p51 = scmp.ne.s32.totalorder %s46, %s48
    %p52 = scmp.eq.s32.totalorder %s12, 0
    %p53 = por %p51, %p52
    %p54 = scmp.ne.s32.totalorder %s46, %s48
    %p55 = scmp.eq.s32.totalorder %s17, 1
    %p56 = por %p54, %p55
    %p57 = scmp.ne.s32.totalorder %s48, %s49
    %p58 = scmp.eq.s32.totalorder %s17, 0
    %p59 = por %p57, %p58
    %p60 = scmp.ne.s32.totalorder %s48, %s49
    %p61 = scmp.eq.s32.totalorder %s18, 1
    %p62 = por %p60, %p61
    %p64 = scmp.ne.s32.totalorder %s49, %s63
    %p65 = scmp.eq.s32.totalorder %s18, 0
    %p66 = por %p64, %p65
    %s68 = sadd.s32 %s67, 1
    %p71 = scmp.eq.s32.totalorder %s12, 1
    %p72 = scmp.ne.s32.totalorder %s67, %s69
    %p73 = scmp.eq.s32.totalorder %s12, 0
    %p74 = por %p72, %p73
    %p75 = scmp.ne.s32.totalorder %s67, %s69
    %p76 = scmp.eq.s32.totalorder %s17, 1
    %p77 = por %p75, %p76
    %p78 = scmp.ne.s32.totalorder %s69, %s70
    %p79 = scmp.eq.s32.totalorder %s17, 0
    %p80 = por %p78, %p79
    %p81 = scmp.ne.s32.totalorder %s69, %s70
    %p82 = scmp.eq.s32.totalorder %s18, 1
    %p83 = por %p81, %p82
    %p85 = scmp.ne.s32.totalorder %s70, %s84
    %p86 = scmp.eq.s32.totalorder %s18, 0
    %p87 = por %p85, %p86
    %s88 = ssub.s32 %s12, %s19
    %p89 = scmp.eq.s32.totalorder %s88, 0
    %s91 = sadd.s32 %s90, 1
    %s92 = scalar_select %p89, %s90, %s91
    %p95 = pneg %p89
    %p96 = scmp.eq.s32.totalorder %s12, 1
    %p97 = por %p95, %p96
    %p98 = scmp.ne.s32.totalorder %s90, %s93
    %p99 = scmp.eq.s32.totalorder %s12, 0
    %p100 = por %p98, %p99
    %p101 = scmp.ne.s32.totalorder %s90, %s93
    %p102 = scmp.eq.s32.totalorder %s17, 1
    %p103 = por %p101, %p102
    %p104 = scmp.ne.s32.totalorder %s93, %s94
    %p105 = scmp.eq.s32.totalorder %s17, 0
    %p106 = por %p104, %p105
    %p107 = scmp.ne.s32.totalorder %s93, %s94
    %p108 = scmp.eq.s32.totalorder %s18, 1
    %p109 = por %p107, %p108
    %p111 = scmp.ne.s32.totalorder %s94, %s110
    %p112 = scmp.eq.s32.totalorder %s18, 0
    %p113 = por %p111, %p112
    %s115 = sadd.s32 %s114, 1
    %p118 = scmp.eq.s32.totalorder %s12, 1
    %p119 = scmp.ne.s32.totalorder %s114, %s116
    %p120 = scmp.eq.s32.totalorder %s12, 0
    %p121 = por %p119, %p120
    %p122 = scmp.ne.s32.totalorder %s114, %s116
    %p123 = scmp.eq.s32.totalorder %s17, 1
    %p124 = por %p122, %p123
    %p125 = scmp.ne.s32.totalorder %s116, %s117
    %p126 = scmp.eq.s32.totalorder %s17, 0
    %p127 = por %p125, %p126
    %p128 = scmp.ne.s32.totalorder %s116, %s117
    %p129 = scmp.eq.s32.totalorder %s18, 1
    %p130 = por %p128, %p129
    %p132 = scmp.ne.s32.totalorder %s117, %s131
    %p133 = scmp.eq.s32.totalorder %s18, 0
    %p134 = por %p132, %p133
    %s136 = sadd.s32 %s135, 1
    %p139 = scmp.eq.s32.totalorder %s12, 1
    %p140 = scmp.ne.s32.totalorder %s135, %s137
    %p141 = scmp.eq.s32.totalorder %s12, 0
    %p142 = por %p140, %p141
    %p143 = scmp.ne.s32.totalorder %s135, %s137
    %p144 = scmp.eq.s32.totalorder %s17, 1
    %p145 = por %p143, %p144
    %p146 = scmp.ne.s32.totalorder %s137, %s138
    %p147 = scmp.eq.s32.totalorder %s17, 0
    %p148 = por %p146, %p147
    %p149 = scmp.ne.s32.totalorder %s137, %s138
    %p150 = scmp.eq.s32.totalorder %s18, 1
    %p151 = por %p149, %p150
    %p153 = scmp.ne.s32.totalorder %s138, %s152
    %p154 = scmp.eq.s32.totalorder %s18, 0
    %p155 = por %p153, %p154
    %s156 = ssub.s32 %s12, %s19
    %p157 = scmp.eq.s32.totalorder %s156, 0
    %s159 = sadd.s32 %s158, 1
    %s160 = scalar_select %p157, %s158, %s159
    %p163 = pneg %p157
    %p164 = scmp.eq.s32.totalorder %s12, 1
    %p165 = por %p163, %p164
    %p166 = scmp.ne.s32.totalorder %s158, %s161
    %p167 = scmp.eq.s32.totalorder %s12, 0
    %p168 = por %p166, %p167
    %p169 = scmp.ne.s32.totalorder %s158, %s161
    %p170 = scmp.eq.s32.totalorder %s17, 1
    %p171 = por %p169, %p170
    %p172 = scmp.ne.s32.totalorder %s161, %s162
    %p173 = scmp.eq.s32.totalorder %s17, 0
    %p174 = por %p172, %p173
    %p175 = scmp.ne.s32.totalorder %s161, %s162
    %p176 = scmp.eq.s32.totalorder %s18, 1
    %p177 = por %p175, %p176
    %p179 = scmp.ne.s32.totalorder %s162, %s178
    %p180 = scmp.eq.s32.totalorder %s18, 0
    %p181 = por %p179, %p180
    %p182 = scmp.le.s32.totalorder 1, %s12
    %p183 = scmp.lt.s32.totalorder %s12, 3
    %p184 = pnand %p182, %p183
    %p185 = pneg %p184
    // Predicated region
    $region9: #{spatial_bottleneck_block.11} parent=5 // pred_check
      _
    $region10: #{spatial_bottleneck_block.11} parent=5 // pred_check_branch
      %187 = sbr.rel (%p184) target = $region12
    $region11: #{spatial_bottleneck_block.11} parent=5 // pred_region
      %s188 = ssub.s32 %s12, 1
      // Predicated region
      $region13: #{spatial_bottleneck_block.11} parent=11 // pred_check
        %p189 = pneg %p59
      $region14: #{spatial_bottleneck_block.11} parent=11 // pred_check_branch
        %191 = sbr.rel (%p189) target = $region16
      $region15: #{spatial_bottleneck_block.11} parent=11 // pred_region
        _
      $region16: #{spatial_bottleneck_block.11} parent=11 // pred_fallthru
        _
      // Predicated region
      $region17: #{spatial_bottleneck_block.11} parent=11 // pred_check
        %p192 = pneg %p80
      $region18: #{spatial_bottleneck_block.11} parent=11 // pred_check_branch
        %194 = sbr.rel (%p192) target = $region20
      $region19: #{spatial_bottleneck_block.11} parent=11 // pred_region
        _
      $region20: #{spatial_bottleneck_block.11} parent=11 // pred_fallthru
        _
      // Predicated region
      $region21: #{spatial_bottleneck_block.11} parent=11 // pred_check
        %p195 = pneg %p127
      $region22: #{spatial_bottleneck_block.11} parent=11 // pred_check_branch
        %197 = sbr.rel (%p195) target = $region24
      $region23: #{spatial_bottleneck_block.11} parent=11 // pred_region
        _
      $region24: #{spatial_bottleneck_block.11} parent=11 // pred_fallthru
        _
      // Predicated region
      $region25: #{spatial_bottleneck_block.11} parent=11 // pred_check
        %p198 = pneg %p148
      $region26: #{spatial_bottleneck_block.11} parent=11 // pred_check_branch
        %200 = sbr.rel (%p198) target = $region28
      $region27: #{spatial_bottleneck_block.11} parent=11 // pred_region
        _
      $region28: #{spatial_bottleneck_block.11} parent=11 // pred_fallthru
        _
    $region12: #{spatial_bottleneck_block.11} parent=5 // pred_fallthru
      _
    %p201 = scmp.lt.s32.totalorder %s12, 2
    // Predicated region
    $region29: #{spatial_bottleneck_block.11} parent=5 // pred_check
      %p202 = pneg %p201
    $region30: #{spatial_bottleneck_block.11} parent=5 // pred_check_branch
      %204 = sbr.rel (%p202) target = $region32
    $region31: #{spatial_bottleneck_block.11} parent=5 // pred_region
      // Predicated region
      $region33: #{spatial_bottleneck_block.11} parent=31 // pred_check
        %p205 = pneg %p32
      $region34: #{spatial_bottleneck_block.11} parent=31 // pred_check_branch
        %207 = sbr.rel (%p205) target = $region36
      $region35: #{spatial_bottleneck_block.11} parent=31 // pred_region
        %s208 = smul.u32 25, %s12
        %p209 = scmp.lt.s32.totalorder %s208, 49
        %s210 = scalar_select %p209, %s208, 49
        %s211 = smul.addr %s210, 8
        %s212 = scalar_lea.vmem %s0, %s211
        %s213 = smul.u32 25, %s12
      $region36: #{spatial_bottleneck_block.11} parent=31 // pred_fallthru
        _
      // Predicated region
      $region37: #{spatial_bottleneck_block.11} parent=31 // pred_check
        %p214 = pneg %p100
      $region38: #{spatial_bottleneck_block.11} parent=31 // pred_check_branch
        %216 = sbr.rel (%p214) target = $region40
      $region39: #{spatial_bottleneck_block.11} parent=31 // pred_region
        %s217 = smul.u32 25, %s12
        %p218 = scmp.lt.s32.totalorder %s217, 49
        %s219 = scalar_select %p218, %s217, 49
        %s220 = smul.addr %s219, 8
        %s221 = scalar_lea.vmem %s3, %s220
        %s222 = smul.u32 25, %s12
      $region40: #{spatial_bottleneck_block.11} parent=31 // pred_fallthru
        _
    $region32: #{spatial_bottleneck_block.11} parent=5 // pred_fallthru
      _
    %p223 = scmp.le.s32.totalorder 1, %s12
    %p224 = scmp.lt.s32.totalorder %s12, 3
    %p225 = pnand %p223, %p224
    %p226 = pneg %p225
    // Predicated region
    $region41: #{spatial_bottleneck_block.11} parent=5 // pred_check
      _
    $region42: #{spatial_bottleneck_block.11} parent=5 // pred_check_branch
      %228 = sbr.rel (%p225) target = $region44
    $region43: #{spatial_bottleneck_block.11} parent=5 // pred_region
      %s229 = ssub.s32 %s12, 1
      %s230 = smul.u32 25, %s17
      %p231 = scmp.lt.s32.totalorder %s230, 49
      %s232 = scalar_select %p231, %s230, 49
      %s233 = smul.addr %s232, 8
      %s234 = scalar_lea.vmem %s0, %s233
      %p235 = pneg %p38
      %p236 = pneg %p35
      %p237 = pneg %p59
      %p238 = pneg %p56
      %p239 = pneg %p80
      %p240 = pneg %p77
      %s241 = smul.u32 25, %s17
      %p242 = scmp.lt.s32.totalorder %s241, 49
      %s243 = scalar_select %p242, %s241, 49
      %s244 = smul.addr %s243, 8
      %s245 = scalar_lea.vmem %s3, %s244
      %p246 = pneg %p106
      %p247 = pneg %p103
      %p248 = pneg %p127
      %p249 = pneg %p124
      %p250 = pneg %p148
      %p251 = pneg %p145
      %p252 = pneg %p174
      %p253 = pneg %p171
      %s254 = smul.u32 25, %s17
      %p255 = scmp.lt.s32.totalorder %s254, 49
      %s256 = scalar_select %p255, %s254, 49
      %s257 = smul.addr %s256, 8
      %s258 = scalar_lea.vmem %s6, %s257
      %s259 = smul.u32 25, %s17
      %p260 = scmp.lt.s32.totalorder %s259, 49
      %s261 = scalar_select %p260, %s259, 49
      %s262 = smul.addr %s261, 8
      %s263 = scalar_lea.vmem %s0, %s262
      %s264 = smul.u32 25, %s17
      %s265 = smul.u32 25, %s17
      %p266 = scmp.lt.s32.totalorder %s265, 49
      %s267 = scalar_select %p266, %s265, 49
      %s268 = smul.addr %s267, 8
      %s269 = scalar_lea.vmem %s3, %s268
      %s270 = smul.u32 25, %s17
      %s271 = smul.u32 25, %s17
      %p272 = scmp.lt.s32.totalorder %s271, 49
      %s273 = scalar_select %p272, %s271, 49
      %s274 = smul.addr %s273, 8
      %s275 = scalar_lea.vmem %s6, %s274
      %s276 = smul.u32 25, %s17
      %v277 = vld [vmem:[%s263] sm:$0xff]
      %v278 = vld [vmem:[%s263 + $0x8] sm:$0xff]
      %v279 = vld [vmem:[%s263 + $0x10] sm:$0xff]
      %v280 = vld [vmem:[%s263 + $0x18] sm:$0xff]
      %v281 = vld [vmem:[%s263 + $0x20] sm:$0xff]
      %v282 = vld [vmem:[%s263 + $0x28] sm:$0xff]
      %v283 = vld [vmem:[%s263 + $0x30] sm:$0xff]
      %v284 = vld [vmem:[%s263 + $0x38] sm:$0xff]
      %v285 = vld [vmem:[%s263 + $0x40] sm:$0xff]
      %v286 = vld [vmem:[%s263 + $0x48] sm:$0xff]
      %v287 = vld [vmem:[%s263 + $0x50] sm:$0xff]
      %v288 = vld [vmem:[%s263 + $0x58] sm:$0xff]
      %v289 = vld [vmem:[%s263 + $0x60] sm:$0xff]
      %v290 = vld [vmem:[%s263 + $0x68] sm:$0xff]
      %v291 = vld [vmem:[%s263 + $0x70] sm:$0xff]
      %v292 = vld [vmem:[%s263 + $0x78] sm:$0xff]
      %v293 = vld [vmem:[%s263 + $0x80] sm:$0xff]
      %v294 = vld [vmem:[%s263 + $0x88] sm:$0xff]
      %v295 = vld [vmem:[%s263 + $0x90] sm:$0xff]
      %v296 = vld [vmem:[%s263 + $0x98] sm:$0xff]
      %v297 = vld [vmem:[%s263 + $0xa0] sm:$0xff]
      %v298 = vld [vmem:[%s263 + $0xa8] sm:$0xff]
      %v299 = vld [vmem:[%s263 + $0xb0] sm:$0xff]
      %v300 = vld [vmem:[%s263 + $0xb8] sm:$0xff]
      %v301 = vld [vmem:[%s263 + $0xc0] sm:$0xff]
      %v302 = vld [vmem:[%s1] sm:$0x1]
      %v304 = vlaneseq
      %v305 = vshrl.u32 %v304, 7
      %v306 = vsub.s32 0, %v305
      %v307 = vrot.slane %v302, %v306
      %v309 = vmul.f32 %v277, %v307
      %v310 = vmul.f32 %v278, %v307
      %v311 = vmul.f32 %v279, %v307
      %v312 = vmul.f32 %v280, %v307
      %v313 = vmul.f32 %v281, %v307
      %v314 = vmul.f32 %v282, %v307
      %v315 = vmul.f32 %v283, %v307
      %v316 = vmul.f32 %v284, %v307
      %v317 = vmul.f32 %v285, %v307
      %v318 = vmul.f32 %v286, %v307
      %v319 = vmul.f32 %v287, %v307
      %v320 = vmul.f32 %v288, %v307
      %v321 = vmul.f32 %v289, %v307
      %v322 = vmul.f32 %v290, %v307
      %v323 = vmul.f32 %v291, %v307
      %v324 = vmul.f32 %v292, %v307
      %v325 = vmul.f32 %v293, %v307
      %v326 = vmul.f32 %v294, %v307
      %v327 = vmul.f32 %v295, %v307
      %v328 = vmul.f32 %v296, %v307
      %v329 = vmul.f32 %v297, %v307
      %v330 = vmul.f32 %v298, %v307
      %v331 = vmul.f32 %v299, %v307
      %v332 = vmul.f32 %v300, %v307
      %v333 = vmul.f32 %v301, %v307
      %v334 = vld [vmem:[%s2] sm:$0x1]
      %v336 = vlaneseq
      %v337 = vshrl.u32 %v336, 7
      %v338 = vsub.s32 0, %v337
      %v339 = vrot.slane %v334, %v338
      %v341 = vadd.f32 %v309, %v339
      %v342 = vadd.f32 %v310, %v339
      %v343 = vadd.f32 %v311, %v339
      %v344 = vadd.f32 %v312, %v339
      %v345 = vadd.f32 %v313, %v339
      %v346 = vadd.f32 %v314, %v339
      %v347 = vadd.f32 %v315, %v339
      %v348 = vadd.f32 %v316, %v339
      %v349 = vadd.f32 %v317, %v339
      %v350 = vadd.f32 %v318, %v339
      %v351 = vadd.f32 %v319, %v339
      %v352 = vadd.f32 %v320, %v339
      %v353 = vadd.f32 %v321, %v339
      %v354 = vadd.f32 %v322, %v339
      %v355 = vadd.f32 %v323, %v339
      %v356 = vadd.f32 %v324, %v339
      %v357 = vadd.f32 %v325, %v339
      %v358 = vadd.f32 %v326, %v339
      %v359 = vadd.f32 %v327, %v339
      %v360 = vadd.f32 %v328, %v339
      %v361 = vadd.f32 %v329, %v339
      %v362 = vadd.f32 %v330, %v339
      %v363 = vadd.f32 %v331, %v339
      %v364 = vadd.f32 %v332, %v339
      %v365 = vadd.f32 %v333, %v339
      %v366 = vld [vmem:[%s269] sm:$0xff]
      %v367 = vld [vmem:[%s269 + $0x8] sm:$0xff]
      %v368 = vld [vmem:[%s269 + $0x10] sm:$0xff]
      %v369 = vld [vmem:[%s269 + $0x18] sm:$0xff]
      %v370 = vld [vmem:[%s269 + $0x20] sm:$0xff]
      %v371 = vld [vmem:[%s269 + $0x28] sm:$0xff]
      %v372 = vld [vmem:[%s269 + $0x30] sm:$0xff]
      %v373 = vld [vmem:[%s269 + $0x38] sm:$0xff]
      %v374 = vld [vmem:[%s269 + $0x40] sm:$0xff]
      %v375 = vld [vmem:[%s269 + $0x48] sm:$0xff]
      %v376 = vld [vmem:[%s269 + $0x50] sm:$0xff]
      %v377 = vld [vmem:[%s269 + $0x58] sm:$0xff]
      %v378 = vld [vmem:[%s269 + $0x60] sm:$0xff]
      %v379 = vld [vmem:[%s269 + $0x68] sm:$0xff]
      %v380 = vld [vmem:[%s269 + $0x70] sm:$0xff]
      %v381 = vld [vmem:[%s269 + $0x78] sm:$0xff]
      %v382 = vld [vmem:[%s269 + $0x80] sm:$0xff]
      %v383 = vld [vmem:[%s269 + $0x88] sm:$0xff]
      %v384 = vld [vmem:[%s269 + $0x90] sm:$0xff]
      %v385 = vld [vmem:[%s269 + $0x98] sm:$0xff]
      %v386 = vld [vmem:[%s269 + $0xa0] sm:$0xff]
      %v387 = vld [vmem:[%s269 + $0xa8] sm:$0xff]
      %v388 = vld [vmem:[%s269 + $0xb0] sm:$0xff]
      %v389 = vld [vmem:[%s269 + $0xb8] sm:$0xff]
      %v390 = vld [vmem:[%s269 + $0xc0] sm:$0xff]
      %v391 = vld [vmem:[%s4] sm:$0x1]
      %v393 = vlaneseq
      %v394 = vshrl.u32 %v393, 7
      %v395 = vsub.s32 0, %v394
      %v396 = vrot.slane %v391, %v395
      %v398 = vmul.f32 %v366, %v396
      %v399 = vmul.f32 %v367, %v396
      %v400 = vmul.f32 %v368, %v396
      %v401 = vmul.f32 %v369, %v396
      %v402 = vmul.f32 %v370, %v396
      %v403 = vmul.f32 %v371, %v396
      %v404 = vmul.f32 %v372, %v396
      %v405 = vmul.f32 %v373, %v396
      %v406 = vmul.f32 %v374, %v396
      %v407 = vmul.f32 %v375, %v396
      %v408 = vmul.f32 %v376, %v396
      %v409 = vmul.f32 %v377, %v396
      %v410 = vmul.f32 %v378, %v396
      %v411 = vmul.f32 %v379, %v396
      %v412 = vmul.f32 %v380, %v396
      %v413 = vmul.f32 %v381, %v396
      %v414 = vmul.f32 %v382, %v396
      %v415 = vmul.f32 %v383, %v396
      %v416 = vmul.f32 %v384, %v396
      %v417 = vmul.f32 %v385, %v396
      %v418 = vmul.f32 %v386, %v396
      %v419 = vmul.f32 %v387, %v396
      %v420 = vmul.f32 %v388, %v396
      %v421 = vmul.f32 %v389, %v396
      %v422 = vmul.f32 %v390, %v396
      %v423 = vld [vmem:[%s5] sm:$0x1]
      %v425 = vlaneseq
      %v426 = vshrl.u32 %v425, 7
      %v427 = vsub.s32 0, %v426
      %v428 = vrot.slane %v423, %v427
      %v430 = vadd.f32 %v398, %v428
      %v431 = vadd.f32 %v399, %v428
      %v432 = vadd.f32 %v400, %v428
      %v433 = vadd.f32 %v401, %v428
      %v434 = vadd.f32 %v402, %v428
      %v435 = vadd.f32 %v403, %v428
      %v436 = vadd.f32 %v404, %v428
      %v437 = vadd.f32 %v405, %v428
      %v438 = vadd.f32 %v406, %v428
      %v439 = vadd.f32 %v407, %v428
      %v440 = vadd.f32 %v408, %v428
      %v441 = vadd.f32 %v409, %v428
      %v442 = vadd.f32 %v410, %v428
      %v443 = vadd.f32 %v411, %v428
      %v444 = vadd.f32 %v412, %v428
      %v445 = vadd.f32 %v413, %v428
      %v446 = vadd.f32 %v414, %v428
      %v447 = vadd.f32 %v415, %v428
      %v448 = vadd.f32 %v416, %v428
      %v449 = vadd.f32 %v417, %v428
      %v450 = vadd.f32 %v418, %v428
      %v451 = vadd.f32 %v419, %v428
      %v452 = vadd.f32 %v420, %v428
      %v453 = vadd.f32 %v421, %v428
      %v454 = vadd.f32 %v422, %v428
      %v455 = vadd.f32 %v341, %v430
      %v456 = vadd.f32 %v342, %v431
      %v457 = vadd.f32 %v343, %v432
      %v458 = vadd.f32 %v344, %v433
      %v459 = vadd.f32 %v345, %v434
      %v460 = vadd.f32 %v346, %v435
      %v461 = vadd.f32 %v347, %v436
      %v462 = vadd.f32 %v348, %v437
      %v463 = vadd.f32 %v349, %v438
      %v464 = vadd.f32 %v350, %v439
      %v465 = vadd.f32 %v351, %v440
      %v466 = vadd.f32 %v352, %v441
      %v467 = vadd.f32 %v353, %v442
      %v468 = vadd.f32 %v354, %v443
      %v469 = vadd.f32 %v355, %v444
      %v470 = vadd.f32 %v356, %v445
      %v471 = vadd.f32 %v357, %v446
      %v472 = vadd.f32 %v358, %v447
      %v473 = vadd.f32 %v359, %v448
      %v474 = vadd.f32 %v360, %v449
      %v475 = vadd.f32 %v361, %v450
      %v476 = vadd.f32 %v362, %v451
      %v477 = vadd.f32 %v363, %v452
      %v478 = vadd.f32 %v364, %v453
      %v479 = vadd.f32 %v365, %v454
      %v480 = vmax.f32 %v455, 0.0
      %v481 = vmax.f32 %v456, 0.0
      %v482 = vmax.f32 %v457, 0.0
      %v483 = vmax.f32 %v458, 0.0
      %v484 = vmax.f32 %v459, 0.0
      %v485 = vmax.f32 %v460, 0.0
      %v486 = vmax.f32 %v461, 0.0
      %v487 = vmax.f32 %v462, 0.0
      %v488 = vmax.f32 %v463, 0.0
      %v489 = vmax.f32 %v464, 0.0
      %v490 = vmax.f32 %v465, 0.0
      %v491 = vmax.f32 %v466, 0.0
      %v492 = vmax.f32 %v467, 0.0
      %v493 = vmax.f32 %v468, 0.0
      %v494 = vmax.f32 %v469, 0.0
      %v495 = vmax.f32 %v470, 0.0
      %v496 = vmax.f32 %v471, 0.0
      %v497 = vmax.f32 %v472, 0.0
      %v498 = vmax.f32 %v473, 0.0
      %v499 = vmax.f32 %v474, 0.0
      %v500 = vmax.f32 %v475, 0.0
      %v501 = vmax.f32 %v476, 0.0
      %v502 = vmax.f32 %v477, 0.0
      %v503 = vmax.f32 %v478, 0.0
      %v504 = vmax.f32 %v479, 0.0
      %vm505 = vcmask 523264
      %506 = vst.msk [vmem:[%s275] sm:$0xff] %vm505, %v480
      %507 = vst.msk [vmem:[%s275 + $0x8] sm:$0xff] %vm505, %v481
      %508 = vst.msk [vmem:[%s275 + $0x10] sm:$0xff] %vm505, %v482
      %509 = vst.msk [vmem:[%s275 + $0x18] sm:$0xff] %vm505, %v483
      %510 = vst.msk [vmem:[%s275 + $0x20] sm:$0xff] %vm505, %v484
      %511 = vst.msk [vmem:[%s275 + $0x28] sm:$0xff] %vm505, %v485
      %512 = vst.msk [vmem:[%s275 + $0x30] sm:$0xff] %vm505, %v486
      %513 = vst.msk [vmem:[%s275 + $0x38] sm:$0xff] %vm505, %v487
      %514 = vst.msk [vmem:[%s275 + $0x40] sm:$0xff] %vm505, %v488
      %515 = vst.msk [vmem:[%s275 + $0x48] sm:$0xff] %vm505, %v489
      %516 = vst.msk [vmem:[%s275 + $0x50] sm:$0xff] %vm505, %v490
      %517 = vst.msk [vmem:[%s275 + $0x58] sm:$0xff] %vm505, %v491
      %518 = vst.msk [vmem:[%s275 + $0x60] sm:$0xff] %vm505, %v492
      %519 = vst.msk [vmem:[%s275 + $0x68] sm:$0xff] %vm505, %v493
      %520 = vst.msk [vmem:[%s275 + $0x70] sm:$0xff] %vm505, %v494
      %521 = vst.msk [vmem:[%s275 + $0x78] sm:$0xff] %vm505, %v495
      %522 = vst.msk [vmem:[%s275 + $0x80] sm:$0xff] %vm505, %v496
      %523 = vst.msk [vmem:[%s275 + $0x88] sm:$0xff] %vm505, %v497
      %524 = vst.msk [vmem:[%s275 + $0x90] sm:$0xff] %vm505, %v498
      %525 = vst.msk [vmem:[%s275 + $0x98] sm:$0xff] %vm505, %v499
      %526 = vst.msk [vmem:[%s275 + $0xa0] sm:$0xff] %vm505, %v500
      %527 = vst.msk [vmem:[%s275 + $0xa8] sm:$0xff] %vm505, %v501
      %528 = vst.msk [vmem:[%s275 + $0xb0] sm:$0xff] %vm505, %v502
      %529 = vst.msk [vmem:[%s275 + $0xb8] sm:$0xff] %vm505, %v503
      %530 = vst.msk [vmem:[%s275 + $0xc0] sm:$0xff] %vm505, %v504
      %s531 = smul.u32 25, %s17
      %p532 = scmp.lt.s32.totalorder %s531, 49
      %s533 = scalar_select %p532, %s531, 49
      %s534 = smul.addr %s533, 8
      %s535 = scalar_lea.vmem %s6, %s534
      // Predicated region
      $region45: #{spatial_bottleneck_block.11} parent=43 // pred_check
        %p536 = pneg %p171
      $region46: #{spatial_bottleneck_block.11} parent=43 // pred_check_branch
        %538 = sbr.rel (%p536) target = $region48
      $region47: #{spatial_bottleneck_block.11} parent=43 // pred_region
        %s539 = smul.u32 25, %s17
      $region48: #{spatial_bottleneck_block.11} parent=43 // pred_fallthru
        _
    $region44: #{spatial_bottleneck_block.11} parent=5 // pred_fallthru
      _
    %p540 = scmp.le.s32.totalorder 2, %s12
    // Predicated region
    $region49: #{spatial_bottleneck_block.11} parent=5 // pred_check
      %p541 = pneg %p540
    $region50: #{spatial_bottleneck_block.11} parent=5 // pred_check_branch
      %543 = sbr.rel (%p541) target = $region52
    $region51: #{spatial_bottleneck_block.11} parent=5 // pred_region
      %s544 = ssub.s32 %s12, 2
      // Predicated region
      $region53: #{spatial_bottleneck_block.11} parent=51 // pred_check
        %p545 = pneg %p177
      $region54: #{spatial_bottleneck_block.11} parent=51 // pred_check_branch
        %547 = sbr.rel (%p545) target = $region56
      $region55: #{spatial_bottleneck_block.11} parent=51 // pred_region
        %s548 = smul.u32 25, %s18
        %p549 = scmp.lt.s32.totalorder %s548, 49
        %s550 = scalar_select %p549, %s548, 49
        %s551 = smul.addr %s550, 8
        %s552 = scalar_lea.vmem %s6, %s551
      $region56: #{spatial_bottleneck_block.11} parent=51 // pred_fallthru
        _
    $region52: #{spatial_bottleneck_block.11} parent=5 // pred_fallthru
      _
  $region6: #{spatial_bottleneck_block.11} parent=0 // loop_footer
    %s16 = sadd.s32 1, %s12
  $region7: #{spatial_bottleneck_block.11} parent=0 // loop_footer_branch
    %11 = sbr.rel target = $region3
  $region8: #{spatial_bottleneck_block.11} parent=0 // loop_exit
    _

</llo_original>
